<compile_context>
chip_gen: v6e
topology: v6e:2x2x1
jax: 0.10.0
libtpu: 0.0.40
codegen_flags: <defaults>
</compile_context>

<pallas_src>
import functools

import jax
import jax.numpy as jnp
from jax import lax
from jax.experimental import pallas as pl
from jax.experimental.pallas import tpu as pltpu


def _round_up(x, m):
    return (x + m - 1) // m * m


# ----------------------------------------------------------------------------
# Fused kernel: all C dense blocks + 1x1 projection + residual, NB images/step
# ----------------------------------------------------------------------------
def _rdb_fused_kernel(C, cin0, growth, Wp, pre, L_pad, *refs):
    ctot = cin0 + C * growth
    istart = pre + Wp + 1                 # 128-aligned start of the interior span

    (xpad_ref,    # (1, cin0, S_scr)  f32, pre-padded & pre-stacked x
     mask_ref,    # (1, L_pad)        f32, 1.0 on interior pixels
     w_all_ref,   # (C, 9, growth, cin_max) bf16, per-tap 3x3 weights
     b_all_ref,   # (C, growth, 1)    f32
     wlast_ref,   # (cin0, ctot)      bf16
     blast_ref,   # (cin0, 1)         f32
     o_ref,       # (1, cin0, L_pad)
     feats_ref,   # VMEM scratch (ctot, S_scr) bf16
     ) = refs

    # ---- x (with its zero padding) -> feature scratch: one lane-dense copy --
    feats_ref[0:cin0, :] = xpad_ref[0].astype(jnp.bfloat16)

    # ---- tiny halo bands that taps read but this step never writes must be 0.
    # (No cross-step scratch state -> safe under "parallel"/megacore.)
    if ctot > cin0:
        zb = jnp.zeros((ctot - cin0, Wp + 1), jnp.bfloat16)
        feats_ref[cin0:ctot, pre:pre + Wp + 1] = zb
        feats_ref[cin0:ctot, istart + L_pad:istart + L_pad + Wp + 1] = zb

    mask = mask_ref[...]                                    # (1, L_pad)

    # ---- C dense blocks: 9 tap matmuls (no im2col materialization) ----------
    cin = cin0
    for i in range(C):
        acc = jnp.zeros((growth, L_pad), jnp.float32)
        for t in range(9):
            ky, kx = divmod(t, 3)
            off = pre + ky * Wp + kx                        # static lane offset
            w_t = w_all_ref[i, t, :, 0:cin]                 # (growth, cin)  bf16
            slab = feats_ref[0:cin, off:off + L_pad]        # (cin, L_pad)   bf16
            acc += jnp.dot(w_t, slab, preferred_element_type=jnp.float32)
        acc = jnp.maximum(acc + b_all_ref[i], 0.0)          # bias + ReLU (f32)
        acc = acc * mask                                    # keep zero padding exact
        feats_ref[cin:cin + growth, istart:istart + L_pad] = acc.astype(jnp.bfloat16)
        cin += growth

    # ---- fused 1x1 projection + bias + residual, 128-aligned lane-dense store
    feats_int = feats_ref[:, istart:istart + L_pad]         # (ctot, L_pad) bf16
    z = jnp.dot(wlast_ref[...], feats_int, preferred_element_type=jnp.float32)
    z = z + blast_ref[...] + xpad_ref[0, :, istart:istart + L_pad]  # exact f32 residual
    o_ref[0] = z.astype(o_ref.dtype)


# ----------------------------------------------------------------------------
# Wrapper: layout glue (pad/stack x, pack weights) + pallas_call
# ----------------------------------------------------------------------------
def rdb_forward(params, x_nchw):
    """x_nchw: (N, in_channels, H, W) float32 -> (N, in_channels, H, W)."""
    N, cin0, H, W = x_nchw.shape
    C = len(params["dense"])
    growth = params["dense"][0][0].shape[0]
    ctot = cin0 + C * growth
    Hp, Wp = H + 2, W + 2
    S = Hp * Wp

    # ---- batch blocking: NB images stacked vertically per grid step ---------
    feats_budget = 8 << 20                       # bf16 feature-scratch budget
    NB = 1
    for nb in range(1, N + 1):
        if N % nb == 0 and nb * S * ctot * 2 <= feats_budget:
            NB = nb
    NBLK = N // NB

    S_stk = NB * Hp * Wp                         # flat size of the stacked padded images
    L = ((NB - 1) * Hp + H - 1) * Wp + W         # contiguous span covering all interiors
    L_pad = _round_up(L, 128)                    # lane-dense matmul / store width
    pre = (-(Wp + 1)) % 128                      # shift so interior span starts on a lane tile
    istart = pre + Wp + 1
    S_scr = _round_up(pre + 2 * Wp + 2 + L_pad, 128)

    # ---- x: pad + vertical stack + flatten + lane shift (fused XLA glue) ----
    xpad = jnp.pad(x_nchw, ((0, 0), (0, 0), (1, 1), (1, 1)))              # (N,cin0,Hp,Wp)
    xpad = xpad.reshape(NBLK, NB, cin0, Hp, Wp).transpose(0, 2, 1, 3, 4)
    xpad = xpad.reshape(NBLK, cin0, S_stk)
    xpad = jnp.pad(xpad, ((0, 0), (0, 0), (pre, S_scr - pre - S_stk)))    # (NBLK,cin0,S_scr)

    # ---- interior-pixel mask over the aligned span ---------------------------
    r = jnp.arange(L_pad, dtype=jnp.int32)
    p = r + Wp + 1                               # stacked flat position
    col = p % Wp
    rim = (p // Wp) % Hp                         # row within its own image's padded grid
    mask = ((r < L) & (col >= 1) & (col <= W) & (rim >= 1) & (rim <= H))
    mask = mask.astype(jnp.float32).reshape(1, L_pad)

    # ---- weights: bf16, per-tap layout, packed into single arrays -----------
    cin_max = cin0 + (C - 1) * growth
    w_all = jnp.zeros((C, 9, growth, cin_max), jnp.bfloat16)
    b_all = jnp.zeros((C, growth, 1), jnp.float32)
    for i, (w, b) in enumerate(params["dense"]):
        cin = cin0 + i * growth
        wt = jnp.transpose(w, (2, 3, 0, 1)).reshape(9, growth, cin)       # tap-major
        w_all = w_all.at[i, :, :, :cin].set(wt.astype(jnp.bfloat16))
        b_all = b_all.at[i].set(b.reshape(growth, 1))
    wlast = params["last_w"].reshape(cin0, ctot).astype(jnp.bfloat16)     # torch (cin0,ctot,1,1)
    blast = params["last_b"].reshape(cin0, 1)

    in_specs = [
        pl.BlockSpec((1, cin0, S_scr), lambda n: (n, 0, 0)),
        pl.BlockSpec((1, L_pad), lambda n: (0, 0)),
        pl.BlockSpec((C, 9, growth, cin_max), lambda n: (0, 0, 0, 0)),
        pl.BlockSpec((C, growth, 1), lambda n: (0, 0, 0)),
        pl.BlockSpec((cin0, ctot), lambda n: (0, 0)),
        pl.BlockSpec((cin0, 1), lambda n: (0, 0)),
    ]

    # scoped-VMEM budget: scratch + double-buffered I/O blocks + headroom
    feats_bytes = ctot * S_scr * 2
    blk_bytes = cin0 * S_scr * 4 + cin0 * L_pad * 4
    w_bytes = (w_all.size * 2 + b_all.size * 4 + wlast.size * 2
               + blast.size * 4 + L_pad * 4)
    vmem_limit = int(min(max(feats_bytes + 2 * (blk_bytes + w_bytes) + (4 << 20),
                             16 << 20), 64 << 20))

    # TODO(synk): for very large H/W/ctot (where the bf16 feats scratch alone
    # exceeds ~40 MiB, i.e. v7x's 64 MiB VMEM), add a spatial row-tile grid
    # axis with a 2-row halo instead of the whole-image-resident scratch.
    out_flat = pl.pallas_call(
        functools.partial(_rdb_fused_kernel, C, cin0, growth, Wp, pre, L_pad),
        out_shape=jax.ShapeDtypeStruct((NBLK, cin0, L_pad), x_nchw.dtype),
        grid_spec=pltpu.PrefetchScalarGridSpec(
            num_scalar_prefetch=0,
            grid=(NBLK,),
            in_specs=in_specs,
            out_specs=pl.BlockSpec((1, cin0, L_pad), lambda n: (n, 0, 0)),
            scratch_shapes=[pltpu.VMEM((ctot, S_scr), jnp.bfloat16)],
        ),
        compiler_params=pltpu.CompilerParams(
            dimension_semantics=("parallel",),
            vmem_limit_bytes=vmem_limit),
    )(xpad, mask, w_all, b_all, wlast, blast)

    # ---- de-pad / un-stack (small XLA glue) ----------------------------------
    # TODO(synk): when W is (padded to) a multiple of 128, store de-padded rows
    # directly from the kernel and drop this pass.
    out = out_flat[:, :, :L]
    out = jnp.pad(out, ((0, 0), (0, 0), (Wp + 1, S_stk - (Wp + 1) - L)))
    out = out.reshape(NBLK, cin0, NB, Hp, Wp).transpose(0, 2, 1, 3, 4)
    out = out.reshape(N, cin0, Hp, Wp)
    return out[:, :, 1:1 + H, 1:1 + W]


# ----------------------------------------------------------------------------
# Parameter init (PyTorch layouts) + pure-JAX reference
# ----------------------------------------------------------------------------
def init_rdb_params(key, in_channels, C, growth):
    params = {"dense": []}
    for i in range(C):
        cin = in_channels + i * growth
        key, kw, kb = jax.random.split(key, 3)
        w = jax.random.normal(kw, (growth, cin, 3, 3), jnp.float32) * 0.1
        b = jax.random.normal(kb, (growth,), jnp.float32) * 0.1
        params["dense"].append((w, b))
    ctot = in_channels + C * growth
    key, kw, kb = jax.random.split(key, 3)
    params["last_w"] = jax.random.normal(kw, (in_channels, ctot, 1, 1), jnp.float32) * 0.1
    params["last_b"] = jax.random.normal(kb, (in_channels,), jnp.float32) * 0.1
    return params


def rdb_reference(params, x_nchw):
    dn = ("NCHW", "OIHW", "NCHW")
    feats = x_nchw
    for (w, b) in params["dense"]:
        y = lax.conv_general_dilated(feats, w, (1, 1), "SAME", dimension_numbers=dn)
        y = jnp.maximum(y + b[None, :, None, None], 0.0)
        feats = jnp.concatenate([feats, y], axis=1)
    y = lax.conv_general_dilated(feats, params["last_w"], (1, 1), "SAME",
                                 dimension_numbers=dn)
    return x_nchw + y + params["last_b"][None, :, None, None]


if __name__ == "__main__":
    # Small shapes: batch=2, in_channels=4, spatial=16x16, C=3, growth=4
    N, Cin, H, W = 2, 4, 16, 16
    C_blocks, growth = 3, 4

    key = jax.random.PRNGKey(0)
    key, kx = jax.random.split(key)
    x = jax.random.normal(kx, (N, Cin, H, W), jnp.float32)   # PyTorch NCHW layout

    params = init_rdb_params(key, Cin, C_blocks, growth)

    out = jax.block_until_ready(jax.jit(rdb_forward)(params, x))
    ref = rdb_reference(params, x)

    assert out.shape == (N, Cin, H, W)
    # bf16 MXU operands / bf16 feature scratch (f32 accumulation, f32 residual)
    assert jnp.allclose(out, ref, atol=5e-2, rtol=5e-2), "mismatch vs reference"

    print("KERNEL_OK")
</pallas_src>

<mosaic_0001>
module attributes {stable_mosaic.version = 11 : i64} {
  func.func @_rdb_fused_kernel(%arg0: i32, %arg1: memref<1x4x896xf32, #tpu.memory_space<vmem>>, %arg2: memref<1x640xf32, #tpu.memory_space<vmem>>, %arg3: memref<3x9x4x12xbf16, #tpu.memory_space<vmem>>, %arg4: memref<3x4x1xf32, #tpu.memory_space<vmem>>, %arg5: memref<4x16xbf16, #tpu.memory_space<vmem>>, %arg6: memref<4x1xf32, #tpu.memory_space<vmem>>, %arg7: memref<1x4x640xf32, #tpu.memory_space<vmem>>, %arg8: memref<16x896xbf16, #tpu.memory_space<vmem>>) attributes {dimension_semantics = [#tpu.dimension_semantics<parallel>], iteration_bounds = array<i64: 1>, scalar_prefetch = 0 : i64, scratch_operands = 1 : i64, tpu.core_type = #tpu.core_type<tc>, window_params = [{transform_indices = @transform_0, window_bounds = array<i64: 1, 4, 896>}, {pipeline_mode = #tpu.pipeline_mode<synchronous>, transform_indices = @transform_1, window_bounds = array<i64: 1, 640>}, {pipeline_mode = #tpu.pipeline_mode<synchronous>, transform_indices = @transform_2, window_bounds = array<i64: 3, 9, 4, 12>}, {pipeline_mode = #tpu.pipeline_mode<synchronous>, transform_indices = @transform_3, window_bounds = array<i64: 3, 4, 1>}, {pipeline_mode = #tpu.pipeline_mode<synchronous>, transform_indices = @transform_4, window_bounds = array<i64: 4, 16>}, {pipeline_mode = #tpu.pipeline_mode<synchronous>, transform_indices = @transform_5, window_bounds = array<i64: 4, 1>}, {transform_indices = @transform_6, window_bounds = array<i64: 1, 4, 640>}]} {
    %c0 = arith.constant 0 : index
    %c0_0 = arith.constant 0 : index
    %c0_1 = arith.constant 0 : index
    %0 = vector.load %arg1[%c0, %c0_0, %c0_1] : memref<1x4x896xf32, #tpu.memory_space<vmem>>, vector<1x4x896xf32>
    %1 = vector.shape_cast %0 : vector<1x4x896xf32> to vector<4x896xf32>
    %2 = arith.truncf %1 : vector<4x896xf32> to vector<4x896xbf16>
    %c0_2 = arith.constant 0 : index
    %c0_3 = arith.constant 0 : index
    %3 = vector.load %arg8[%c0_2, %c0_3] : memref<16x896xbf16, #tpu.memory_space<vmem>>, vector<4x896xbf16>
    tpu.vector_store %arg8[%c0_2, %c0_3], %2 {strides = array<i32>} : memref<16x896xbf16, #tpu.memory_space<vmem>>, vector<4x896xbf16>,
    %cst = arith.constant 0.000000e+00 : bf16
    %4 = vector.broadcast %cst : bf16 to vector<12x19xbf16>
    %c4 = arith.constant 4 : index
    %c109 = arith.constant 109 : index
    %5 = vector.load %arg8[%c4, %c109] : memref<16x896xbf16, #tpu.memory_space<vmem>>, vector<12x19xbf16>
    tpu.vector_store %arg8[%c4, %c109], %4 {strides = array<i32>} : memref<16x896xbf16, #tpu.memory_space<vmem>>, vector<12x19xbf16>,
    %c4_4 = arith.constant 4 : index
    %c768 = arith.constant 768 : index
    %6 = vector.load %arg8[%c4_4, %c768] : memref<16x896xbf16, #tpu.memory_space<vmem>>, vector<12x19xbf16>
    tpu.vector_store %arg8[%c4_4, %c768], %4 {strides = array<i32>} : memref<16x896xbf16, #tpu.memory_space<vmem>>, vector<12x19xbf16>,
    %c0_5 = arith.constant 0 : index
    %c0_6 = arith.constant 0 : index
    %7 = vector.load %arg2[%c0_5, %c0_6] : memref<1x640xf32, #tpu.memory_space<vmem>>, vector<1x640xf32>
    %cst_7 = arith.constant 0.000000e+00 : f32
    %8 = vector.broadcast %cst_7 : f32 to vector<4x640xf32>
    %c0_8 = arith.constant 0 : index
    %c0_9 = arith.constant 0 : index
    %c0_10 = arith.constant 0 : index
    %c0_11 = arith.constant 0 : index
    %9 = vector.load %arg3[%c0_8, %c0_9, %c0_10, %c0_11] : memref<3x9x4x12xbf16, #tpu.memory_space<vmem>>, vector<1x1x4x4xbf16>
    %10 = vector.shape_cast %9 : vector<1x1x4x4xbf16> to vector<4x4xbf16>
    %c0_12 = arith.constant 0 : index
    %c109_13 = arith.constant 109 : index
    %11 = vector.load %arg8[%c0_12, %c109_13] : memref<16x896xbf16, #tpu.memory_space<vmem>>, vector<4x640xbf16>
    %cst_14 = arith.constant dense<0.000000e+00> : vector<4x640xf32>
    %12 = tpu.matmul %10, %11, %cst_14 {dimension_numbers = #tpu.dot_dimension_numbers<[1], [0], [0], [1], [0, 0, 1, 1], [], []>} : vector<4x4xbf16>, vector<4x640xbf16>, vector<4x640xf32> -> vector<4x640xf32>
    %13 = arith.addf %8, %12 : vector<4x640xf32>
    %c0_15 = arith.constant 0 : index
    %c1 = arith.constant 1 : index
    %c0_16 = arith.constant 0 : index
    %c0_17 = arith.constant 0 : index
    %14 = vector.load %arg3[%c0_15, %c1, %c0_16, %c0_17] : memref<3x9x4x12xbf16, #tpu.memory_space<vmem>>, vector<1x1x4x4xbf16>
    %15 = vector.shape_cast %14 : vector<1x1x4x4xbf16> to vector<4x4xbf16>
    %c0_18 = arith.constant 0 : index
    %c110 = arith.constant 110 : index
    %16 = vector.load %arg8[%c0_18, %c110] : memref<16x896xbf16, #tpu.memory_space<vmem>>, vector<4x640xbf16>
    %cst_19 = arith.constant dense<0.000000e+00> : vector<4x640xf32>
    %17 = tpu.matmul %15, %16, %cst_19 {dimension_numbers = #tpu.dot_dimension_numbers<[1], [0], [0], [1], [0, 0, 1, 1], [], []>} : vector<4x4xbf16>, vector<4x640xbf16>, vector<4x640xf32> -> vector<4x640xf32>
    %18 = arith.addf %13, %17 : vector<4x640xf32>
    %c0_20 = arith.constant 0 : index
    %c2 = arith.constant 2 : index
    %c0_21 = arith.constant 0 : index
    %c0_22 = arith.constant 0 : index
    %19 = vector.load %arg3[%c0_20, %c2, %c0_21, %c0_22] : memref<3x9x4x12xbf16, #tpu.memory_space<vmem>>, vector<1x1x4x4xbf16>
    %20 = vector.shape_cast %19 : vector<1x1x4x4xbf16> to vector<4x4xbf16>
    %c0_23 = arith.constant 0 : index
    %c111 = arith.constant 111 : index
    %21 = vector.load %arg8[%c0_23, %c111] : memref<16x896xbf16, #tpu.memory_space<vmem>>, vector<4x640xbf16>
    %cst_24 = arith.constant dense<0.000000e+00> : vector<4x640xf32>
    %22 = tpu.matmul %20, %21, %cst_24 {dimension_numbers = #tpu.dot_dimension_numbers<[1], [0], [0], [1], [0, 0, 1, 1], [], []>} : vector<4x4xbf16>, vector<4x640xbf16>, vector<4x640xf32> -> vector<4x640xf32>
    %23 = arith.addf %18, %22 : vector<4x640xf32>
    %c0_25 = arith.constant 0 : index
    %c3 = arith.constant 3 : index
    %c0_26 = arith.constant 0 : index
    %c0_27 = arith.constant 0 : index
    %24 = vector.load %arg3[%c0_25, %c3, %c0_26, %c0_27] : memref<3x9x4x12xbf16, #tpu.memory_space<vmem>>, vector<1x1x4x4xbf16>
    %25 = vector.shape_cast %24 : vector<1x1x4x4xbf16> to vector<4x4xbf16>
    %c0_28 = arith.constant 0 : index
    %c127 = arith.constant 127 : index
    %26 = vector.load %arg8[%c0_28, %c127] : memref<16x896xbf16, #tpu.memory_space<vmem>>, vector<4x640xbf16>
    %cst_29 = arith.constant dense<0.000000e+00> : vector<4x640xf32>
    %27 = tpu.matmul %25, %26, %cst_29 {dimension_numbers = #tpu.dot_dimension_numbers<[1], [0], [0], [1], [0, 0, 1, 1], [], []>} : vector<4x4xbf16>, vector<4x640xbf16>, vector<4x640xf32> -> vector<4x640xf32>
    %28 = arith.addf %23, %27 : vector<4x640xf32>
    %c0_30 = arith.constant 0 : index
    %c4_31 = arith.constant 4 : index
    %c0_32 = arith.constant 0 : index
    %c0_33 = arith.constant 0 : index
    %29 = vector.load %arg3[%c0_30, %c4_31, %c0_32, %c0_33] : memref<3x9x4x12xbf16, #tpu.memory_space<vmem>>, vector<1x1x4x4xbf16>
    %30 = vector.shape_cast %29 : vector<1x1x4x4xbf16> to vector<4x4xbf16>
    %c0_34 = arith.constant 0 : index
    %c128 = arith.constant 128 : index
    %31 = vector.load %arg8[%c0_34, %c128] : memref<16x896xbf16, #tpu.memory_space<vmem>>, vector<4x640xbf16>
    %cst_35 = arith.constant dense<0.000000e+00> : vector<4x640xf32>
    %32 = tpu.matmul %30, %31, %cst_35 {dimension_numbers = #tpu.dot_dimension_numbers<[1], [0], [0], [1], [0, 0, 1, 1], [], []>} : vector<4x4xbf16>, vector<4x640xbf16>, vector<4x640xf32> -> vector<4x640xf32>
    %33 = arith.addf %28, %32 : vector<4x640xf32>
    %c0_36 = arith.constant 0 : index
    %c5 = arith.constant 5 : index
    %c0_37 = arith.constant 0 : index
    %c0_38 = arith.constant 0 : index
    %34 = vector.load %arg3[%c0_36, %c5, %c0_37, %c0_38] : memref<3x9x4x12xbf16, #tpu.memory_space<vmem>>, vector<1x1x4x4xbf16>
    %35 = vector.shape_cast %34 : vector<1x1x4x4xbf16> to vector<4x4xbf16>
    %c0_39 = arith.constant 0 : index
    %c129 = arith.constant 129 : index
    %36 = vector.load %arg8[%c0_39, %c129] : memref<16x896xbf16, #tpu.memory_space<vmem>>, vector<4x640xbf16>
    %cst_40 = arith.constant dense<0.000000e+00> : vector<4x640xf32>
    %37 = tpu.matmul %35, %36, %cst_40 {dimension_numbers = #tpu.dot_dimension_numbers<[1], [0], [0], [1], [0, 0, 1, 1], [], []>} : vector<4x4xbf16>, vector<4x640xbf16>, vector<4x640xf32> -> vector<4x640xf32>
    %38 = arith.addf %33, %37 : vector<4x640xf32>
    %c0_41 = arith.constant 0 : index
    %c6 = arith.constant 6 : index
    %c0_42 = arith.constant 0 : index
    %c0_43 = arith.constant 0 : index
    %39 = vector.load %arg3[%c0_41, %c6, %c0_42, %c0_43] : memref<3x9x4x12xbf16, #tpu.memory_space<vmem>>, vector<1x1x4x4xbf16>
    %40 = vector.shape_cast %39 : vector<1x1x4x4xbf16> to vector<4x4xbf16>
    %c0_44 = arith.constant 0 : index
    %c145 = arith.constant 145 : index
    %41 = vector.load %arg8[%c0_44, %c145] : memref<16x896xbf16, #tpu.memory_space<vmem>>, vector<4x640xbf16>
    %cst_45 = arith.constant dense<0.000000e+00> : vector<4x640xf32>
    %42 = tpu.matmul %40, %41, %cst_45 {dimension_numbers = #tpu.dot_dimension_numbers<[1], [0], [0], [1], [0, 0, 1, 1], [], []>} : vector<4x4xbf16>, vector<4x640xbf16>, vector<4x640xf32> -> vector<4x640xf32>
    %43 = arith.addf %38, %42 : vector<4x640xf32>
    %c0_46 = arith.constant 0 : index
    %c7 = arith.constant 7 : index
    %c0_47 = arith.constant 0 : index
    %c0_48 = arith.constant 0 : index
    %44 = vector.load %arg3[%c0_46, %c7, %c0_47, %c0_48] : memref<3x9x4x12xbf16, #tpu.memory_space<vmem>>, vector<1x1x4x4xbf16>
    %45 = vector.shape_cast %44 : vector<1x1x4x4xbf16> to vector<4x4xbf16>
    %c0_49 = arith.constant 0 : index
    %c146 = arith.constant 146 : index
    %46 = vector.load %arg8[%c0_49, %c146] : memref<16x896xbf16, #tpu.memory_space<vmem>>, vector<4x640xbf16>
    %cst_50 = arith.constant dense<0.000000e+00> : vector<4x640xf32>
    %47 = tpu.matmul %45, %46, %cst_50 {dimension_numbers = #tpu.dot_dimension_numbers<[1], [0], [0], [1], [0, 0, 1, 1], [], []>} : vector<4x4xbf16>, vector<4x640xbf16>, vector<4x640xf32> -> vector<4x640xf32>
    %48 = arith.addf %43, %47 : vector<4x640xf32>
    %c0_51 = arith.constant 0 : index
    %c8 = arith.constant 8 : index
    %c0_52 = arith.constant 0 : index
    %c0_53 = arith.constant 0 : index
    %49 = vector.load %arg3[%c0_51, %c8, %c0_52, %c0_53] : memref<3x9x4x12xbf16, #tpu.memory_space<vmem>>, vector<1x1x4x4xbf16>
    %50 = vector.shape_cast %49 : vector<1x1x4x4xbf16> to vector<4x4xbf16>
    %c0_54 = arith.constant 0 : index
    %c147 = arith.constant 147 : index
    %51 = vector.load %arg8[%c0_54, %c147] : memref<16x896xbf16, #tpu.memory_space<vmem>>, vector<4x640xbf16>
    %cst_55 = arith.constant dense<0.000000e+00> : vector<4x640xf32>
    %52 = tpu.matmul %50, %51, %cst_55 {dimension_numbers = #tpu.dot_dimension_numbers<[1], [0], [0], [1], [0, 0, 1, 1], [], []>} : vector<4x4xbf16>, vector<4x640xbf16>, vector<4x640xf32> -> vector<4x640xf32>
    %53 = arith.addf %48, %52 : vector<4x640xf32>
    %c0_56 = arith.constant 0 : index
    %c0_57 = arith.constant 0 : index
    %c0_58 = arith.constant 0 : index
    %54 = vector.load %arg4[%c0_56, %c0_57, %c0_58] : memref<3x4x1xf32, #tpu.memory_space<vmem>>, vector<1x4x1xf32>
    %55 = vector.shape_cast %54 : vector<1x4x1xf32> to vector<4x1xf32>
    %56 = vector.broadcast %55 : vector<4x1xf32> to vector<4x640xf32>
    %57 = arith.addf %53, %56 : vector<4x640xf32>
    %cst_59 = arith.constant 0.000000e+00 : f32
    %58 = vector.broadcast %cst_59 : f32 to vector<4x640xf32>
    %59 = arith.maximumf %57, %58 : vector<4x640xf32>
    %60 = vector.broadcast %7 : vector<1x640xf32> to vector<4x640xf32>
    %61 = arith.mulf %59, %60 : vector<4x640xf32>
    %62 = arith.truncf %61 : vector<4x640xf32> to vector<4x640xbf16>
    %c4_60 = arith.constant 4 : index
    %c128_61 = arith.constant 128 : index
    %63 = vector.load %arg8[%c4_60, %c128_61] : memref<16x896xbf16, #tpu.memory_space<vmem>>, vector<4x640xbf16>
    tpu.vector_store %arg8[%c4_60, %c128_61], %62 {strides = array<i32>} : memref<16x896xbf16, #tpu.memory_space<vmem>>, vector<4x640xbf16>,
    %cst_62 = arith.constant 0.000000e+00 : f32
    %64 = vector.broadcast %cst_62 : f32 to vector<4x640xf32>
    %c1_63 = arith.constant 1 : index
    %c0_64 = arith.constant 0 : index
    %c0_65 = arith.constant 0 : index
    %c0_66 = arith.constant 0 : index
    %65 = vector.load %arg3[%c1_63, %c0_64, %c0_65, %c0_66] : memref<3x9x4x12xbf16, #tpu.memory_space<vmem>>, vector<1x1x4x8xbf16>
    %66 = vector.shape_cast %65 : vector<1x1x4x8xbf16> to vector<4x8xbf16>
    %c0_67 = arith.constant 0 : index
    %c109_68 = arith.constant 109 : index
    %67 = vector.load %arg8[%c0_67, %c109_68] : memref<16x896xbf16, #tpu.memory_space<vmem>>, vector<8x640xbf16>
    %cst_69 = arith.constant dense<0.000000e+00> : vector<4x640xf32>
    %68 = tpu.matmul %66, %67, %cst_69 {dimension_numbers = #tpu.dot_dimension_numbers<[1], [0], [0], [1], [0, 0, 1, 1], [], []>} : vector<4x8xbf16>, vector<8x640xbf16>, vector<4x640xf32> -> vector<4x640xf32>
    %69 = arith.addf %64, %68 : vector<4x640xf32>
    %c1_70 = arith.constant 1 : index
    %c1_71 = arith.constant 1 : index
    %c0_72 = arith.constant 0 : index
    %c0_73 = arith.constant 0 : index
    %70 = vector.load %arg3[%c1_70, %c1_71, %c0_72, %c0_73] : memref<3x9x4x12xbf16, #tpu.memory_space<vmem>>, vector<1x1x4x8xbf16>
    %71 = vector.shape_cast %70 : vector<1x1x4x8xbf16> to vector<4x8xbf16>
    %c0_74 = arith.constant 0 : index
    %c110_75 = arith.constant 110 : index
    %72 = vector.load %arg8[%c0_74, %c110_75] : memref<16x896xbf16, #tpu.memory_space<vmem>>, vector<8x640xbf16>
    %cst_76 = arith.constant dense<0.000000e+00> : vector<4x640xf32>
    %73 = tpu.matmul %71, %72, %cst_76 {dimension_numbers = #tpu.dot_dimension_numbers<[1], [0], [0], [1], [0, 0, 1, 1], [], []>} : vector<4x8xbf16>, vector<8x640xbf16>, vector<4x640xf32> -> vector<4x640xf32>
    %74 = arith.addf %69, %73 : vector<4x640xf32>
    %c1_77 = arith.constant 1 : index
    %c2_78 = arith.constant 2 : index
    %c0_79 = arith.constant 0 : index
    %c0_80 = arith.constant 0 : index
    %75 = vector.load %arg3[%c1_77, %c2_78, %c0_79, %c0_80] : memref<3x9x4x12xbf16, #tpu.memory_space<vmem>>, vector<1x1x4x8xbf16>
    %76 = vector.shape_cast %75 : vector<1x1x4x8xbf16> to vector<4x8xbf16>
    %c0_81 = arith.constant 0 : index
    %c111_82 = arith.constant 111 : index
    %77 = vector.load %arg8[%c0_81, %c111_82] : memref<16x896xbf16, #tpu.memory_space<vmem>>, vector<8x640xbf16>
    %cst_83 = arith.constant dense<0.000000e+00> : vector<4x640xf32>
    %78 = tpu.matmul %76, %77, %cst_83 {dimension_numbers = #tpu.dot_dimension_numbers<[1], [0], [0], [1], [0, 0, 1, 1], [], []>} : vector<4x8xbf16>, vector<8x640xbf16>, vector<4x640xf32> -> vector<4x640xf32>
    %79 = arith.addf %74, %78 : vector<4x640xf32>
    %c1_84 = arith.constant 1 : index
    %c3_85 = arith.constant 3 : index
    %c0_86 = arith.constant 0 : index
    %c0_87 = arith.constant 0 : index
    %80 = vector.load %arg3[%c1_84, %c3_85, %c0_86, %c0_87] : memref<3x9x4x12xbf16, #tpu.memory_space<vmem>>, vector<1x1x4x8xbf16>
    %81 = vector.shape_cast %80 : vector<1x1x4x8xbf16> to vector<4x8xbf16>
    %c0_88 = arith.constant 0 : index
    %c127_89 = arith.constant 127 : index
    %82 = vector.load %arg8[%c0_88, %c127_89] : memref<16x896xbf16, #tpu.memory_space<vmem>>, vector<8x640xbf16>
    %cst_90 = arith.constant dense<0.000000e+00> : vector<4x640xf32>
    %83 = tpu.matmul %81, %82, %cst_90 {dimension_numbers = #tpu.dot_dimension_numbers<[1], [0], [0], [1], [0, 0, 1, 1], [], []>} : vector<4x8xbf16>, vector<8x640xbf16>, vector<4x640xf32> -> vector<4x640xf32>
    %84 = arith.addf %79, %83 : vector<4x640xf32>
    %c1_91 = arith.constant 1 : index
    %c4_92 = arith.constant 4 : index
    %c0_93 = arith.constant 0 : index
    %c0_94 = arith.constant 0 : index
    %85 = vector.load %arg3[%c1_91, %c4_92, %c0_93, %c0_94] : memref<3x9x4x12xbf16, #tpu.memory_space<vmem>>, vector<1x1x4x8xbf16>
    %86 = vector.shape_cast %85 : vector<1x1x4x8xbf16> to vector<4x8xbf16>
    %c0_95 = arith.constant 0 : index
    %c128_96 = arith.constant 128 : index
    %87 = vector.load %arg8[%c0_95, %c128_96] : memref<16x896xbf16, #tpu.memory_space<vmem>>, vector<8x640xbf16>
    %cst_97 = arith.constant dense<0.000000e+00> : vector<4x640xf32>
    %88 = tpu.matmul %86, %87, %cst_97 {dimension_numbers = #tpu.dot_dimension_numbers<[1], [0], [0], [1], [0, 0, 1, 1], [], []>} : vector<4x8xbf16>, vector<8x640xbf16>, vector<4x640xf32> -> vector<4x640xf32>
    %89 = arith.addf %84, %88 : vector<4x640xf32>
    %c1_98 = arith.constant 1 : index
    %c5_99 = arith.constant 5 : index
    %c0_100 = arith.constant 0 : index
    %c0_101 = arith.constant 0 : index
    %90 = vector.load %arg3[%c1_98, %c5_99, %c0_100, %c0_101] : memref<3x9x4x12xbf16, #tpu.memory_space<vmem>>, vector<1x1x4x8xbf16>
    %91 = vector.shape_cast %90 : vector<1x1x4x8xbf16> to vector<4x8xbf16>
    %c0_102 = arith.constant 0 : index
    %c129_103 = arith.constant 129 : index
    %92 = vector.load %arg8[%c0_102, %c129_103] : memref<16x896xbf16, #tpu.memory_space<vmem>>, vector<8x640xbf16>
    %cst_104 = arith.constant dense<0.000000e+00> : vector<4x640xf32>
    %93 = tpu.matmul %91, %92, %cst_104 {dimension_numbers = #tpu.dot_dimension_numbers<[1], [0], [0], [1], [0, 0, 1, 1], [], []>} : vector<4x8xbf16>, vector<8x640xbf16>, vector<4x640xf32> -> vector<4x640xf32>
    %94 = arith.addf %89, %93 : vector<4x640xf32>
    %c1_105 = arith.constant 1 : index
    %c6_106 = arith.constant 6 : index
    %c0_107 = arith.constant 0 : index
    %c0_108 = arith.constant 0 : index
    %95 = vector.load %arg3[%c1_105, %c6_106, %c0_107, %c0_108] : memref<3x9x4x12xbf16, #tpu.memory_space<vmem>>, vector<1x1x4x8xbf16>
    %96 = vector.shape_cast %95 : vector<1x1x4x8xbf16> to vector<4x8xbf16>
    %c0_109 = arith.constant 0 : index
    %c145_110 = arith.constant 145 : index
    %97 = vector.load %arg8[%c0_109, %c145_110] : memref<16x896xbf16, #tpu.memory_space<vmem>>, vector<8x640xbf16>
    %cst_111 = arith.constant dense<0.000000e+00> : vector<4x640xf32>
    %98 = tpu.matmul %96, %97, %cst_111 {dimension_numbers = #tpu.dot_dimension_numbers<[1], [0], [0], [1], [0, 0, 1, 1], [], []>} : vector<4x8xbf16>, vector<8x640xbf16>, vector<4x640xf32> -> vector<4x640xf32>
    %99 = arith.addf %94, %98 : vector<4x640xf32>
    %c1_112 = arith.constant 1 : index
    %c7_113 = arith.constant 7 : index
    %c0_114 = arith.constant 0 : index
    %c0_115 = arith.constant 0 : index
    %100 = vector.load %arg3[%c1_112, %c7_113, %c0_114, %c0_115] : memref<3x9x4x12xbf16, #tpu.memory_space<vmem>>, vector<1x1x4x8xbf16>
    %101 = vector.shape_cast %100 : vector<1x1x4x8xbf16> to vector<4x8xbf16>
    %c0_116 = arith.constant 0 : index
    %c146_117 = arith.constant 146 : index
    %102 = vector.load %arg8[%c0_116, %c146_117] : memref<16x896xbf16, #tpu.memory_space<vmem>>, vector<8x640xbf16>
    %cst_118 = arith.constant dense<0.000000e+00> : vector<4x640xf32>
    %103 = tpu.matmul %101, %102, %cst_118 {dimension_numbers = #tpu.dot_dimension_numbers<[1], [0], [0], [1], [0, 0, 1, 1], [], []>} : vector<4x8xbf16>, vector<8x640xbf16>, vector<4x640xf32> -> vector<4x640xf32>
    %104 = arith.addf %99, %103 : vector<4x640xf32>
    %c1_119 = arith.constant 1 : index
    %c8_120 = arith.constant 8 : index
    %c0_121 = arith.constant 0 : index
    %c0_122 = arith.constant 0 : index
    %105 = vector.load %arg3[%c1_119, %c8_120, %c0_121, %c0_122] : memref<3x9x4x12xbf16, #tpu.memory_space<vmem>>, vector<1x1x4x8xbf16>
    %106 = vector.shape_cast %105 : vector<1x1x4x8xbf16> to vector<4x8xbf16>
    %c0_123 = arith.constant 0 : index
    %c147_124 = arith.constant 147 : index
    %107 = vector.load %arg8[%c0_123, %c147_124] : memref<16x896xbf16, #tpu.memory_space<vmem>>, vector<8x640xbf16>
    %cst_125 = arith.constant dense<0.000000e+00> : vector<4x640xf32>
    %108 = tpu.matmul %106, %107, %cst_125 {dimension_numbers = #tpu.dot_dimension_numbers<[1], [0], [0], [1], [0, 0, 1, 1], [], []>} : vector<4x8xbf16>, vector<8x640xbf16>, vector<4x640xf32> -> vector<4x640xf32>
    %109 = arith.addf %104, %108 : vector<4x640xf32>
    %c1_126 = arith.constant 1 : index
    %c0_127 = arith.constant 0 : index
    %c0_128 = arith.constant 0 : index
    %110 = vector.load %arg4[%c1_126, %c0_127, %c0_128] : memref<3x4x1xf32, #tpu.memory_space<vmem>>, vector<1x4x1xf32>
    %111 = vector.shape_cast %110 : vector<1x4x1xf32> to vector<4x1xf32>
    %112 = vector.broadcast %111 : vector<4x1xf32> to vector<4x640xf32>
    %113 = arith.addf %109, %112 : vector<4x640xf32>
    %cst_129 = arith.constant 0.000000e+00 : f32
    %114 = vector.broadcast %cst_129 : f32 to vector<4x640xf32>
    %115 = arith.maximumf %113, %114 : vector<4x640xf32>
    %116 = vector.broadcast %7 : vector<1x640xf32> to vector<4x640xf32>
    %117 = arith.mulf %115, %116 : vector<4x640xf32>
    %118 = arith.truncf %117 : vector<4x640xf32> to vector<4x640xbf16>
    %c8_130 = arith.constant 8 : index
    %c128_131 = arith.constant 128 : index
    %119 = vector.load %arg8[%c8_130, %c128_131] : memref<16x896xbf16, #tpu.memory_space<vmem>>, vector<4x640xbf16>
    tpu.vector_store %arg8[%c8_130, %c128_131], %118 {strides = array<i32>} : memref<16x896xbf16, #tpu.memory_space<vmem>>, vector<4x640xbf16>,
    %cst_132 = arith.constant 0.000000e+00 : f32
    %120 = vector.broadcast %cst_132 : f32 to vector<4x640xf32>
    %c2_133 = arith.constant 2 : index
    %c0_134 = arith.constant 0 : index
    %c0_135 = arith.constant 0 : index
    %c0_136 = arith.constant 0 : index
    %121 = vector.load %arg3[%c2_133, %c0_134, %c0_135, %c0_136] : memref<3x9x4x12xbf16, #tpu.memory_space<vmem>>, vector<1x1x4x12xbf16>
    %122 = vector.shape_cast %121 : vector<1x1x4x12xbf16> to vector<4x12xbf16>
    %c0_137 = arith.constant 0 : index
    %c109_138 = arith.constant 109 : index
    %123 = vector.load %arg8[%c0_137, %c109_138] : memref<16x896xbf16, #tpu.memory_space<vmem>>, vector<12x640xbf16>
    %cst_139 = arith.constant dense<0.000000e+00> : vector<4x640xf32>
    %124 = tpu.matmul %122, %123, %cst_139 {dimension_numbers = #tpu.dot_dimension_numbers<[1], [0], [0], [1], [0, 0, 1, 1], [], []>} : vector<4x12xbf16>, vector<12x640xbf16>, vector<4x640xf32> -> vector<4x640xf32>
    %125 = arith.addf %120, %124 : vector<4x640xf32>
    %c2_140 = arith.constant 2 : index
    %c1_141 = arith.constant 1 : index
    %c0_142 = arith.constant 0 : index
    %c0_143 = arith.constant 0 : index
    %126 = vector.load %arg3[%c2_140, %c1_141, %c0_142, %c0_143] : memref<3x9x4x12xbf16, #tpu.memory_space<vmem>>, vector<1x1x4x12xbf16>
    %127 = vector.shape_cast %126 : vector<1x1x4x12xbf16> to vector<4x12xbf16>
    %c0_144 = arith.constant 0 : index
    %c110_145 = arith.constant 110 : index
    %128 = vector.load %arg8[%c0_144, %c110_145] : memref<16x896xbf16, #tpu.memory_space<vmem>>, vector<12x640xbf16>
    %cst_146 = arith.constant dense<0.000000e+00> : vector<4x640xf32>
    %129 = tpu.matmul %127, %128, %cst_146 {dimension_numbers = #tpu.dot_dimension_numbers<[1], [0], [0], [1], [0, 0, 1, 1], [], []>} : vector<4x12xbf16>, vector<12x640xbf16>, vector<4x640xf32> -> vector<4x640xf32>
    %130 = arith.addf %125, %129 : vector<4x640xf32>
    %c2_147 = arith.constant 2 : index
    %c2_148 = arith.constant 2 : index
    %c0_149 = arith.constant 0 : index
    %c0_150 = arith.constant 0 : index
    %131 = vector.load %arg3[%c2_147, %c2_148, %c0_149, %c0_150] : memref<3x9x4x12xbf16, #tpu.memory_space<vmem>>, vector<1x1x4x12xbf16>
    %132 = vector.shape_cast %131 : vector<1x1x4x12xbf16> to vector<4x12xbf16>
    %c0_151 = arith.constant 0 : index
    %c111_152 = arith.constant 111 : index
    %133 = vector.load %arg8[%c0_151, %c111_152] : memref<16x896xbf16, #tpu.memory_space<vmem>>, vector<12x640xbf16>
    %cst_153 = arith.constant dense<0.000000e+00> : vector<4x640xf32>
    %134 = tpu.matmul %132, %133, %cst_153 {dimension_numbers = #tpu.dot_dimension_numbers<[1], [0], [0], [1], [0, 0, 1, 1], [], []>} : vector<4x12xbf16>, vector<12x640xbf16>, vector<4x640xf32> -> vector<4x640xf32>
    %135 = arith.addf %130, %134 : vector<4x640xf32>
    %c2_154 = arith.constant 2 : index
    %c3_155 = arith.constant 3 : index
    %c0_156 = arith.constant 0 : index
    %c0_157 = arith.constant 0 : index
    %136 = vector.load %arg3[%c2_154, %c3_155, %c0_156, %c0_157] : memref<3x9x4x12xbf16, #tpu.memory_space<vmem>>, vector<1x1x4x12xbf16>
    %137 = vector.shape_cast %136 : vector<1x1x4x12xbf16> to vector<4x12xbf16>
    %c0_158 = arith.constant 0 : index
    %c127_159 = arith.constant 127 : index
    %138 = vector.load %arg8[%c0_158, %c127_159] : memref<16x896xbf16, #tpu.memory_space<vmem>>, vector<12x640xbf16>
    %cst_160 = arith.constant dense<0.000000e+00> : vector<4x640xf32>
    %139 = tpu.matmul %137, %138, %cst_160 {dimension_numbers = #tpu.dot_dimension_numbers<[1], [0], [0], [1], [0, 0, 1, 1], [], []>} : vector<4x12xbf16>, vector<12x640xbf16>, vector<4x640xf32> -> vector<4x640xf32>
    %140 = arith.addf %135, %139 : vector<4x640xf32>
    %c2_161 = arith.constant 2 : index
    %c4_162 = arith.constant 4 : index
    %c0_163 = arith.constant 0 : index
    %c0_164 = arith.constant 0 : index
    %141 = vector.load %arg3[%c2_161, %c4_162, %c0_163, %c0_164] : memref<3x9x4x12xbf16, #tpu.memory_space<vmem>>, vector<1x1x4x12xbf16>
    %142 = vector.shape_cast %141 : vector<1x1x4x12xbf16> to vector<4x12xbf16>
    %c0_165 = arith.constant 0 : index
    %c128_166 = arith.constant 128 : index
    %143 = vector.load %arg8[%c0_165, %c128_166] : memref<16x896xbf16, #tpu.memory_space<vmem>>, vector<12x640xbf16>
    %cst_167 = arith.constant dense<0.000000e+00> : vector<4x640xf32>
    %144 = tpu.matmul %142, %143, %cst_167 {dimension_numbers = #tpu.dot_dimension_numbers<[1], [0], [0], [1], [0, 0, 1, 1], [], []>} : vector<4x12xbf16>, vector<12x640xbf16>, vector<4x640xf32> -> vector<4x640xf32>
    %145 = arith.addf %140, %144 : vector<4x640xf32>
    %c2_168 = arith.constant 2 : index
    %c5_169 = arith.constant 5 : index
    %c0_170 = arith.constant 0 : index
    %c0_171 = arith.constant 0 : index
    %146 = vector.load %arg3[%c2_168, %c5_169, %c0_170, %c0_171] : memref<3x9x4x12xbf16, #tpu.memory_space<vmem>>, vector<1x1x4x12xbf16>
    %147 = vector.shape_cast %146 : vector<1x1x4x12xbf16> to vector<4x12xbf16>
    %c0_172 = arith.constant 0 : index
    %c129_173 = arith.constant 129 : index
    %148 = vector.load %arg8[%c0_172, %c129_173] : memref<16x896xbf16, #tpu.memory_space<vmem>>, vector<12x640xbf16>
    %cst_174 = arith.constant dense<0.000000e+00> : vector<4x640xf32>
    %149 = tpu.matmul %147, %148, %cst_174 {dimension_numbers = #tpu.dot_dimension_numbers<[1], [0], [0], [1], [0, 0, 1, 1], [], []>} : vector<4x12xbf16>, vector<12x640xbf16>, vector<4x640xf32> -> vector<4x640xf32>
    %150 = arith.addf %145, %149 : vector<4x640xf32>
    %c2_175 = arith.constant 2 : index
    %c6_176 = arith.constant 6 : index
    %c0_177 = arith.constant 0 : index
    %c0_178 = arith.constant 0 : index
    %151 = vector.load %arg3[%c2_175, %c6_176, %c0_177, %c0_178] : memref<3x9x4x12xbf16, #tpu.memory_space<vmem>>, vector<1x1x4x12xbf16>
    %152 = vector.shape_cast %151 : vector<1x1x4x12xbf16> to vector<4x12xbf16>
    %c0_179 = arith.constant 0 : index
    %c145_180 = arith.constant 145 : index
    %153 = vector.load %arg8[%c0_179, %c145_180] : memref<16x896xbf16, #tpu.memory_space<vmem>>, vector<12x640xbf16>
    %cst_181 = arith.constant dense<0.000000e+00> : vector<4x640xf32>
    %154 = tpu.matmul %152, %153, %cst_181 {dimension_numbers = #tpu.dot_dimension_numbers<[1], [0], [0], [1], [0, 0, 1, 1], [], []>} : vector<4x12xbf16>, vector<12x640xbf16>, vector<4x640xf32> -> vector<4x640xf32>
    %155 = arith.addf %150, %154 : vector<4x640xf32>
    %c2_182 = arith.constant 2 : index
    %c7_183 = arith.constant 7 : index
    %c0_184 = arith.constant 0 : index
    %c0_185 = arith.constant 0 : index
    %156 = vector.load %arg3[%c2_182, %c7_183, %c0_184, %c0_185] : memref<3x9x4x12xbf16, #tpu.memory_space<vmem>>, vector<1x1x4x12xbf16>
    %157 = vector.shape_cast %156 : vector<1x1x4x12xbf16> to vector<4x12xbf16>
    %c0_186 = arith.constant 0 : index
    %c146_187 = arith.constant 146 : index
    %158 = vector.load %arg8[%c0_186, %c146_187] : memref<16x896xbf16, #tpu.memory_space<vmem>>, vector<12x640xbf16>
    %cst_188 = arith.constant dense<0.000000e+00> : vector<4x640xf32>
    %159 = tpu.matmul %157, %158, %cst_188 {dimension_numbers = #tpu.dot_dimension_numbers<[1], [0], [0], [1], [0, 0, 1, 1], [], []>} : vector<4x12xbf16>, vector<12x640xbf16>, vector<4x640xf32> -> vector<4x640xf32>
    %160 = arith.addf %155, %159 : vector<4x640xf32>
    %c2_189 = arith.constant 2 : index
    %c8_190 = arith.constant 8 : index
    %c0_191 = arith.constant 0 : index
    %c0_192 = arith.constant 0 : index
    %161 = vector.load %arg3[%c2_189, %c8_190, %c0_191, %c0_192] : memref<3x9x4x12xbf16, #tpu.memory_space<vmem>>, vector<1x1x4x12xbf16>
    %162 = vector.shape_cast %161 : vector<1x1x4x12xbf16> to vector<4x12xbf16>
    %c0_193 = arith.constant 0 : index
    %c147_194 = arith.constant 147 : index
    %163 = vector.load %arg8[%c0_193, %c147_194] : memref<16x896xbf16, #tpu.memory_space<vmem>>, vector<12x640xbf16>
    %cst_195 = arith.constant dense<0.000000e+00> : vector<4x640xf32>
    %164 = tpu.matmul %162, %163, %cst_195 {dimension_numbers = #tpu.dot_dimension_numbers<[1], [0], [0], [1], [0, 0, 1, 1], [], []>} : vector<4x12xbf16>, vector<12x640xbf16>, vector<4x640xf32> -> vector<4x640xf32>
    %165 = arith.addf %160, %164 : vector<4x640xf32>
    %c2_196 = arith.constant 2 : index
    %c0_197 = arith.constant 0 : index
    %c0_198 = arith.constant 0 : index
    %166 = vector.load %arg4[%c2_196, %c0_197, %c0_198] : memref<3x4x1xf32, #tpu.memory_space<vmem>>, vector<1x4x1xf32>
    %167 = vector.shape_cast %166 : vector<1x4x1xf32> to vector<4x1xf32>
    %168 = vector.broadcast %167 : vector<4x1xf32> to vector<4x640xf32>
    %169 = arith.addf %165, %168 : vector<4x640xf32>
    %cst_199 = arith.constant 0.000000e+00 : f32
    %170 = vector.broadcast %cst_199 : f32 to vector<4x640xf32>
    %171 = arith.maximumf %169, %170 : vector<4x640xf32>
    %172 = vector.broadcast %7 : vector<1x640xf32> to vector<4x640xf32>
    %173 = arith.mulf %171, %172 : vector<4x640xf32>
    %174 = arith.truncf %173 : vector<4x640xf32> to vector<4x640xbf16>
    %c12 = arith.constant 12 : index
    %c128_200 = arith.constant 128 : index
    %175 = vector.load %arg8[%c12, %c128_200] : memref<16x896xbf16, #tpu.memory_space<vmem>>, vector<4x640xbf16>
    tpu.vector_store %arg8[%c12, %c128_200], %174 {strides = array<i32>} : memref<16x896xbf16, #tpu.memory_space<vmem>>, vector<4x640xbf16>,
    %c0_201 = arith.constant 0 : index
    %c128_202 = arith.constant 128 : index
    %176 = vector.load %arg8[%c0_201, %c128_202] : memref<16x896xbf16, #tpu.memory_space<vmem>>, vector<16x640xbf16>
    %c0_203 = arith.constant 0 : index
    %c0_204 = arith.constant 0 : index
    %177 = vector.load %arg5[%c0_203, %c0_204] : memref<4x16xbf16, #tpu.memory_space<vmem>>, vector<4x16xbf16>
    %cst_205 = arith.constant dense<0.000000e+00> : vector<4x640xf32>
    %178 = tpu.matmul %177, %176, %cst_205 {dimension_numbers = #tpu.dot_dimension_numbers<[1], [0], [0], [1], [0, 0, 1, 1], [], []>} : vector<4x16xbf16>, vector<16x640xbf16>, vector<4x640xf32> -> vector<4x640xf32>
    %c0_206 = arith.constant 0 : index
    %c0_207 = arith.constant 0 : index
    %179 = vector.load %arg6[%c0_206, %c0_207] : memref<4x1xf32, #tpu.memory_space<vmem>>, vector<4x1xf32>
    %180 = vector.broadcast %179 : vector<4x1xf32> to vector<4x640xf32>
    %181 = arith.addf %178, %180 : vector<4x640xf32>
    %c0_208 = arith.constant 0 : index
    %c0_209 = arith.constant 0 : index
    %c128_210 = arith.constant 128 : index
    %182 = vector.load %arg1[%c0_208, %c0_209, %c128_210] : memref<1x4x896xf32, #tpu.memory_space<vmem>>, vector<1x4x640xf32>
    %183 = vector.shape_cast %182 : vector<1x4x640xf32> to vector<4x640xf32>
    %184 = arith.addf %181, %183 : vector<4x640xf32>
    %c0_211 = arith.constant 0 : index
    %c0_212 = arith.constant 0 : index
    %c0_213 = arith.constant 0 : index
    %185 = vector.load %arg7[%c0_211, %c0_212, %c0_213] : memref<1x4x640xf32, #tpu.memory_space<vmem>>, vector<1x4x640xf32>
    %186 = vector.shape_cast %185 : vector<1x4x640xf32> to vector<4x640xf32>
    %187 = vector.shape_cast %184 : vector<4x640xf32> to vector<1x4x640xf32>
    tpu.vector_store %arg7[%c0_211, %c0_212, %c0_213], %187 {strides = array<i32>} : memref<1x4x640xf32, #tpu.memory_space<vmem>>, vector<1x4x640xf32>,
    return
  }
  func.func @transform_0(%arg0: i32) -> (i32, i32, i32) {
    %c0_i32 = arith.constant 0 : i32
    %c0_i32_0 = arith.constant 0 : i32
    %c0_i32_1 = arith.constant 0 : i32
    return %arg0, %c0_i32, %c0_i32_0 : i32, i32, i32
  }
  func.func @transform_1(%arg0: i32) -> (i32, i32) {
    %c0_i32 = arith.constant 0 : i32
    %c0_i32_0 = arith.constant 0 : i32
    %c0_i32_1 = arith.constant 0 : i32
    return %c0_i32, %c0_i32_0 : i32, i32
  }
  func.func @transform_2(%arg0: i32) -> (i32, i32, i32, i32) {
    %c0_i32 = arith.constant 0 : i32
    %c0_i32_0 = arith.constant 0 : i32
    %c0_i32_1 = arith.constant 0 : i32
    %c0_i32_2 = arith.constant 0 : i32
    %c0_i32_3 = arith.constant 0 : i32
    return %c0_i32, %c0_i32_0, %c0_i32_1, %c0_i32_2 : i32, i32, i32, i32
  }
  func.func @transform_3(%arg0: i32) -> (i32, i32, i32) {
    %c0_i32 = arith.constant 0 : i32
    %c0_i32_0 = arith.constant 0 : i32
    %c0_i32_1 = arith.constant 0 : i32
    %c0_i32_2 = arith.constant 0 : i32
    return %c0_i32, %c0_i32_0, %c0_i32_1 : i32, i32, i32
  }
  func.func @transform_4(%arg0: i32) -> (i32, i32) {
    %c0_i32 = arith.constant 0 : i32
    %c0_i32_0 = arith.constant 0 : i32
    %c0_i32_1 = arith.constant 0 : i32
    return %c0_i32, %c0_i32_0 : i32, i32
  }
  func.func @transform_5(%arg0: i32) -> (i32, i32) {
    %c0_i32 = arith.constant 0 : i32
    %c0_i32_0 = arith.constant 0 : i32
    %c0_i32_1 = arith.constant 0 : i32
    return %c0_i32, %c0_i32_0 : i32, i32
  }
  func.func @transform_6(%arg0: i32) -> (i32, i32, i32) {
    %c0_i32 = arith.constant 0 : i32
    %c0_i32_0 = arith.constant 0 : i32
    %c0_i32_1 = arith.constant 0 : i32
    return %arg0, %c0_i32, %c0_i32_0 : i32, i32, i32
  }
}

</mosaic_0001>

<llo_original>
// kernel: rdb_forward.1
$region0: #{rdb_forward.1}
  #allocation0 [shape = 'u32[]', space=smem, size = 0x4, offset = 0x4, fixed_abs, tag = 'smem constant byte address 0x4 - core index']
  #allocation1 [shape = 'u32[144,128]{1,0:T(1,128)}', space=vmem, size = 0x12000, scoped, tag = 'internal scratch']
  #allocation2 [shape = 'bf16[16,896]{1,0:T(8,128)(2,1)}', space=vmem, size = 0x7000, scoped, tag = 'scratch operand']
  %s0 = inlined_call_operand.vmem [shape: f32[1,4,896], index: 0, kind: input, shape index: {}]
  %s1 = inlined_call_operand.vmem [shape: f32[1,640], index: 1, kind: input, shape index: {}]
  %s2 = inlined_call_operand.vmem [shape: bf16[3,9,4,12], index: 2, kind: input, shape index: {}]
  %s3 = inlined_call_operand.vmem [shape: f32[3,4,1], index: 3, kind: input, shape index: {}]
  %s4 = inlined_call_operand.vmem [shape: bf16[4,16], index: 4, kind: input, shape index: {}]
  %s5 = inlined_call_operand.vmem [shape: f32[4,1], index: 5, kind: input, shape index: {}]
  %s6 = inlined_call_operand.vmem [shape: f32[1,4,640], index: 6, kind: output, shape index: {}]
  %s7 = sld [smem:[#allocation0]]
  $region34: #{rdb_forward.1} parent=0
    _
  %s9 = ssub.s32 1, %s7
  %s10 = scalar_select 0, %s9, %s7
  // Predicated region
  $region2: #{rdb_forward.1} parent=0 // pred_check
    _
  $region3: #{rdb_forward.1} parent=0 // pred_check_branch
    %12 = sbr.rel (0) target = $region5
  $region4: #{rdb_forward.1} parent=0 // pred_region
    _
  $region5: #{rdb_forward.1} parent=0 // pred_fallthru
    _
  // Predicated region
  $region6: #{rdb_forward.1} parent=0 // pred_check
    _
  $region7: #{rdb_forward.1} parent=0 // pred_check_branch
    %14 = sbr.rel (0) target = $region9
  $region8: #{rdb_forward.1} parent=0 // pred_region
    _
  $region9: #{rdb_forward.1} parent=0 // pred_fallthru
    _
  // Predicated region
  $region10: #{rdb_forward.1} parent=0 // pred_check
    _
  $region11: #{rdb_forward.1} parent=0 // pred_check_branch
    %16 = sbr.rel (0) target = $region13
  $region12: #{rdb_forward.1} parent=0 // pred_region
    _
  $region13: #{rdb_forward.1} parent=0 // pred_fallthru
    _
  // Predicated region
  $region14: #{rdb_forward.1} parent=0 // pred_check
    _
  $region15: #{rdb_forward.1} parent=0 // pred_check_branch
    %18 = sbr.rel (0) target = $region17
  $region16: #{rdb_forward.1} parent=0 // pred_region
    _
  $region17: #{rdb_forward.1} parent=0 // pred_fallthru
    _
  // Predicated region
  $region18: #{rdb_forward.1} parent=0 // pred_check
    _
  $region19: #{rdb_forward.1} parent=0 // pred_check_branch
    %20 = sbr.rel (0) target = $region21
  $region20: #{rdb_forward.1} parent=0 // pred_region
    _
  $region21: #{rdb_forward.1} parent=0 // pred_fallthru
    _
  // Predicated region
  $region22: #{rdb_forward.1} parent=0 // pred_check
    _
  $region23: #{rdb_forward.1} parent=0 // pred_check_branch
    %22 = sbr.rel (0) target = $region25
  $region24: #{rdb_forward.1} parent=0 // pred_region
    _
  $region25: #{rdb_forward.1} parent=0 // pred_fallthru
    _
  %v24 = vld [vmem:[%s0] sm:$0xff]
  %v25 = vld [vmem:[%s0 + $0x8] sm:$0xff]
  %v26 = vld [vmem:[%s0 + $0x10] sm:$0xff]
  %v27 = vld [vmem:[%s0 + $0x18] sm:$0xf]
  %v31 = vcombine.high %v24, %v24
  %v32 = vcombine.high %v25, %v25
  %v33 = vcombine.high %v26, %v26
  %v37 = vpack.c.bf16 %v24, %v24
  %v38 = vpack.c.bf16 %v31, %v31
  %v39 = vpack.c.bf16 %v25, %v25
  %v40 = vpack.c.bf16 %v32, %v32
  %v41 = vpack.c.bf16 %v26, %v26
  %v42 = vpack.c.bf16 %v33, %v33
  %v43 = vpack.c.bf16 %v27, %v27
  %v51 = vunpack.c.l.b16 %v37
  %v52 = vunpack.c.l.b16 %v38
  %v53 = vunpack.c.l.b16 %v39
  %v54 = vunpack.c.l.b16 %v40
  %v55 = vunpack.c.l.b16 %v41
  %v56 = vunpack.c.l.b16 %v42
  %v57 = vunpack.c.l.b16 %v43
  %v58 = vpack.c.b16 %v52, %v51
  %v59 = vpack.c.b16 %v54, %v53
  %v60 = vpack.c.b16 %v56, %v55
  %v61 = vpack.c.b16 %v57, %v57
  %66 = vst [vmem:[#allocation2] sm:$0x33] %v58
  %67 = vst [vmem:[#allocation2 + $0x8] sm:$0x33] %v59
  %68 = vst [vmem:[#allocation2 + $0x10] sm:$0x33] %v60
  %69 = vst [vmem:[#allocation2 + $0x18] sm:$0x3] %v61
  %vm70 = vcmask 1044330
  %71 = vst.msk [vmem:[#allocation2] sm:$0xc] %vm70, 0
  %vm72 = vcmask 1044328
  %73 = vst.msk [vmem:[#allocation2 + $0x1c] sm:$0xf] %vm72, 0
  %vm74 = vcmask 150530
  %75 = vst.msk [vmem:[#allocation2 + $0x18] sm:$0xc] %vm74, 0
  %vm76 = vcmask 150528
  %77 = vst.msk [vmem:[#allocation2 + $0x34] sm:$0xf] %vm76, 0
  %v78 = vld [vmem:[%s1] sm:$0x1f]
  %v79 = vld [vmem:[%s2] sm:$0x3]
  %v80 = vld [vmem:[#allocation2] sm:$0x33]
  %v81 = vld [vmem:[#allocation2 + $0x8] sm:$0x33]
  %v82 = vld [vmem:[#allocation2 + $0x10] sm:$0x33]
  %s83 = scalar_lea.vmem %s2, 2
  %v84 = vld [vmem:[%s83] sm:$0x3]
  %v88 = vunpack.c.l.b16 %v80
  %v89 = vunpack.c.h.b16 %v80
  %v90 = vunpack.c.l.b16 %v81
  %v91 = vunpack.c.h.b16 %v81
  %v92 = vunpack.c.l.b16 %v82
  %v93 = vunpack.c.h.b16 %v82
  %v94 = vpack.c.b16 %v88, %v88
  %v95 = vpack.c.b16 %v89, %v89
  %v96 = vpack.c.b16 %v90, %v90
  %v97 = vpack.c.b16 %v91, %v91
  %v98 = vpack.c.b16 %v92, %v92
  %v99 = vpack.c.b16 %v93, %v93
  %100 = vrot.lane.b32.xlu0 %v94, 18
  %v101 = vpop.permute.xlu0 %100
  %102 = vrot.lane.b32.xlu0 %v95, 18
  %v103 = vpop.permute.xlu0 %102
  %104 = vrot.lane.b32.xlu0 %v96, 18
  %v105 = vpop.permute.xlu0 %104
  %106 = vrot.lane.b32.xlu0 %v97, 18
  %v107 = vpop.permute.xlu0 %106
  %108 = vrot.lane.b32.xlu0 %v98, 18
  %v109 = vpop.permute.xlu0 %108
  %110 = vrot.lane.b32.xlu0 %v99, 18
  %v111 = vpop.permute.xlu0 %110
  %vm112 = vcmask 146432
  %v113 = vsel %vm112, %v101, %v103
  %v114 = vsel %vm112, %v103, %v105
  %v115 = vsel %vm112, %v105, %v107
  %v116 = vsel %vm112, %v107, %v109
  %v117 = vsel %vm112, %v109, %v111
  %vm118 = vcmask 31744
  %v120 = vsel %vm118, %v84, 0
  %vm122 = vcmask 1041408
  %v124 = vsel %vm122, %v113, 0
  %v127 = vsel %vm122, %v114, 0
  %v130 = vsel %vm122, %v115, 0
  %v133 = vsel %vm122, %v116, 0
  %v136 = vsel %vm122, %v117, 0
  %138 = vmatprep.subr.bf16.mxu0 0
  %139 = vmatpush1.bf16.msra.mxu0 0
  %140 = vmatprep.subr.bf16.mxu0 0
  %141 = vmatpush1.bf16.msra.mxu0 0
  %142 = vmatprep.subr.bf16.mxu0 0
  %143 = vmatpush1.bf16.msra.mxu0 0
  %144 = vmatprep.subr.bf16.mxu0 0
  %145 = vmatpush1.bf16.msra.mxu0 0
  %146 = vmatprep.subr.bf16.mxu0 0
  %147 = vmatpush1.bf16.msra.mxu0 0
  %148 = vmatprep.subr.bf16.mxu0 0
  %149 = vmatpush1.bf16.msra.mxu0 0
  %150 = vmatprep.subr.bf16.mxu0 0
  %151 = vmatpush1.bf16.msra.mxu0 0
  %152 = vmatprep.subr.bf16.mxu0 %v127
  %153 = vmatpush1.bf16.msra.mxu0 %v124
  %154 = vmatprep.subr.bf16.mxu0 0
  %155 = vmatpush2.bf16.msra.mxu0 0
  %156 = vmatprep.subr.bf16.mxu0 0
  %157 = vmatpush2.bf16.msra.mxu0 0
  %158 = vmatprep.subr.bf16.mxu0 0
  %159 = vmatpush2.bf16.msra.mxu0 0
  %160 = vmatprep.subr.bf16.mxu0 0
  %161 = vmatpush2.bf16.msra.mxu0 0
  %162 = vmatprep.subr.bf16.mxu0 0
  %163 = vmatpush2.bf16.msra.mxu0 0
  %164 = vmatprep.subr.bf16.mxu0 0
  %165 = vmatpush2.bf16.msra.mxu0 0
  %166 = vmatprep.subr.bf16.mxu0 0
  %167 = vmatpush2.bf16.msra.mxu0 0
  %168 = vmatprep.subr.bf16.mxu0 0
  %169 = vmatpush2.bf16.msra.mxu0 0
  %170 = vmatprep.mubr.bf16.mxu0 0
  %171 = vmatmul.mubr.bf16.gmra.mxu0 %v120
  %v172 = vpop.f32.mrf.mxu0
  %v173 = vadd.f32 0.0, %v172
  %v174 = vpop.f32.mrf.mxu0
  %v175 = vadd.f32 0.0, %v174
  %v176 = vpop.f32.mrf.mxu0
  %v177 = vpop.f32.mrf.mxu0
  %178 = vdwg.mxu0
  %179 = vmatprep.subr.bf16.mxu0 0
  %180 = vmatpush1.bf16.msra.mxu0 0
  %181 = vmatprep.subr.bf16.mxu0 0
  %182 = vmatpush1.bf16.msra.mxu0 0
  %183 = vmatprep.subr.bf16.mxu0 0
  %184 = vmatpush1.bf16.msra.mxu0 0
  %185 = vmatprep.subr.bf16.mxu0 0
  %186 = vmatpush1.bf16.msra.mxu0 0
  %187 = vmatprep.subr.bf16.mxu0 0
  %188 = vmatpush1.bf16.msra.mxu0 0
  %189 = vmatprep.subr.bf16.mxu0 0
  %190 = vmatpush1.bf16.msra.mxu0 0
  %191 = vmatprep.subr.bf16.mxu0 0
  %192 = vmatpush1.bf16.msra.mxu0 0
  %193 = vmatprep.subr.bf16.mxu0 %v133
  %194 = vmatpush1.bf16.msra.mxu0 %v130
  %195 = vmatprep.subr.bf16.mxu0 0
  %196 = vmatpush2.bf16.msra.mxu0 0
  %197 = vmatprep.subr.bf16.mxu0 0
  %198 = vmatpush2.bf16.msra.mxu0 0
  %199 = vmatprep.subr.bf16.mxu0 0
  %200 = vmatpush2.bf16.msra.mxu0 0
  %201 = vmatprep.subr.bf16.mxu0 0
  %202 = vmatpush2.bf16.msra.mxu0 0
  %203 = vmatprep.subr.bf16.mxu0 0
  %204 = vmatpush2.bf16.msra.mxu0 0
  %205 = vmatprep.subr.bf16.mxu0 0
  %206 = vmatpush2.bf16.msra.mxu0 0
  %207 = vmatprep.subr.bf16.mxu0 0
  %208 = vmatpush2.bf16.msra.mxu0 0
  %209 = vmatprep.subr.bf16.mxu0 0
  %210 = vmatpush2.bf16.msra.mxu0 0
  %211 = vmatprep.mubr.bf16.mxu0 0
  %212 = vmatmul.mubr.bf16.gmra.mxu0 %v120
  %v213 = vpop.f32.mrf.mxu0
  %v214 = vadd.f32 0.0, %v213
  %v215 = vpop.f32.mrf.mxu0
  %v216 = vadd.f32 0.0, %v215
  %v217 = vpop.f32.mrf.mxu0
  %v218 = vpop.f32.mrf.mxu0
  %219 = vdwg.mxu0
  %220 = vmatprep.subr.bf16.mxu0 0
  %221 = vmatpush1.bf16.msra.mxu0 0
  %222 = vmatprep.subr.bf16.mxu0 0
  %223 = vmatpush1.bf16.msra.mxu0 0
  %224 = vmatprep.subr.bf16.mxu0 0
  %225 = vmatpush1.bf16.msra.mxu0 0
  %226 = vmatprep.subr.bf16.mxu0 0
  %227 = vmatpush1.bf16.msra.mxu0 0
  %228 = vmatprep.subr.bf16.mxu0 0
  %229 = vmatpush1.bf16.msra.mxu0 0
  %230 = vmatprep.subr.bf16.mxu0 0
  %231 = vmatpush1.bf16.msra.mxu0 0
  %232 = vmatprep.subr.bf16.mxu0 0
  %233 = vmatpush1.bf16.msra.mxu0 0
  %234 = vmatprep.subr.bf16.mxu0 0
  %235 = vmatpush1.bf16.msra.mxu0 %v136
  %236 = vmatprep.subr.bf16.mxu0 0
  %237 = vmatpush2.bf16.msra.mxu0 0
  %238 = vmatprep.subr.bf16.mxu0 0
  %239 = vmatpush2.bf16.msra.mxu0 0
  %240 = vmatprep.subr.bf16.mxu0 0
  %241 = vmatpush2.bf16.msra.mxu0 0
  %242 = vmatprep.subr.bf16.mxu0 0
  %243 = vmatpush2.bf16.msra.mxu0 0
  %244 = vmatprep.subr.bf16.mxu0 0
  %245 = vmatpush2.bf16.msra.mxu0 0
  %246 = vmatprep.subr.bf16.mxu0 0
  %247 = vmatpush2.bf16.msra.mxu0 0
  %248 = vmatprep.subr.bf16.mxu0 0
  %249 = vmatpush2.bf16.msra.mxu0 0
  %250 = vmatprep.subr.bf16.mxu0 0
  %251 = vmatpush2.bf16.msra.mxu0 0
  %252 = vmatprep.mubr.bf16.mxu0 0
  %253 = vmatmul.mubr.bf16.gmra.mxu0 %v120
  %v254 = vpop.f32.mrf.mxu0
  %v255 = vadd.f32 0.0, %v254
  %v256 = vpop.f32.mrf.mxu0
  %v257 = vpop.f32.mrf.mxu0
  %v258 = vpop.f32.mrf.mxu0
  %259 = vdwg.mxu0
  %260 = vrot.lane.b32.xlu0 %v94, 19
  %v261 = vpop.permute.xlu0 %260
  %262 = vrot.lane.b32.xlu0 %v95, 19
  %v263 = vpop.permute.xlu0 %262
  %264 = vrot.lane.b32.xlu0 %v96, 19
  %v265 = vpop.permute.xlu0 %264
  %266 = vrot.lane.b32.xlu0 %v97, 19
  %v267 = vpop.permute.xlu0 %266
  %268 = vrot.lane.b32.xlu0 %v98, 19
  %v269 = vpop.permute.xlu0 %268
  %270 = vrot.lane.b32.xlu0 %v99, 19
  %v271 = vpop.permute.xlu0 %270
  %vm272 = vcmask 154624
  %v273 = vsel %vm272, %v261, %v263
  %v274 = vsel %vm272, %v263, %v265
  %v275 = vsel %vm272, %v265, %v267
  %v276 = vsel %vm272, %v267, %v269
  %v277 = vsel %vm272, %v269, %v271
  %v279 = vsel %vm118, %v79, 0
  %v282 = vsel %vm122, %v273, 0
  %v285 = vsel %vm122, %v274, 0
  %v288 = vsel %vm122, %v275, 0
  %v291 = vsel %vm122, %v276, 0
  %v294 = vsel %vm122, %v277, 0
  %296 = vmatprep.subr.bf16.mxu0 0
  %297 = vmatpush1.bf16.msra.mxu0 0
  %298 = vmatprep.subr.bf16.mxu0 0
  %299 = vmatpush1.bf16.msra.mxu0 0
  %300 = vmatprep.subr.bf16.mxu0 0
  %301 = vmatpush1.bf16.msra.mxu0 0
  %302 = vmatprep.subr.bf16.mxu0 0
  %303 = vmatpush1.bf16.msra.mxu0 0
  %304 = vmatprep.subr.bf16.mxu0 0
  %305 = vmatpush1.bf16.msra.mxu0 0
  %306 = vmatprep.subr.bf16.mxu0 0
  %307 = vmatpush1.bf16.msra.mxu0 0
  %308 = vmatprep.subr.bf16.mxu0 0
  %309 = vmatpush1.bf16.msra.mxu0 0
  %310 = vmatprep.subr.bf16.mxu0 %v285
  %311 = vmatpush1.bf16.msra.mxu0 %v282
  %312 = vmatprep.subr.bf16.mxu0 0
  %313 = vmatpush2.bf16.msra.mxu0 0
  %314 = vmatprep.subr.bf16.mxu0 0
  %315 = vmatpush2.bf16.msra.mxu0 0
  %316 = vmatprep.subr.bf16.mxu0 0
  %317 = vmatpush2.bf16.msra.mxu0 0
  %318 = vmatprep.subr.bf16.mxu0 0
  %319 = vmatpush2.bf16.msra.mxu0 0
  %320 = vmatprep.subr.bf16.mxu0 0
  %321 = vmatpush2.bf16.msra.mxu0 0
  %322 = vmatprep.subr.bf16.mxu0 0
  %323 = vmatpush2.bf16.msra.mxu0 0
  %324 = vmatprep.subr.bf16.mxu0 0
  %325 = vmatpush2.bf16.msra.mxu0 0
  %326 = vmatprep.subr.bf16.mxu0 0
  %327 = vmatpush2.bf16.msra.mxu0 0
  %328 = vmatprep.mubr.bf16.mxu0 0
  %329 = vmatmul.mubr.bf16.gmra.mxu0 %v279
  %v330 = vpop.f32.mrf.mxu0
  %v331 = vadd.f32 %v173, %v330
  %v332 = vpop.f32.mrf.mxu0
  %v333 = vadd.f32 %v175, %v332
  %v334 = vpop.f32.mrf.mxu0
  %v335 = vpop.f32.mrf.mxu0
  %336 = vdwg.mxu0
  %337 = vmatprep.subr.bf16.mxu0 0
  %338 = vmatpush1.bf16.msra.mxu0 0
  %339 = vmatprep.subr.bf16.mxu0 0
  %340 = vmatpush1.bf16.msra.mxu0 0
  %341 = vmatprep.subr.bf16.mxu0 0
  %342 = vmatpush1.bf16.msra.mxu0 0
  %343 = vmatprep.subr.bf16.mxu0 0
  %344 = vmatpush1.bf16.msra.mxu0 0
  %345 = vmatprep.subr.bf16.mxu0 0
  %346 = vmatpush1.bf16.msra.mxu0 0
  %347 = vmatprep.subr.bf16.mxu0 0
  %348 = vmatpush1.bf16.msra.mxu0 0
  %349 = vmatprep.subr.bf16.mxu0 0
  %350 = vmatpush1.bf16.msra.mxu0 0
  %351 = vmatprep.subr.bf16.mxu0 %v291
  %352 = vmatpush1.bf16.msra.mxu0 %v288
  %353 = vmatprep.subr.bf16.mxu0 0
  %354 = vmatpush2.bf16.msra.mxu0 0
  %355 = vmatprep.subr.bf16.mxu0 0
  %356 = vmatpush2.bf16.msra.mxu0 0
  %357 = vmatprep.subr.bf16.mxu0 0
  %358 = vmatpush2.bf16.msra.mxu0 0
  %359 = vmatprep.subr.bf16.mxu0 0
  %360 = vmatpush2.bf16.msra.mxu0 0
  %361 = vmatprep.subr.bf16.mxu0 0
  %362 = vmatpush2.bf16.msra.mxu0 0
  %363 = vmatprep.subr.bf16.mxu0 0
  %364 = vmatpush2.bf16.msra.mxu0 0
  %365 = vmatprep.subr.bf16.mxu0 0
  %366 = vmatpush2.bf16.msra.mxu0 0
  %367 = vmatprep.subr.bf16.mxu0 0
  %368 = vmatpush2.bf16.msra.mxu0 0
  %369 = vmatprep.mubr.bf16.mxu0 0
  %370 = vmatmul.mubr.bf16.gmra.mxu0 %v279
  %v371 = vpop.f32.mrf.mxu0
  %v372 = vadd.f32 %v214, %v371
  %v373 = vpop.f32.mrf.mxu0
  %v374 = vadd.f32 %v216, %v373
  %v375 = vpop.f32.mrf.mxu0
  %v376 = vpop.f32.mrf.mxu0
  %377 = vdwg.mxu0
  %378 = vmatprep.subr.bf16.mxu0 0
  %379 = vmatpush1.bf16.msra.mxu0 0
  %380 = vmatprep.subr.bf16.mxu0 0
  %381 = vmatpush1.bf16.msra.mxu0 0
  %382 = vmatprep.subr.bf16.mxu0 0
  %383 = vmatpush1.bf16.msra.mxu0 0
  %384 = vmatprep.subr.bf16.mxu0 0
  %385 = vmatpush1.bf16.msra.mxu0 0
  %386 = vmatprep.subr.bf16.mxu0 0
  %387 = vmatpush1.bf16.msra.mxu0 0
  %388 = vmatprep.subr.bf16.mxu0 0
  %389 = vmatpush1.bf16.msra.mxu0 0
  %390 = vmatprep.subr.bf16.mxu0 0
  %391 = vmatpush1.bf16.msra.mxu0 0
  %392 = vmatprep.subr.bf16.mxu0 0
  %393 = vmatpush1.bf16.msra.mxu0 %v294
  %394 = vmatprep.subr.bf16.mxu0 0
  %395 = vmatpush2.bf16.msra.mxu0 0
  %396 = vmatprep.subr.bf16.mxu0 0
  %397 = vmatpush2.bf16.msra.mxu0 0
  %398 = vmatprep.subr.bf16.mxu0 0
  %399 = vmatpush2.bf16.msra.mxu0 0
  %400 = vmatprep.subr.bf16.mxu0 0
  %401 = vmatpush2.bf16.msra.mxu0 0
  %402 = vmatprep.subr.bf16.mxu0 0
  %403 = vmatpush2.bf16.msra.mxu0 0
  %404 = vmatprep.subr.bf16.mxu0 0
  %405 = vmatpush2.bf16.msra.mxu0 0
  %406 = vmatprep.subr.bf16.mxu0 0
  %407 = vmatpush2.bf16.msra.mxu0 0
  %408 = vmatprep.subr.bf16.mxu0 0
  %409 = vmatpush2.bf16.msra.mxu0 0
  %410 = vmatprep.mubr.bf16.mxu0 0
  %411 = vmatmul.mubr.bf16.gmra.mxu0 %v279
  %v412 = vpop.f32.mrf.mxu0
  %v413 = vadd.f32 %v255, %v412
  %v414 = vpop.f32.mrf.mxu0
  %v415 = vpop.f32.mrf.mxu0
  %v416 = vpop.f32.mrf.mxu0
  %417 = vdwg.mxu0
  %s418 = scalar_lea.vmem %s2, 4
  %v419 = vld [vmem:[%s418] sm:$0x3]
  %420 = vrot.lane.b32.xlu0 %v94, 17
  %v421 = vpop.permute.xlu0 %420
  %422 = vrot.lane.b32.xlu0 %v95, 17
  %v423 = vpop.permute.xlu0 %422
  %424 = vrot.lane.b32.xlu0 %v96, 17
  %v425 = vpop.permute.xlu0 %424
  %426 = vrot.lane.b32.xlu0 %v97, 17
  %v427 = vpop.permute.xlu0 %426
  %428 = vrot.lane.b32.xlu0 %v98, 17
  %v429 = vpop.permute.xlu0 %428
  %430 = vrot.lane.b32.xlu0 %v99, 17
  %v431 = vpop.permute.xlu0 %430
  %vm432 = vcmask 138240
  %v433 = vsel %vm432, %v421, %v423
  %v434 = vsel %vm432, %v423, %v425
  %v435 = vsel %vm432, %v425, %v427
  %v436 = vsel %vm432, %v427, %v429
  %v437 = vsel %vm432, %v429, %v431
  %v439 = vsel %vm118, %v419, 0
  %v442 = vsel %vm122, %v433, 0
  %v445 = vsel %vm122, %v434, 0
  %v448 = vsel %vm122, %v435, 0
  %v451 = vsel %vm122, %v436, 0
  %v454 = vsel %vm122, %v437, 0
  %456 = vmatprep.subr.bf16.mxu0 0
  %457 = vmatpush1.bf16.msra.mxu0 0
  %458 = vmatprep.subr.bf16.mxu0 0
  %459 = vmatpush1.bf16.msra.mxu0 0
  %460 = vmatprep.subr.bf16.mxu0 0
  %461 = vmatpush1.bf16.msra.mxu0 0
  %462 = vmatprep.subr.bf16.mxu0 0
  %463 = vmatpush1.bf16.msra.mxu0 0
  %464 = vmatprep.subr.bf16.mxu0 0
  %465 = vmatpush1.bf16.msra.mxu0 0
  %466 = vmatprep.subr.bf16.mxu0 0
  %467 = vmatpush1.bf16.msra.mxu0 0
  %468 = vmatprep.subr.bf16.mxu0 0
  %469 = vmatpush1.bf16.msra.mxu0 0
  %470 = vmatprep.subr.bf16.mxu0 %v445
  %471 = vmatpush1.bf16.msra.mxu0 %v442
  %472 = vmatprep.subr.bf16.mxu0 0
  %473 = vmatpush2.bf16.msra.mxu0 0
  %474 = vmatprep.subr.bf16.mxu0 0
  %475 = vmatpush2.bf16.msra.mxu0 0
  %476 = vmatprep.subr.bf16.mxu0 0
  %477 = vmatpush2.bf16.msra.mxu0 0
  %478 = vmatprep.subr.bf16.mxu0 0
  %479 = vmatpush2.bf16.msra.mxu0 0
  %480 = vmatprep.subr.bf16.mxu0 0
  %481 = vmatpush2.bf16.msra.mxu0 0
  %482 = vmatprep.subr.bf16.mxu0 0
  %483 = vmatpush2.bf16.msra.mxu0 0
  %484 = vmatprep.subr.bf16.mxu0 0
  %485 = vmatpush2.bf16.msra.mxu0 0
  %486 = vmatprep.subr.bf16.mxu0 0
  %487 = vmatpush2.bf16.msra.mxu0 0
  %488 = vmatprep.mubr.bf16.mxu0 0
  %489 = vmatmul.mubr.bf16.gmra.mxu0 %v439
  %v490 = vpop.f32.mrf.mxu0
  %v491 = vadd.f32 0.0, %v490
  %v492 = vpop.f32.mrf.mxu0
  %v493 = vadd.f32 0.0, %v492
  %v494 = vpop.f32.mrf.mxu0
  %v495 = vpop.f32.mrf.mxu0
  %496 = vdwg.mxu0
  %497 = vmatprep.subr.bf16.mxu0 0
  %498 = vmatpush1.bf16.msra.mxu0 0
  %499 = vmatprep.subr.bf16.mxu0 0
  %500 = vmatpush1.bf16.msra.mxu0 0
  %501 = vmatprep.subr.bf16.mxu0 0
  %502 = vmatpush1.bf16.msra.mxu0 0
  %503 = vmatprep.subr.bf16.mxu0 0
  %504 = vmatpush1.bf16.msra.mxu0 0
  %505 = vmatprep.subr.bf16.mxu0 0
  %506 = vmatpush1.bf16.msra.mxu0 0
  %507 = vmatprep.subr.bf16.mxu0 0
  %508 = vmatpush1.bf16.msra.mxu0 0
  %509 = vmatprep.subr.bf16.mxu0 0
  %510 = vmatpush1.bf16.msra.mxu0 0
  %511 = vmatprep.subr.bf16.mxu0 %v451
  %512 = vmatpush1.bf16.msra.mxu0 %v448
  %513 = vmatprep.subr.bf16.mxu0 0
  %514 = vmatpush2.bf16.msra.mxu0 0
  %515 = vmatprep.subr.bf16.mxu0 0
  %516 = vmatpush2.bf16.msra.mxu0 0
  %517 = vmatprep.subr.bf16.mxu0 0
  %518 = vmatpush2.bf16.msra.mxu0 0
  %519 = vmatprep.subr.bf16.mxu0 0
  %520 = vmatpush2.bf16.msra.mxu0 0
  %521 = vmatprep.subr.bf16.mxu0 0
  %522 = vmatpush2.bf16.msra.mxu0 0
  %523 = vmatprep.subr.bf16.mxu0 0
  %524 = vmatpush2.bf16.msra.mxu0 0
  %525 = vmatprep.subr.bf16.mxu0 0
  %526 = vmatpush2.bf16.msra.mxu0 0
  %527 = vmatprep.subr.bf16.mxu0 0
  %528 = vmatpush2.bf16.msra.mxu0 0
  %529 = vmatprep.mubr.bf16.mxu0 0
  %530 = vmatmul.mubr.bf16.gmra.mxu0 %v439
  %v531 = vpop.f32.mrf.mxu0
  %v532 = vadd.f32 0.0, %v531
  %v533 = vpop.f32.mrf.mxu0
  %v534 = vadd.f32 0.0, %v533
  %v535 = vpop.f32.mrf.mxu0
  %v536 = vpop.f32.mrf.mxu0
  %537 = vdwg.mxu0
  %538 = vmatprep.subr.bf16.mxu0 0
  %539 = vmatpush1.bf16.msra.mxu0 0
  %540 = vmatprep.subr.bf16.mxu0 0
  %541 = vmatpush1.bf16.msra.mxu0 0
  %542 = vmatprep.subr.bf16.mxu0 0
  %543 = vmatpush1.bf16.msra.mxu0 0
  %544 = vmatprep.subr.bf16.mxu0 0
  %545 = vmatpush1.bf16.msra.mxu0 0
  %546 = vmatprep.subr.bf16.mxu0 0
  %547 = vmatpush1.bf16.msra.mxu0 0
  %548 = vmatprep.subr.bf16.mxu0 0
  %549 = vmatpush1.bf16.msra.mxu0 0
  %550 = vmatprep.subr.bf16.mxu0 0
  %551 = vmatpush1.bf16.msra.mxu0 0
  %552 = vmatprep.subr.bf16.mxu0 0
  %553 = vmatpush1.bf16.msra.mxu0 %v454
  %554 = vmatprep.subr.bf16.mxu0 0
  %555 = vmatpush2.bf16.msra.mxu0 0
  %556 = vmatprep.subr.bf16.mxu0 0
  %557 = vmatpush2.bf16.msra.mxu0 0
  %558 = vmatprep.subr.bf16.mxu0 0
  %559 = vmatpush2.bf16.msra.mxu0 0
  %560 = vmatprep.subr.bf16.mxu0 0
  %561 = vmatpush2.bf16.msra.mxu0 0
  %562 = vmatprep.subr.bf16.mxu0 0
  %563 = vmatpush2.bf16.msra.mxu0 0
  %564 = vmatprep.subr.bf16.mxu0 0
  %565 = vmatpush2.bf16.msra.mxu0 0
  %566 = vmatprep.subr.bf16.mxu0 0
  %567 = vmatpush2.bf16.msra.mxu0 0
  %568 = vmatprep.subr.bf16.mxu0 0
  %569 = vmatpush2.bf16.msra.mxu0 0
  %570 = vmatprep.mubr.bf16.mxu0 0
  %571 = vmatmul.mubr.bf16.gmra.mxu0 %v439
  %v572 = vpop.f32.mrf.mxu0
  %v573 = vadd.f32 0.0, %v572
  %v574 = vpop.f32.mrf.mxu0
  %v575 = vpop.f32.mrf.mxu0
  %v576 = vpop.f32.mrf.mxu0
  %577 = vdwg.mxu0
  %v578 = vadd.f32 %v331, %v491
  %v579 = vadd.f32 %v333, %v493
  %v580 = vadd.f32 %v372, %v532
  %v581 = vadd.f32 %v374, %v534
  %v582 = vadd.f32 %v413, %v573
  %s583 = scalar_lea.vmem %s2, 6
  %v584 = vld [vmem:[%s583] sm:$0x3]
  %585 = vrot.lane.b32.xlu0 %v94, 1
  %v586 = vpop.permute.xlu0 %585
  %587 = vrot.lane.b32.xlu0 %v95, 1
  %v588 = vpop.permute.xlu0 %587
  %589 = vrot.lane.b32.xlu0 %v96, 1
  %v590 = vpop.permute.xlu0 %589
  %591 = vrot.lane.b32.xlu0 %v97, 1
  %v592 = vpop.permute.xlu0 %591
  %593 = vrot.lane.b32.xlu0 %v98, 1
  %v594 = vpop.permute.xlu0 %593
  %595 = vrot.lane.b32.xlu0 %v99, 1
  %v596 = vpop.permute.xlu0 %595
  %vm597 = vcmask 7168
  %v598 = vsel %vm597, %v586, %v588
  %v599 = vsel %vm597, %v588, %v590
  %v600 = vsel %vm597, %v590, %v592
  %v601 = vsel %vm597, %v592, %v594
  %v602 = vsel %vm597, %v594, %v596
  %v604 = vsel %vm118, %v584, 0
  %v607 = vsel %vm122, %v598, 0
  %v610 = vsel %vm122, %v599, 0
  %v613 = vsel %vm122, %v600, 0
  %v616 = vsel %vm122, %v601, 0
  %v619 = vsel %vm122, %v602, 0
  %621 = vmatprep.subr.bf16.mxu0 0
  %622 = vmatpush1.bf16.msra.mxu0 0
  %623 = vmatprep.subr.bf16.mxu0 0
  %624 = vmatpush1.bf16.msra.mxu0 0
  %625 = vmatprep.subr.bf16.mxu0 0
  %626 = vmatpush1.bf16.msra.mxu0 0
  %627 = vmatprep.subr.bf16.mxu0 0
  %628 = vmatpush1.bf16.msra.mxu0 0
  %629 = vmatprep.subr.bf16.mxu0 0
  %630 = vmatpush1.bf16.msra.mxu0 0
  %631 = vmatprep.subr.bf16.mxu0 0
  %632 = vmatpush1.bf16.msra.mxu0 0
  %633 = vmatprep.subr.bf16.mxu0 0
  %634 = vmatpush1.bf16.msra.mxu0 0
  %635 = vmatprep.subr.bf16.mxu0 %v610
  %636 = vmatpush1.bf16.msra.mxu0 %v607
  %637 = vmatprep.subr.bf16.mxu0 0
  %638 = vmatpush2.bf16.msra.mxu0 0
  %639 = vmatprep.subr.bf16.mxu0 0
  %640 = vmatpush2.bf16.msra.mxu0 0
  %641 = vmatprep.subr.bf16.mxu0 0
  %642 = vmatpush2.bf16.msra.mxu0 0
  %643 = vmatprep.subr.bf16.mxu0 0
  %644 = vmatpush2.bf16.msra.mxu0 0
  %645 = vmatprep.subr.bf16.mxu0 0
  %646 = vmatpush2.bf16.msra.mxu0 0
  %647 = vmatprep.subr.bf16.mxu0 0
  %648 = vmatpush2.bf16.msra.mxu0 0
  %649 = vmatprep.subr.bf16.mxu0 0
  %650 = vmatpush2.bf16.msra.mxu0 0
  %651 = vmatprep.subr.bf16.mxu0 0
  %652 = vmatpush2.bf16.msra.mxu0 0
  %653 = vmatprep.mubr.bf16.mxu0 0
  %654 = vmatmul.mubr.bf16.gmra.mxu0 %v604
  %v655 = vpop.f32.mrf.mxu0
  %v656 = vadd.f32 0.0, %v655
  %v657 = vpop.f32.mrf.mxu0
  %v658 = vadd.f32 0.0, %v657
  %v659 = vpop.f32.mrf.mxu0
  %v660 = vpop.f32.mrf.mxu0
  %661 = vdwg.mxu0
  %662 = vmatprep.subr.bf16.mxu0 0
  %663 = vmatpush1.bf16.msra.mxu0 0
  %664 = vmatprep.subr.bf16.mxu0 0
  %665 = vmatpush1.bf16.msra.mxu0 0
  %666 = vmatprep.subr.bf16.mxu0 0
  %667 = vmatpush1.bf16.msra.mxu0 0
  %668 = vmatprep.subr.bf16.mxu0 0
  %669 = vmatpush1.bf16.msra.mxu0 0
  %670 = vmatprep.subr.bf16.mxu0 0
  %671 = vmatpush1.bf16.msra.mxu0 0
  %672 = vmatprep.subr.bf16.mxu0 0
  %673 = vmatpush1.bf16.msra.mxu0 0
  %674 = vmatprep.subr.bf16.mxu0 0
  %675 = vmatpush1.bf16.msra.mxu0 0
  %676 = vmatprep.subr.bf16.mxu0 %v616
  %677 = vmatpush1.bf16.msra.mxu0 %v613
  %678 = vmatprep.subr.bf16.mxu0 0
  %679 = vmatpush2.bf16.msra.mxu0 0
  %680 = vmatprep.subr.bf16.mxu0 0
  %681 = vmatpush2.bf16.msra.mxu0 0
  %682 = vmatprep.subr.bf16.mxu0 0
  %683 = vmatpush2.bf16.msra.mxu0 0
  %684 = vmatprep.subr.bf16.mxu0 0
  %685 = vmatpush2.bf16.msra.mxu0 0
  %686 = vmatprep.subr.bf16.mxu0 0
  %687 = vmatpush2.bf16.msra.mxu0 0
  %688 = vmatprep.subr.bf16.mxu0 0
  %689 = vmatpush2.bf16.msra.mxu0 0
  %690 = vmatprep.subr.bf16.mxu0 0
  %691 = vmatpush2.bf16.msra.mxu0 0
  %692 = vmatprep.subr.bf16.mxu0 0
  %693 = vmatpush2.bf16.msra.mxu0 0
  %694 = vmatprep.mubr.bf16.mxu0 0
  %695 = vmatmul.mubr.bf16.gmra.mxu0 %v604
  %v696 = vpop.f32.mrf.mxu0
  %v697 = vadd.f32 0.0, %v696
  %v698 = vpop.f32.mrf.mxu0
  %v699 = vadd.f32 0.0, %v698
  %v700 = vpop.f32.mrf.mxu0
  %v701 = vpop.f32.mrf.mxu0
  %702 = vdwg.mxu0
  %703 = vmatprep.subr.bf16.mxu0 0
  %704 = vmatpush1.bf16.msra.mxu0 0
  %705 = vmatprep.subr.bf16.mxu0 0
  %706 = vmatpush1.bf16.msra.mxu0 0
  %707 = vmatprep.subr.bf16.mxu0 0
  %708 = vmatpush1.bf16.msra.mxu0 0
  %709 = vmatprep.subr.bf16.mxu0 0
  %710 = vmatpush1.bf16.msra.mxu0 0
  %711 = vmatprep.subr.bf16.mxu0 0
  %712 = vmatpush1.bf16.msra.mxu0 0
  %713 = vmatprep.subr.bf16.mxu0 0
  %714 = vmatpush1.bf16.msra.mxu0 0
  %715 = vmatprep.subr.bf16.mxu0 0
  %716 = vmatpush1.bf16.msra.mxu0 0
  %717 = vmatprep.subr.bf16.mxu0 0
  %718 = vmatpush1.bf16.msra.mxu0 %v619
  %719 = vmatprep.subr.bf16.mxu0 0
  %720 = vmatpush2.bf16.msra.mxu0 0
  %721 = vmatprep.subr.bf16.mxu0 0
  %722 = vmatpush2.bf16.msra.mxu0 0
  %723 = vmatprep.subr.bf16.mxu0 0
  %724 = vmatpush2.bf16.msra.mxu0 0
  %725 = vmatprep.subr.bf16.mxu0 0
  %726 = vmatpush2.bf16.msra.mxu0 0
  %727 = vmatprep.subr.bf16.mxu0 0
  %728 = vmatpush2.bf16.msra.mxu0 0
  %729 = vmatprep.subr.bf16.mxu0 0
  %730 = vmatpush2.bf16.msra.mxu0 0
  %731 = vmatprep.subr.bf16.mxu0 0
  %732 = vmatpush2.bf16.msra.mxu0 0
  %733 = vmatprep.subr.bf16.mxu0 0
  %734 = vmatpush2.bf16.msra.mxu0 0
  %735 = vmatprep.mubr.bf16.mxu0 0
  %736 = vmatmul.mubr.bf16.gmra.mxu0 %v604
  %v737 = vpop.f32.mrf.mxu0
  %v738 = vadd.f32 0.0, %v737
  %v739 = vpop.f32.mrf.mxu0
  %v740 = vpop.f32.mrf.mxu0
  %v741 = vpop.f32.mrf.mxu0
  %742 = vdwg.mxu0
  %v743 = vadd.f32 %v578, %v656
  %v744 = vadd.f32 %v579, %v658
  %v745 = vadd.f32 %v580, %v697
  %v746 = vadd.f32 %v581, %v699
  %v747 = vadd.f32 %v582, %v738
  %s748 = scalar_lea.vmem %s2, 8
  %v749 = vld [vmem:[%s748] sm:$0x3]
  %v750 = vld [vmem:[#allocation2 + $0x4] sm:$0x33]
  %v751 = vld [vmem:[#allocation2 + $0xc] sm:$0x33]
  %v752 = vld [vmem:[#allocation2 + $0x14] sm:$0x3]
  %v756 = vunpack.c.l.b16 %v750
  %v757 = vunpack.c.h.b16 %v750
  %v758 = vunpack.c.l.b16 %v751
  %v759 = vunpack.c.h.b16 %v751
  %v760 = vunpack.c.l.b16 %v752
  %v761 = vpack.c.b16 %v756, %v756
  %v762 = vpack.c.b16 %v757, %v757
  %v763 = vpack.c.b16 %v758, %v758
  %v764 = vpack.c.b16 %v759, %v759
  %v765 = vpack.c.b16 %v760, %v760
  %v767 = vsel %vm118, %v749, 0
  %v770 = vsel %vm122, %v761, 0
  %v773 = vsel %vm122, %v762, 0
  %v776 = vsel %vm122, %v763, 0
  %v779 = vsel %vm122, %v764, 0
  %v782 = vsel %vm122, %v765, 0
  %784 = vmatprep.subr.bf16.mxu0 0
  %785 = vmatpush1.bf16.msra.mxu0 0
  %786 = vmatprep.subr.bf16.mxu0 0
  %787 = vmatpush1.bf16.msra.mxu0 0
  %788 = vmatprep.subr.bf16.mxu0 0
  %789 = vmatpush1.bf16.msra.mxu0 0
  %790 = vmatprep.subr.bf16.mxu0 0
  %791 = vmatpush1.bf16.msra.mxu0 0
  %792 = vmatprep.subr.bf16.mxu0 0
  %793 = vmatpush1.bf16.msra.mxu0 0
  %794 = vmatprep.subr.bf16.mxu0 0
  %795 = vmatpush1.bf16.msra.mxu0 0
  %796 = vmatprep.subr.bf16.mxu0 0
  %797 = vmatpush1.bf16.msra.mxu0 0
  %798 = vmatprep.subr.bf16.mxu0 %v773
  %799 = vmatpush1.bf16.msra.mxu0 %v770
  %800 = vmatprep.subr.bf16.mxu0 0
  %801 = vmatpush2.bf16.msra.mxu0 0
  %802 = vmatprep.subr.bf16.mxu0 0
  %803 = vmatpush2.bf16.msra.mxu0 0
  %804 = vmatprep.subr.bf16.mxu0 0
  %805 = vmatpush2.bf16.msra.mxu0 0
  %806 = vmatprep.subr.bf16.mxu0 0
  %807 = vmatpush2.bf16.msra.mxu0 0
  %808 = vmatprep.subr.bf16.mxu0 0
  %809 = vmatpush2.bf16.msra.mxu0 0
  %810 = vmatprep.subr.bf16.mxu0 0
  %811 = vmatpush2.bf16.msra.mxu0 0
  %812 = vmatprep.subr.bf16.mxu0 0
  %813 = vmatpush2.bf16.msra.mxu0 0
  %814 = vmatprep.subr.bf16.mxu0 0
  %815 = vmatpush2.bf16.msra.mxu0 0
  %816 = vmatprep.mubr.bf16.mxu0 0
  %817 = vmatmul.mubr.bf16.gmra.mxu0 %v767
  %v818 = vpop.f32.mrf.mxu0
  %v819 = vadd.f32 0.0, %v818
  %v820 = vpop.f32.mrf.mxu0
  %v821 = vadd.f32 0.0, %v820
  %v822 = vpop.f32.mrf.mxu0
  %v823 = vpop.f32.mrf.mxu0
  %824 = vdwg.mxu0
  %825 = vmatprep.subr.bf16.mxu0 0
  %826 = vmatpush1.bf16.msra.mxu0 0
  %827 = vmatprep.subr.bf16.mxu0 0
  %828 = vmatpush1.bf16.msra.mxu0 0
  %829 = vmatprep.subr.bf16.mxu0 0
  %830 = vmatpush1.bf16.msra.mxu0 0
  %831 = vmatprep.subr.bf16.mxu0 0
  %832 = vmatpush1.bf16.msra.mxu0 0
  %833 = vmatprep.subr.bf16.mxu0 0
  %834 = vmatpush1.bf16.msra.mxu0 0
  %835 = vmatprep.subr.bf16.mxu0 0
  %836 = vmatpush1.bf16.msra.mxu0 0
  %837 = vmatprep.subr.bf16.mxu0 0
  %838 = vmatpush1.bf16.msra.mxu0 0
  %839 = vmatprep.subr.bf16.mxu0 %v779
  %840 = vmatpush1.bf16.msra.mxu0 %v776
  %841 = vmatprep.subr.bf16.mxu0 0
  %842 = vmatpush2.bf16.msra.mxu0 0
  %843 = vmatprep.subr.bf16.mxu0 0
  %844 = vmatpush2.bf16.msra.mxu0 0
  %845 = vmatprep.subr.bf16.mxu0 0
  %846 = vmatpush2.bf16.msra.mxu0 0
  %847 = vmatprep.subr.bf16.mxu0 0
  %848 = vmatpush2.bf16.msra.mxu0 0
  %849 = vmatprep.subr.bf16.mxu0 0
  %850 = vmatpush2.bf16.msra.mxu0 0
  %851 = vmatprep.subr.bf16.mxu0 0
  %852 = vmatpush2.bf16.msra.mxu0 0
  %853 = vmatprep.subr.bf16.mxu0 0
  %854 = vmatpush2.bf16.msra.mxu0 0
  %855 = vmatprep.subr.bf16.mxu0 0
  %856 = vmatpush2.bf16.msra.mxu0 0
  %857 = vmatprep.mubr.bf16.mxu0 0
  %858 = vmatmul.mubr.bf16.gmra.mxu0 %v767
  %v859 = vpop.f32.mrf.mxu0
  %v860 = vadd.f32 0.0, %v859
  %v861 = vpop.f32.mrf.mxu0
  %v862 = vadd.f32 0.0, %v861
  %v863 = vpop.f32.mrf.mxu0
  %v864 = vpop.f32.mrf.mxu0
  %865 = vdwg.mxu0
  %866 = vmatprep.subr.bf16.mxu0 0
  %867 = vmatpush1.bf16.msra.mxu0 0
  %868 = vmatprep.subr.bf16.mxu0 0
  %869 = vmatpush1.bf16.msra.mxu0 0
  %870 = vmatprep.subr.bf16.mxu0 0
  %871 = vmatpush1.bf16.msra.mxu0 0
  %872 = vmatprep.subr.bf16.mxu0 0
  %873 = vmatpush1.bf16.msra.mxu0 0
  %874 = vmatprep.subr.bf16.mxu0 0
  %875 = vmatpush1.bf16.msra.mxu0 0
  %876 = vmatprep.subr.bf16.mxu0 0
  %877 = vmatpush1.bf16.msra.mxu0 0
  %878 = vmatprep.subr.bf16.mxu0 0
  %879 = vmatpush1.bf16.msra.mxu0 0
  %880 = vmatprep.subr.bf16.mxu0 0
  %881 = vmatpush1.bf16.msra.mxu0 %v782
  %882 = vmatprep.subr.bf16.mxu0 0
  %883 = vmatpush2.bf16.msra.mxu0 0
  %884 = vmatprep.subr.bf16.mxu0 0
  %885 = vmatpush2.bf16.msra.mxu0 0
  %886 = vmatprep.subr.bf16.mxu0 0
  %887 = vmatpush2.bf16.msra.mxu0 0
  %888 = vmatprep.subr.bf16.mxu0 0
  %889 = vmatpush2.bf16.msra.mxu0 0
  %890 = vmatprep.subr.bf16.mxu0 0
  %891 = vmatpush2.bf16.msra.mxu0 0
  %892 = vmatprep.subr.bf16.mxu0 0
  %893 = vmatpush2.bf16.msra.mxu0 0
  %894 = vmatprep.subr.bf16.mxu0 0
  %895 = vmatpush2.bf16.msra.mxu0 0
  %896 = vmatprep.subr.bf16.mxu0 0
  %897 = vmatpush2.bf16.msra.mxu0 0
  %898 = vmatprep.mubr.bf16.mxu0 0
  %899 = vmatmul.mubr.bf16.gmra.mxu0 %v767
  %v900 = vpop.f32.mrf.mxu0
  %v901 = vadd.f32 0.0, %v900
  %v902 = vpop.f32.mrf.mxu0
  %v903 = vpop.f32.mrf.mxu0
  %v904 = vpop.f32.mrf.mxu0
  %905 = vdwg.mxu0
  %v906 = vadd.f32 %v743, %v819
  %v907 = vadd.f32 %v744, %v821
  %v908 = vadd.f32 %v745, %v860
  %v909 = vadd.f32 %v746, %v862
  %v910 = vadd.f32 %v747, %v901
  %s911 = scalar_lea.vmem %s2, 10
  %v912 = vld [vmem:[%s911] sm:$0x3]
  %v913 = vld [vmem:[#allocation2 + $0x4] sm:$0x33]
  %v914 = vld [vmem:[#allocation2 + $0xc] sm:$0x33]
  %v915 = vld [vmem:[#allocation2 + $0x14] sm:$0x33]
  %v919 = vunpack.c.l.b16 %v913
  %v920 = vunpack.c.h.b16 %v913
  %v921 = vunpack.c.l.b16 %v914
  %v922 = vunpack.c.h.b16 %v914
  %v923 = vunpack.c.l.b16 %v915
  %v924 = vunpack.c.h.b16 %v915
  %v925 = vpack.c.b16 %v919, %v919
  %v926 = vpack.c.b16 %v920, %v920
  %v927 = vpack.c.b16 %v921, %v921
  %v928 = vpack.c.b16 %v922, %v922
  %v929 = vpack.c.b16 %v923, %v923
  %v930 = vpack.c.b16 %v924, %v924
  %931 = vrot.lane.b32.xlu0 %v925, 127
  %v932 = vpop.permute.xlu0 %931
  %933 = vrot.lane.b32.xlu0 %v926, 127
  %v934 = vpop.permute.xlu0 %933
  %935 = vrot.lane.b32.xlu0 %v927, 127
  %v936 = vpop.permute.xlu0 %935
  %937 = vrot.lane.b32.xlu0 %v928, 127
  %v938 = vpop.permute.xlu0 %937
  %939 = vrot.lane.b32.xlu0 %v929, 127
  %v940 = vpop.permute.xlu0 %939
  %941 = vrot.lane.b32.xlu0 %v930, 127
  %v942 = vpop.permute.xlu0 %941
  %vm943 = vcmask 1039360
  %v944 = vsel %vm943, %v932, %v934
  %v945 = vsel %vm943, %v934, %v936
  %v946 = vsel %vm943, %v936, %v938
  %v947 = vsel %vm943, %v938, %v940
  %v948 = vsel %vm943, %v940, %v942
  %v950 = vsel %vm118, %v912, 0
  %v953 = vsel %vm122, %v944, 0
  %v956 = vsel %vm122, %v945, 0
  %v959 = vsel %vm122, %v946, 0
  %v962 = vsel %vm122, %v947, 0
  %v965 = vsel %vm122, %v948, 0
  %967 = vmatprep.subr.bf16.mxu0 0
  %968 = vmatpush1.bf16.msra.mxu0 0
  %969 = vmatprep.subr.bf16.mxu0 0
  %970 = vmatpush1.bf16.msra.mxu0 0
  %971 = vmatprep.subr.bf16.mxu0 0
  %972 = vmatpush1.bf16.msra.mxu0 0
  %973 = vmatprep.subr.bf16.mxu0 0
  %974 = vmatpush1.bf16.msra.mxu0 0
  %975 = vmatprep.subr.bf16.mxu0 0
  %976 = vmatpush1.bf16.msra.mxu0 0
  %977 = vmatprep.subr.bf16.mxu0 0
  %978 = vmatpush1.bf16.msra.mxu0 0
  %979 = vmatprep.subr.bf16.mxu0 0
  %980 = vmatpush1.bf16.msra.mxu0 0
  %981 = vmatprep.subr.bf16.mxu0 %v956
  %982 = vmatpush1.bf16.msra.mxu0 %v953
  %983 = vmatprep.subr.bf16.mxu0 0
  %984 = vmatpush2.bf16.msra.mxu0 0
  %985 = vmatprep.subr.bf16.mxu0 0
  %986 = vmatpush2.bf16.msra.mxu0 0
  %987 = vmatprep.subr.bf16.mxu0 0
  %988 = vmatpush2.bf16.msra.mxu0 0
  %989 = vmatprep.subr.bf16.mxu0 0
  %990 = vmatpush2.bf16.msra.mxu0 0
  %991 = vmatprep.subr.bf16.mxu0 0
  %992 = vmatpush2.bf16.msra.mxu0 0
  %993 = vmatprep.subr.bf16.mxu0 0
  %994 = vmatpush2.bf16.msra.mxu0 0
  %995 = vmatprep.subr.bf16.mxu0 0
  %996 = vmatpush2.bf16.msra.mxu0 0
  %997 = vmatprep.subr.bf16.mxu0 0
  %998 = vmatpush2.bf16.msra.mxu0 0
  %999 = vmatprep.mubr.bf16.mxu0 0
  %1000 = vmatmul.mubr.bf16.gmra.mxu0 %v950
  %v1001 = vpop.f32.mrf.mxu0
  %v1002 = vadd.f32 0.0, %v1001
  %v1003 = vpop.f32.mrf.mxu0
  %v1004 = vadd.f32 0.0, %v1003
  %v1005 = vpop.f32.mrf.mxu0
  %v1006 = vpop.f32.mrf.mxu0
  %1007 = vdwg.mxu0
  %1008 = vmatprep.subr.bf16.mxu0 0
  %1009 = vmatpush1.bf16.msra.mxu0 0
  %1010 = vmatprep.subr.bf16.mxu0 0
  %1011 = vmatpush1.bf16.msra.mxu0 0
  %1012 = vmatprep.subr.bf16.mxu0 0
  %1013 = vmatpush1.bf16.msra.mxu0 0
  %1014 = vmatprep.subr.bf16.mxu0 0
  %1015 = vmatpush1.bf16.msra.mxu0 0
  %1016 = vmatprep.subr.bf16.mxu0 0
  %1017 = vmatpush1.bf16.msra.mxu0 0
  %1018 = vmatprep.subr.bf16.mxu0 0
  %1019 = vmatpush1.bf16.msra.mxu0 0
  %1020 = vmatprep.subr.bf16.mxu0 0
  %1021 = vmatpush1.bf16.msra.mxu0 0
  %1022 = vmatprep.subr.bf16.mxu0 %v962
  %1023 = vmatpush1.bf16.msra.mxu0 %v959
  %1024 = vmatprep.subr.bf16.mxu0 0
  %1025 = vmatpush2.bf16.msra.mxu0 0
  %1026 = vmatprep.subr.bf16.mxu0 0
  %1027 = vmatpush2.bf16.msra.mxu0 0
  %1028 = vmatprep.subr.bf16.mxu0 0
  %1029 = vmatpush2.bf16.msra.mxu0 0
  %1030 = vmatprep.subr.bf16.mxu0 0
  %1031 = vmatpush2.bf16.msra.mxu0 0
  %1032 = vmatprep.subr.bf16.mxu0 0
  %1033 = vmatpush2.bf16.msra.mxu0 0
  %1034 = vmatprep.subr.bf16.mxu0 0
  %1035 = vmatpush2.bf16.msra.mxu0 0
  %1036 = vmatprep.subr.bf16.mxu0 0
  %1037 = vmatpush2.bf16.msra.mxu0 0
  %1038 = vmatprep.subr.bf16.mxu0 0
  %1039 = vmatpush2.bf16.msra.mxu0 0
  %1040 = vmatprep.mubr.bf16.mxu0 0
  %1041 = vmatmul.mubr.bf16.gmra.mxu0 %v950
  %v1042 = vpop.f32.mrf.mxu0
  %v1043 = vadd.f32 0.0, %v1042
  %v1044 = vpop.f32.mrf.mxu0
  %v1045 = vadd.f32 0.0, %v1044
  %v1046 = vpop.f32.mrf.mxu0
  %v1047 = vpop.f32.mrf.mxu0
  %1048 = vdwg.mxu0
  %1049 = vmatprep.subr.bf16.mxu0 0
  %1050 = vmatpush1.bf16.msra.mxu0 0
  %1051 = vmatprep.subr.bf16.mxu0 0
  %1052 = vmatpush1.bf16.msra.mxu0 0
  %1053 = vmatprep.subr.bf16.mxu0 0
  %1054 = vmatpush1.bf16.msra.mxu0 0
  %1055 = vmatprep.subr.bf16.mxu0 0
  %1056 = vmatpush1.bf16.msra.mxu0 0
  %1057 = vmatprep.subr.bf16.mxu0 0
  %1058 = vmatpush1.bf16.msra.mxu0 0
  %1059 = vmatprep.subr.bf16.mxu0 0
  %1060 = vmatpush1.bf16.msra.mxu0 0
  %1061 = vmatprep.subr.bf16.mxu0 0
  %1062 = vmatpush1.bf16.msra.mxu0 0
  %1063 = vmatprep.subr.bf16.mxu0 0
  %1064 = vmatpush1.bf16.msra.mxu0 %v965
  %1065 = vmatprep.subr.bf16.mxu0 0
  %1066 = vmatpush2.bf16.msra.mxu0 0
  %1067 = vmatprep.subr.bf16.mxu0 0
  %1068 = vmatpush2.bf16.msra.mxu0 0
  %1069 = vmatprep.subr.bf16.mxu0 0
  %1070 = vmatpush2.bf16.msra.mxu0 0
  %1071 = vmatprep.subr.bf16.mxu0 0
  %1072 = vmatpush2.bf16.msra.mxu0 0
  %1073 = vmatprep.subr.bf16.mxu0 0
  %1074 = vmatpush2.bf16.msra.mxu0 0
  %1075 = vmatprep.subr.bf16.mxu0 0
  %1076 = vmatpush2.bf16.msra.mxu0 0
  %1077 = vmatprep.subr.bf16.mxu0 0
  %1078 = vmatpush2.bf16.msra.mxu0 0
  %1079 = vmatprep.subr.bf16.mxu0 0
  %1080 = vmatpush2.bf16.msra.mxu0 0
  %1081 = vmatprep.mubr.bf16.mxu0 0
  %1082 = vmatmul.mubr.bf16.gmra.mxu0 %v950
  %v1083 = vpop.f32.mrf.mxu0
  %v1084 = vadd.f32 0.0, %v1083
  %v1085 = vpop.f32.mrf.mxu0
  %v1086 = vpop.f32.mrf.mxu0
  %v1087 = vpop.f32.mrf.mxu0
  %1088 = vdwg.mxu0
  %v1089 = vadd.f32 %v906, %v1002
  %v1090 = vadd.f32 %v907, %v1004
  %v1091 = vadd.f32 %v908, %v1043
  %v1092 = vadd.f32 %v909, %v1045
  %v1093 = vadd.f32 %v910, %v1084
  %s1094 = scalar_lea.vmem %s2, 12
  %v1095 = vld [vmem:[%s1094] sm:$0x3]
  %1096 = vrot.lane.b32.xlu0 %v925, 111
  %v1097 = vpop.permute.xlu0 %1096
  %1098 = vrot.lane.b32.xlu0 %v926, 111
  %v1099 = vpop.permute.xlu0 %1098
  %1100 = vrot.lane.b32.xlu0 %v927, 111
  %v1101 = vpop.permute.xlu0 %1100
  %1102 = vrot.lane.b32.xlu0 %v928, 111
  %v1103 = vpop.permute.xlu0 %1102
  %1104 = vrot.lane.b32.xlu0 %v929, 111
  %v1105 = vpop.permute.xlu0 %1104
  %1106 = vrot.lane.b32.xlu0 %v930, 111
  %v1107 = vpop.permute.xlu0 %1106
  %vm1108 = vcmask 908288
  %v1109 = vsel %vm1108, %v1097, %v1099
  %v1110 = vsel %vm1108, %v1099, %v1101
  %v1111 = vsel %vm1108, %v1101, %v1103
  %v1112 = vsel %vm1108, %v1103, %v1105
  %v1113 = vsel %vm1108, %v1105, %v1107
  %v1115 = vsel %vm118, %v1095, 0
  %v1118 = vsel %vm122, %v1109, 0
  %v1121 = vsel %vm122, %v1110, 0
  %v1124 = vsel %vm122, %v1111, 0
  %v1127 = vsel %vm122, %v1112, 0
  %v1130 = vsel %vm122, %v1113, 0
  %1132 = vmatprep.subr.bf16.mxu0 0
  %1133 = vmatpush1.bf16.msra.mxu0 0
  %1134 = vmatprep.subr.bf16.mxu0 0
  %1135 = vmatpush1.bf16.msra.mxu0 0
  %1136 = vmatprep.subr.bf16.mxu0 0
  %1137 = vmatpush1.bf16.msra.mxu0 0
  %1138 = vmatprep.subr.bf16.mxu0 0
  %1139 = vmatpush1.bf16.msra.mxu0 0
  %1140 = vmatprep.subr.bf16.mxu0 0
  %1141 = vmatpush1.bf16.msra.mxu0 0
  %1142 = vmatprep.subr.bf16.mxu0 0
  %1143 = vmatpush1.bf16.msra.mxu0 0
  %1144 = vmatprep.subr.bf16.mxu0 0
  %1145 = vmatpush1.bf16.msra.mxu0 0
  %1146 = vmatprep.subr.bf16.mxu0 %v1121
  %1147 = vmatpush1.bf16.msra.mxu0 %v1118
  %1148 = vmatprep.subr.bf16.mxu0 0
  %1149 = vmatpush2.bf16.msra.mxu0 0
  %1150 = vmatprep.subr.bf16.mxu0 0
  %1151 = vmatpush2.bf16.msra.mxu0 0
  %1152 = vmatprep.subr.bf16.mxu0 0
  %1153 = vmatpush2.bf16.msra.mxu0 0
  %1154 = vmatprep.subr.bf16.mxu0 0
  %1155 = vmatpush2.bf16.msra.mxu0 0
  %1156 = vmatprep.subr.bf16.mxu0 0
  %1157 = vmatpush2.bf16.msra.mxu0 0
  %1158 = vmatprep.subr.bf16.mxu0 0
  %1159 = vmatpush2.bf16.msra.mxu0 0
  %1160 = vmatprep.subr.bf16.mxu0 0
  %1161 = vmatpush2.bf16.msra.mxu0 0
  %1162 = vmatprep.subr.bf16.mxu0 0
  %1163 = vmatpush2.bf16.msra.mxu0 0
  %1164 = vmatprep.mubr.bf16.mxu0 0
  %1165 = vmatmul.mubr.bf16.gmra.mxu0 %v1115
  %v1166 = vpop.f32.mrf.mxu0
  %v1167 = vadd.f32 0.0, %v1166
  %v1168 = vpop.f32.mrf.mxu0
  %v1169 = vadd.f32 0.0, %v1168
  %v1170 = vpop.f32.mrf.mxu0
  %v1171 = vpop.f32.mrf.mxu0
  %1172 = vdwg.mxu0
  %1173 = vmatprep.subr.bf16.mxu0 0
  %1174 = vmatpush1.bf16.msra.mxu0 0
  %1175 = vmatprep.subr.bf16.mxu0 0
  %1176 = vmatpush1.bf16.msra.mxu0 0
  %1177 = vmatprep.subr.bf16.mxu0 0
  %1178 = vmatpush1.bf16.msra.mxu0 0
  %1179 = vmatprep.subr.bf16.mxu0 0
  %1180 = vmatpush1.bf16.msra.mxu0 0
  %1181 = vmatprep.subr.bf16.mxu0 0
  %1182 = vmatpush1.bf16.msra.mxu0 0
  %1183 = vmatprep.subr.bf16.mxu0 0
  %1184 = vmatpush1.bf16.msra.mxu0 0
  %1185 = vmatprep.subr.bf16.mxu0 0
  %1186 = vmatpush1.bf16.msra.mxu0 0
  %1187 = vmatprep.subr.bf16.mxu0 %v1127
  %1188 = vmatpush1.bf16.msra.mxu0 %v1124
  %1189 = vmatprep.subr.bf16.mxu0 0
  %1190 = vmatpush2.bf16.msra.mxu0 0
  %1191 = vmatprep.subr.bf16.mxu0 0
  %1192 = vmatpush2.bf16.msra.mxu0 0
  %1193 = vmatprep.subr.bf16.mxu0 0
  %1194 = vmatpush2.bf16.msra.mxu0 0
  %1195 = vmatprep.subr.bf16.mxu0 0
  %1196 = vmatpush2.bf16.msra.mxu0 0
  %1197 = vmatprep.subr.bf16.mxu0 0
  %1198 = vmatpush2.bf16.msra.mxu0 0
  %1199 = vmatprep.subr.bf16.mxu0 0
  %1200 = vmatpush2.bf16.msra.mxu0 0
  %1201 = vmatprep.subr.bf16.mxu0 0
  %1202 = vmatpush2.bf16.msra.mxu0 0
  %1203 = vmatprep.subr.bf16.mxu0 0
  %1204 = vmatpush2.bf16.msra.mxu0 0
  %1205 = vmatprep.mubr.bf16.mxu0 0
  %1206 = vmatmul.mubr.bf16.gmra.mxu0 %v1115
  %v1207 = vpop.f32.mrf.mxu0
  %v1208 = vadd.f32 0.0, %v1207
  %v1209 = vpop.f32.mrf.mxu0
  %v1210 = vadd.f32 0.0, %v1209
  %v1211 = vpop.f32.mrf.mxu0
  %v1212 = vpop.f32.mrf.mxu0
  %1213 = vdwg.mxu0
  %1214 = vmatprep.subr.bf16.mxu0 0
  %1215 = vmatpush1.bf16.msra.mxu0 0
  %1216 = vmatprep.subr.bf16.mxu0 0
  %1217 = vmatpush1.bf16.msra.mxu0 0
  %1218 = vmatprep.subr.bf16.mxu0 0
  %1219 = vmatpush1.bf16.msra.mxu0 0
  %1220 = vmatprep.subr.bf16.mxu0 0
  %1221 = vmatpush1.bf16.msra.mxu0 0
  %1222 = vmatprep.subr.bf16.mxu0 0
  %1223 = vmatpush1.bf16.msra.mxu0 0
  %1224 = vmatprep.subr.bf16.mxu0 0
  %1225 = vmatpush1.bf16.msra.mxu0 0
  %1226 = vmatprep.subr.bf16.mxu0 0
  %1227 = vmatpush1.bf16.msra.mxu0 0
  %1228 = vmatprep.subr.bf16.mxu0 0
  %1229 = vmatpush1.bf16.msra.mxu0 %v1130
  %1230 = vmatprep.subr.bf16.mxu0 0
  %1231 = vmatpush2.bf16.msra.mxu0 0
  %1232 = vmatprep.subr.bf16.mxu0 0
  %1233 = vmatpush2.bf16.msra.mxu0 0
  %1234 = vmatprep.subr.bf16.mxu0 0
  %1235 = vmatpush2.bf16.msra.mxu0 0
  %1236 = vmatprep.subr.bf16.mxu0 0
  %1237 = vmatpush2.bf16.msra.mxu0 0
  %1238 = vmatprep.subr.bf16.mxu0 0
  %1239 = vmatpush2.bf16.msra.mxu0 0
  %1240 = vmatprep.subr.bf16.mxu0 0
  %1241 = vmatpush2.bf16.msra.mxu0 0
  %1242 = vmatprep.subr.bf16.mxu0 0
  %1243 = vmatpush2.bf16.msra.mxu0 0
  %1244 = vmatprep.subr.bf16.mxu0 0
  %1245 = vmatpush2.bf16.msra.mxu0 0
  %1246 = vmatprep.mubr.bf16.mxu0 0
  %1247 = vmatmul.mubr.bf16.gmra.mxu0 %v1115
  %v1248 = vpop.f32.mrf.mxu0
  %v1249 = vadd.f32 0.0, %v1248
  %v1250 = vpop.f32.mrf.mxu0
  %v1251 = vpop.f32.mrf.mxu0
  %v1252 = vpop.f32.mrf.mxu0
  %1253 = vdwg.mxu0
  %v1254 = vadd.f32 %v1089, %v1167
  %v1255 = vadd.f32 %v1090, %v1169
  %v1256 = vadd.f32 %v1091, %v1208
  %v1257 = vadd.f32 %v1092, %v1210
  %v1258 = vadd.f32 %v1093, %v1249
  %s1259 = scalar_lea.vmem %s2, 14
  %v1260 = vld [vmem:[%s1259] sm:$0x3]
  %1261 = vrot.lane.b32.xlu0 %v925, 110
  %v1262 = vpop.permute.xlu0 %1261
  %1263 = vrot.lane.b32.xlu0 %v926, 110
  %v1264 = vpop.permute.xlu0 %1263
  %1265 = vrot.lane.b32.xlu0 %v927, 110
  %v1266 = vpop.permute.xlu0 %1265
  %1267 = vrot.lane.b32.xlu0 %v928, 110
  %v1268 = vpop.permute.xlu0 %1267
  %1269 = vrot.lane.b32.xlu0 %v929, 110
  %v1270 = vpop.permute.xlu0 %1269
  %1271 = vrot.lane.b32.xlu0 %v930, 110
  %v1272 = vpop.permute.xlu0 %1271
  %vm1273 = vcmask 900096
  %v1274 = vsel %vm1273, %v1262, %v1264
  %v1275 = vsel %vm1273, %v1264, %v1266
  %v1276 = vsel %vm1273, %v1266, %v1268
  %v1277 = vsel %vm1273, %v1268, %v1270
  %v1278 = vsel %vm1273, %v1270, %v1272
  %v1280 = vsel %vm118, %v1260, 0
  %v1283 = vsel %vm122, %v1274, 0
  %v1286 = vsel %vm122, %v1275, 0
  %v1289 = vsel %vm122, %v1276, 0
  %v1292 = vsel %vm122, %v1277, 0
  %v1295 = vsel %vm122, %v1278, 0
  %1297 = vmatprep.subr.bf16.mxu0 0
  %1298 = vmatpush1.bf16.msra.mxu0 0
  %1299 = vmatprep.subr.bf16.mxu0 0
  %1300 = vmatpush1.bf16.msra.mxu0 0
  %1301 = vmatprep.subr.bf16.mxu0 0
  %1302 = vmatpush1.bf16.msra.mxu0 0
  %1303 = vmatprep.subr.bf16.mxu0 0
  %1304 = vmatpush1.bf16.msra.mxu0 0
  %1305 = vmatprep.subr.bf16.mxu0 0
  %1306 = vmatpush1.bf16.msra.mxu0 0
  %1307 = vmatprep.subr.bf16.mxu0 0
  %1308 = vmatpush1.bf16.msra.mxu0 0
  %1309 = vmatprep.subr.bf16.mxu0 0
  %1310 = vmatpush1.bf16.msra.mxu0 0
  %1311 = vmatprep.subr.bf16.mxu0 %v1286
  %1312 = vmatpush1.bf16.msra.mxu0 %v1283
  %1313 = vmatprep.subr.bf16.mxu0 0
  %1314 = vmatpush2.bf16.msra.mxu0 0
  %1315 = vmatprep.subr.bf16.mxu0 0
  %1316 = vmatpush2.bf16.msra.mxu0 0
  %1317 = vmatprep.subr.bf16.mxu0 0
  %1318 = vmatpush2.bf16.msra.mxu0 0
  %1319 = vmatprep.subr.bf16.mxu0 0
  %1320 = vmatpush2.bf16.msra.mxu0 0
  %1321 = vmatprep.subr.bf16.mxu0 0
  %1322 = vmatpush2.bf16.msra.mxu0 0
  %1323 = vmatprep.subr.bf16.mxu0 0
  %1324 = vmatpush2.bf16.msra.mxu0 0
  %1325 = vmatprep.subr.bf16.mxu0 0
  %1326 = vmatpush2.bf16.msra.mxu0 0
  %1327 = vmatprep.subr.bf16.mxu0 0
  %1328 = vmatpush2.bf16.msra.mxu0 0
  %1329 = vmatprep.mubr.bf16.mxu0 0
  %1330 = vmatmul.mubr.bf16.gmra.mxu0 %v1280
  %v1331 = vpop.f32.mrf.mxu0
  %v1332 = vadd.f32 0.0, %v1331
  %v1333 = vpop.f32.mrf.mxu0
  %v1334 = vadd.f32 0.0, %v1333
  %v1335 = vpop.f32.mrf.mxu0
  %v1336 = vpop.f32.mrf.mxu0
  %1337 = vdwg.mxu0
  %1338 = vmatprep.subr.bf16.mxu0 0
  %1339 = vmatpush1.bf16.msra.mxu0 0
  %1340 = vmatprep.subr.bf16.mxu0 0
  %1341 = vmatpush1.bf16.msra.mxu0 0
  %1342 = vmatprep.subr.bf16.mxu0 0
  %1343 = vmatpush1.bf16.msra.mxu0 0
  %1344 = vmatprep.subr.bf16.mxu0 0
  %1345 = vmatpush1.bf16.msra.mxu0 0
  %1346 = vmatprep.subr.bf16.mxu0 0
  %1347 = vmatpush1.bf16.msra.mxu0 0
  %1348 = vmatprep.subr.bf16.mxu0 0
  %1349 = vmatpush1.bf16.msra.mxu0 0
  %1350 = vmatprep.subr.bf16.mxu0 0
  %1351 = vmatpush1.bf16.msra.mxu0 0
  %1352 = vmatprep.subr.bf16.mxu0 %v1292
  %1353 = vmatpush1.bf16.msra.mxu0 %v1289
  %1354 = vmatprep.subr.bf16.mxu0 0
  %1355 = vmatpush2.bf16.msra.mxu0 0
  %1356 = vmatprep.subr.bf16.mxu0 0
  %1357 = vmatpush2.bf16.msra.mxu0 0
  %1358 = vmatprep.subr.bf16.mxu0 0
  %1359 = vmatpush2.bf16.msra.mxu0 0
  %1360 = vmatprep.subr.bf16.mxu0 0
  %1361 = vmatpush2.bf16.msra.mxu0 0
  %1362 = vmatprep.subr.bf16.mxu0 0
  %1363 = vmatpush2.bf16.msra.mxu0 0
  %1364 = vmatprep.subr.bf16.mxu0 0
  %1365 = vmatpush2.bf16.msra.mxu0 0
  %1366 = vmatprep.subr.bf16.mxu0 0
  %1367 = vmatpush2.bf16.msra.mxu0 0
  %1368 = vmatprep.subr.bf16.mxu0 0
  %1369 = vmatpush2.bf16.msra.mxu0 0
  %1370 = vmatprep.mubr.bf16.mxu0 0
  %1371 = vmatmul.mubr.bf16.gmra.mxu0 %v1280
  %v1372 = vpop.f32.mrf.mxu0
  %v1373 = vadd.f32 0.0, %v1372
  %v1374 = vpop.f32.mrf.mxu0
  %v1375 = vadd.f32 0.0, %v1374
  %v1376 = vpop.f32.mrf.mxu0
  %v1377 = vpop.f32.mrf.mxu0
  %1378 = vdwg.mxu0
  %1379 = vmatprep.subr.bf16.mxu0 0
  %1380 = vmatpush1.bf16.msra.mxu0 0
  %1381 = vmatprep.subr.bf16.mxu0 0
  %1382 = vmatpush1.bf16.msra.mxu0 0
  %1383 = vmatprep.subr.bf16.mxu0 0
  %1384 = vmatpush1.bf16.msra.mxu0 0
  %1385 = vmatprep.subr.bf16.mxu0 0
  %1386 = vmatpush1.bf16.msra.mxu0 0
  %1387 = vmatprep.subr.bf16.mxu0 0
  %1388 = vmatpush1.bf16.msra.mxu0 0
  %1389 = vmatprep.subr.bf16.mxu0 0
  %1390 = vmatpush1.bf16.msra.mxu0 0
  %1391 = vmatprep.subr.bf16.mxu0 0
  %1392 = vmatpush1.bf16.msra.mxu0 0
  %1393 = vmatprep.subr.bf16.mxu0 0
  %1394 = vmatpush1.bf16.msra.mxu0 %v1295
  %1395 = vmatprep.subr.bf16.mxu0 0
  %1396 = vmatpush2.bf16.msra.mxu0 0
  %1397 = vmatprep.subr.bf16.mxu0 0
  %1398 = vmatpush2.bf16.msra.mxu0 0
  %1399 = vmatprep.subr.bf16.mxu0 0
  %1400 = vmatpush2.bf16.msra.mxu0 0
  %1401 = vmatprep.subr.bf16.mxu0 0
  %1402 = vmatpush2.bf16.msra.mxu0 0
  %1403 = vmatprep.subr.bf16.mxu0 0
  %1404 = vmatpush2.bf16.msra.mxu0 0
  %1405 = vmatprep.subr.bf16.mxu0 0
  %1406 = vmatpush2.bf16.msra.mxu0 0
  %1407 = vmatprep.subr.bf16.mxu0 0
  %1408 = vmatpush2.bf16.msra.mxu0 0
  %1409 = vmatprep.subr.bf16.mxu0 0
  %1410 = vmatpush2.bf16.msra.mxu0 0
  %1411 = vmatprep.mubr.bf16.mxu0 0
  %1412 = vmatmul.mubr.bf16.gmra.mxu0 %v1280
  %v1413 = vpop.f32.mrf.mxu0
  %v1414 = vadd.f32 0.0, %v1413
  %v1415 = vpop.f32.mrf.mxu0
  %v1416 = vpop.f32.mrf.mxu0
  %v1417 = vpop.f32.mrf.mxu0
  %1418 = vdwg.mxu0
  %v1419 = vadd.f32 %v1254, %v1332
  %v1420 = vadd.f32 %v1255, %v1334
  %v1421 = vadd.f32 %v1256, %v1373
  %v1422 = vadd.f32 %v1257, %v1375
  %v1423 = vadd.f32 %v1258, %v1414
  %s1424 = scalar_lea.vmem %s2, 16
  %v1425 = vld [vmem:[%s1424] sm:$0x3]
  %1426 = vrot.lane.b32.xlu0 %v925, 109
  %v1427 = vpop.permute.xlu0 %1426
  %1428 = vrot.lane.b32.xlu0 %v926, 109
  %v1429 = vpop.permute.xlu0 %1428
  %1430 = vrot.lane.b32.xlu0 %v927, 109
  %v1431 = vpop.permute.xlu0 %1430
  %1432 = vrot.lane.b32.xlu0 %v928, 109
  %v1433 = vpop.permute.xlu0 %1432
  %1434 = vrot.lane.b32.xlu0 %v929, 109
  %v1435 = vpop.permute.xlu0 %1434
  %1436 = vrot.lane.b32.xlu0 %v930, 109
  %v1437 = vpop.permute.xlu0 %1436
  %vm1438 = vcmask 891904
  %v1439 = vsel %vm1438, %v1427, %v1429
  %v1440 = vsel %vm1438, %v1429, %v1431
  %v1441 = vsel %vm1438, %v1431, %v1433
  %v1442 = vsel %vm1438, %v1433, %v1435
  %v1443 = vsel %vm1438, %v1435, %v1437
  %v1445 = vsel %vm118, %v1425, 0
  %v1448 = vsel %vm122, %v1439, 0
  %v1451 = vsel %vm122, %v1440, 0
  %v1454 = vsel %vm122, %v1441, 0
  %v1457 = vsel %vm122, %v1442, 0
  %v1460 = vsel %vm122, %v1443, 0
  %1462 = vmatprep.subr.bf16.mxu0 0
  %1463 = vmatpush1.bf16.msra.mxu0 0
  %1464 = vmatprep.subr.bf16.mxu0 0
  %1465 = vmatpush1.bf16.msra.mxu0 0
  %1466 = vmatprep.subr.bf16.mxu0 0
  %1467 = vmatpush1.bf16.msra.mxu0 0
  %1468 = vmatprep.subr.bf16.mxu0 0
  %1469 = vmatpush1.bf16.msra.mxu0 0
  %1470 = vmatprep.subr.bf16.mxu0 0
  %1471 = vmatpush1.bf16.msra.mxu0 0
  %1472 = vmatprep.subr.bf16.mxu0 0
  %1473 = vmatpush1.bf16.msra.mxu0 0
  %1474 = vmatprep.subr.bf16.mxu0 0
  %1475 = vmatpush1.bf16.msra.mxu0 0
  %1476 = vmatprep.subr.bf16.mxu0 %v1451
  %1477 = vmatpush1.bf16.msra.mxu0 %v1448
  %1478 = vmatprep.subr.bf16.mxu0 0
  %1479 = vmatpush2.bf16.msra.mxu0 0
  %1480 = vmatprep.subr.bf16.mxu0 0
  %1481 = vmatpush2.bf16.msra.mxu0 0
  %1482 = vmatprep.subr.bf16.mxu0 0
  %1483 = vmatpush2.bf16.msra.mxu0 0
  %1484 = vmatprep.subr.bf16.mxu0 0
  %1485 = vmatpush2.bf16.msra.mxu0 0
  %1486 = vmatprep.subr.bf16.mxu0 0
  %1487 = vmatpush2.bf16.msra.mxu0 0
  %1488 = vmatprep.subr.bf16.mxu0 0
  %1489 = vmatpush2.bf16.msra.mxu0 0
  %1490 = vmatprep.subr.bf16.mxu0 0
  %1491 = vmatpush2.bf16.msra.mxu0 0
  %1492 = vmatprep.subr.bf16.mxu0 0
  %1493 = vmatpush2.bf16.msra.mxu0 0
  %1494 = vmatprep.mubr.bf16.mxu0 0
  %1495 = vmatmul.mubr.bf16.gmra.mxu0 %v1445
  %v1496 = vpop.f32.mrf.mxu0
  %v1497 = vadd.f32 0.0, %v1496
  %v1498 = vpop.f32.mrf.mxu0
  %v1499 = vadd.f32 0.0, %v1498
  %v1500 = vpop.f32.mrf.mxu0
  %v1501 = vpop.f32.mrf.mxu0
  %1502 = vdwg.mxu0
  %1503 = vmatprep.subr.bf16.mxu0 0
  %1504 = vmatpush1.bf16.msra.mxu0 0
  %1505 = vmatprep.subr.bf16.mxu0 0
  %1506 = vmatpush1.bf16.msra.mxu0 0
  %1507 = vmatprep.subr.bf16.mxu0 0
  %1508 = vmatpush1.bf16.msra.mxu0 0
  %1509 = vmatprep.subr.bf16.mxu0 0
  %1510 = vmatpush1.bf16.msra.mxu0 0
  %1511 = vmatprep.subr.bf16.mxu0 0
  %1512 = vmatpush1.bf16.msra.mxu0 0
  %1513 = vmatprep.subr.bf16.mxu0 0
  %1514 = vmatpush1.bf16.msra.mxu0 0
  %1515 = vmatprep.subr.bf16.mxu0 0
  %1516 = vmatpush1.bf16.msra.mxu0 0
  %1517 = vmatprep.subr.bf16.mxu0 %v1457
  %1518 = vmatpush1.bf16.msra.mxu0 %v1454
  %1519 = vmatprep.subr.bf16.mxu0 0
  %1520 = vmatpush2.bf16.msra.mxu0 0
  %1521 = vmatprep.subr.bf16.mxu0 0
  %1522 = vmatpush2.bf16.msra.mxu0 0
  %1523 = vmatprep.subr.bf16.mxu0 0
  %1524 = vmatpush2.bf16.msra.mxu0 0
  %1525 = vmatprep.subr.bf16.mxu0 0
  %1526 = vmatpush2.bf16.msra.mxu0 0
  %1527 = vmatprep.subr.bf16.mxu0 0
  %1528 = vmatpush2.bf16.msra.mxu0 0
  %1529 = vmatprep.subr.bf16.mxu0 0
  %1530 = vmatpush2.bf16.msra.mxu0 0
  %1531 = vmatprep.subr.bf16.mxu0 0
  %1532 = vmatpush2.bf16.msra.mxu0 0
  %1533 = vmatprep.subr.bf16.mxu0 0
  %1534 = vmatpush2.bf16.msra.mxu0 0
  %1535 = vmatprep.mubr.bf16.mxu0 0
  %1536 = vmatmul.mubr.bf16.gmra.mxu0 %v1445
  %v1537 = vpop.f32.mrf.mxu0
  %v1538 = vadd.f32 0.0, %v1537
  %v1539 = vpop.f32.mrf.mxu0
  %v1540 = vadd.f32 0.0, %v1539
  %v1541 = vpop.f32.mrf.mxu0
  %v1542 = vpop.f32.mrf.mxu0
  %1543 = vdwg.mxu0
  %1544 = vmatprep.subr.bf16.mxu0 0
  %1545 = vmatpush1.bf16.msra.mxu0 0
  %1546 = vmatprep.subr.bf16.mxu0 0
  %1547 = vmatpush1.bf16.msra.mxu0 0
  %1548 = vmatprep.subr.bf16.mxu0 0
  %1549 = vmatpush1.bf16.msra.mxu0 0
  %1550 = vmatprep.subr.bf16.mxu0 0
  %1551 = vmatpush1.bf16.msra.mxu0 0
  %1552 = vmatprep.subr.bf16.mxu0 0
  %1553 = vmatpush1.bf16.msra.mxu0 0
  %1554 = vmatprep.subr.bf16.mxu0 0
  %1555 = vmatpush1.bf16.msra.mxu0 0
  %1556 = vmatprep.subr.bf16.mxu0 0
  %1557 = vmatpush1.bf16.msra.mxu0 0
  %1558 = vmatprep.subr.bf16.mxu0 0
  %1559 = vmatpush1.bf16.msra.mxu0 %v1460
  %1560 = vmatprep.subr.bf16.mxu0 0
  %1561 = vmatpush2.bf16.msra.mxu0 0
  %1562 = vmatprep.subr.bf16.mxu0 0
  %1563 = vmatpush2.bf16.msra.mxu0 0
  %1564 = vmatprep.subr.bf16.mxu0 0
  %1565 = vmatpush2.bf16.msra.mxu0 0
  %1566 = vmatprep.subr.bf16.mxu0 0
  %1567 = vmatpush2.bf16.msra.mxu0 0
  %1568 = vmatprep.subr.bf16.mxu0 0
  %1569 = vmatpush2.bf16.msra.mxu0 0
  %1570 = vmatprep.subr.bf16.mxu0 0
  %1571 = vmatpush2.bf16.msra.mxu0 0
  %1572 = vmatprep.subr.bf16.mxu0 0
  %1573 = vmatpush2.bf16.msra.mxu0 0
  %1574 = vmatprep.subr.bf16.mxu0 0
  %1575 = vmatpush2.bf16.msra.mxu0 0
  %1576 = vmatprep.mubr.bf16.mxu0 0
  %1577 = vmatmul.mubr.bf16.gmra.mxu0 %v1445
  %v1578 = vpop.f32.mrf.mxu0
  %v1579 = vadd.f32 0.0, %v1578
  %v1580 = vpop.f32.mrf.mxu0
  %v1581 = vpop.f32.mrf.mxu0
  %v1582 = vpop.f32.mrf.mxu0
  %1583 = vdwg.mxu0
  %v1584 = vadd.f32 %v1419, %v1497
  %v1585 = vadd.f32 %v1420, %v1499
  %v1586 = vadd.f32 %v1421, %v1538
  %v1587 = vadd.f32 %v1422, %v1540
  %v1588 = vadd.f32 %v1423, %v1579
  %v1589 = vld [vmem:[%s3] sm:$0xf]
  %1591 = vset.pattern.permute.xlu0 0
  %1592 = vperm.xlu0 %1591, %v1589
  %v1593 = vpop.permute.xlu0 %1592
  %v1595 = vadd.f32 %v1584, %v1593
  %v1596 = vadd.f32 %v1585, %v1593
  %v1597 = vadd.f32 %v1586, %v1593
  %v1598 = vadd.f32 %v1587, %v1593
  %v1599 = vadd.f32 %v1588, %v1593
  %v1600 = vmax.f32 %v1595, 0.0
  %v1601 = vmax.f32 %v1596, 0.0
  %v1602 = vmax.f32 %v1597, 0.0
  %v1603 = vmax.f32 %v1598, 0.0
  %v1604 = vmax.f32 %v1599, 0.0
  %v1606 = vlaneseq
  %v1607 = vshrl.u32 %v1606, 7
  %v1608 = vsub.s32 0, %v1607
  %v1609 = vrot.slane %v78, %v1608
  %v1610 = vlaneseq
  %v1611 = vshrl.u32 %v1610, 7
  %v1612 = vsub.s32 1, %v1611
  %v1613 = vrot.slane %v78, %v1612
  %v1614 = vlaneseq
  %v1615 = vshrl.u32 %v1614, 7
  %v1616 = vsub.s32 2, %v1615
  %v1617 = vrot.slane %v78, %v1616
  %v1618 = vlaneseq
  %v1619 = vshrl.u32 %v1618, 7
  %v1620 = vsub.s32 3, %v1619
  %v1621 = vrot.slane %v78, %v1620
  %v1622 = vlaneseq
  %v1623 = vshrl.u32 %v1622, 7
  %v1624 = vsub.s32 4, %v1623
  %v1625 = vrot.slane %v78, %v1624
  %v1631 = vmul.f32 %v1600, %v1609
  %v1632 = vmul.f32 %v1601, %v1613
  %v1633 = vmul.f32 %v1602, %v1617
  %v1634 = vmul.f32 %v1603, %v1621
  %v1635 = vmul.f32 %v1604, %v1625
  %v1636 = vpack.c.bf16 %v1631, %v1631
  %v1637 = vpack.c.bf16 %v1632, %v1632
  %v1638 = vpack.c.bf16 %v1633, %v1633
  %v1639 = vpack.c.bf16 %v1634, %v1634
  %v1640 = vpack.c.bf16 %v1635, %v1635
  %v1646 = vunpack.c.l.b16 %v1636
  %v1647 = vunpack.c.l.b16 %v1637
  %v1648 = vunpack.c.l.b16 %v1638
  %v1649 = vunpack.c.l.b16 %v1639
  %v1650 = vunpack.c.l.b16 %v1640
  %v1651 = vpack.c.b16 %v1647, %v1646
  %v1652 = vpack.c.b16 %v1649, %v1648
  %v1653 = vpack.c.b16 %v1650, %v1650
  %v1654 = vrot.slane %v1651, 6
  %v1655 = vrot.slane %v1652, 6
  %v1656 = vrot.slane %v1653, 6
  %1660 = vst [vmem:[#allocation2 + $0x4] sm:$0xcc] %v1654
  %1661 = vst [vmem:[#allocation2 + $0xc] sm:$0xcc] %v1655
  %1662 = vst [vmem:[#allocation2 + $0x14] sm:$0xc] %v1656
  %s1663 = scalar_lea.vmem %s2, 18
  %v1664 = vld [vmem:[%s1663] sm:$0x3]
  %v1665 = vld [vmem:[#allocation2] sm:$0xff]
  %v1666 = vld [vmem:[#allocation2 + $0x8] sm:$0xff]
  %v1667 = vld [vmem:[#allocation2 + $0x10] sm:$0xff]
  %s1668 = scalar_lea.vmem %s2, 20
  %v1669 = vld [vmem:[%s1668] sm:$0x3]
  %v1673 = vunpack.c.l.b16 %v1665
  %v1674 = vunpack.c.h.b16 %v1665
  %v1675 = vunpack.c.l.b16 %v1666
  %v1676 = vunpack.c.h.b16 %v1666
  %v1677 = vunpack.c.l.b16 %v1667
  %v1678 = vunpack.c.h.b16 %v1667
  %v1679 = vpack.c.b16 %v1673, %v1673
  %v1680 = vpack.c.b16 %v1674, %v1674
  %v1681 = vpack.c.b16 %v1675, %v1675
  %v1682 = vpack.c.b16 %v1676, %v1676
  %v1683 = vpack.c.b16 %v1677, %v1677
  %v1684 = vpack.c.b16 %v1678, %v1678
  %1685 = vrot.lane.b32.xlu0 %v1679, 18
  %v1686 = vpop.permute.xlu0 %1685
  %1687 = vrot.lane.b32.xlu0 %v1680, 18
  %v1688 = vpop.permute.xlu0 %1687
  %1689 = vrot.lane.b32.xlu0 %v1681, 18
  %v1690 = vpop.permute.xlu0 %1689
  %1691 = vrot.lane.b32.xlu0 %v1682, 18
  %v1692 = vpop.permute.xlu0 %1691
  %1693 = vrot.lane.b32.xlu0 %v1683, 18
  %v1694 = vpop.permute.xlu0 %1693
  %1695 = vrot.lane.b32.xlu0 %v1684, 18
  %v1696 = vpop.permute.xlu0 %1695
  %v1697 = vsel %vm112, %v1686, %v1688
  %v1698 = vsel %vm112, %v1688, %v1690
  %v1699 = vsel %vm112, %v1690, %v1692
  %v1700 = vsel %vm112, %v1692, %v1694
  %v1701 = vsel %vm112, %v1694, %v1696
  %vm1702 = vcmask 64512
  %v1704 = vsel %vm1702, %v1669, 0
  %vm1706 = vcmask 1043456
  %v1708 = vsel %vm1706, %v1697, 0
  %v1711 = vsel %vm1706, %v1698, 0
  %v1714 = vsel %vm1706, %v1699, 0
  %v1717 = vsel %vm1706, %v1700, 0
  %v1720 = vsel %vm1706, %v1701, 0
  %1722 = vmatprep.subr.bf16.mxu0 0
  %1723 = vmatpush1.bf16.msra.mxu0 0
  %1724 = vmatprep.subr.bf16.mxu0 0
  %1725 = vmatpush1.bf16.msra.mxu0 0
  %1726 = vmatprep.subr.bf16.mxu0 0
  %1727 = vmatpush1.bf16.msra.mxu0 0
  %1728 = vmatprep.subr.bf16.mxu0 0
  %1729 = vmatpush1.bf16.msra.mxu0 0
  %1730 = vmatprep.subr.bf16.mxu0 0
  %1731 = vmatpush1.bf16.msra.mxu0 0
  %1732 = vmatprep.subr.bf16.mxu0 0
  %1733 = vmatpush1.bf16.msra.mxu0 0
  %1734 = vmatprep.subr.bf16.mxu0 0
  %1735 = vmatpush1.bf16.msra.mxu0 0
  %1736 = vmatprep.subr.bf16.mxu0 %v1711
  %1737 = vmatpush1.bf16.msra.mxu0 %v1708
  %1738 = vmatprep.subr.bf16.mxu0 0
  %1739 = vmatpush2.bf16.msra.mxu0 0
  %1740 = vmatprep.subr.bf16.mxu0 0
  %1741 = vmatpush2.bf16.msra.mxu0 0
  %1742 = vmatprep.subr.bf16.mxu0 0
  %1743 = vmatpush2.bf16.msra.mxu0 0
  %1744 = vmatprep.subr.bf16.mxu0 0
  %1745 = vmatpush2.bf16.msra.mxu0 0
  %1746 = vmatprep.subr.bf16.mxu0 0
  %1747 = vmatpush2.bf16.msra.mxu0 0
  %1748 = vmatprep.subr.bf16.mxu0 0
  %1749 = vmatpush2.bf16.msra.mxu0 0
  %1750 = vmatprep.subr.bf16.mxu0 0
  %1751 = vmatpush2.bf16.msra.mxu0 0
  %1752 = vmatprep.subr.bf16.mxu0 0
  %1753 = vmatpush2.bf16.msra.mxu0 0
  %1754 = vmatprep.mubr.bf16.mxu0 0
  %1755 = vmatmul.mubr.bf16.gmra.mxu0 %v1704
  %v1756 = vpop.f32.mrf.mxu0
  %v1757 = vadd.f32 0.0, %v1756
  %v1758 = vpop.f32.mrf.mxu0
  %v1759 = vadd.f32 0.0, %v1758
  %v1760 = vpop.f32.mrf.mxu0
  %v1761 = vpop.f32.mrf.mxu0
  %1762 = vdwg.mxu0
  %1763 = vmatprep.subr.bf16.mxu0 0
  %1764 = vmatpush1.bf16.msra.mxu0 0
  %1765 = vmatprep.subr.bf16.mxu0 0
  %1766 = vmatpush1.bf16.msra.mxu0 0
  %1767 = vmatprep.subr.bf16.mxu0 0
  %1768 = vmatpush1.bf16.msra.mxu0 0
  %1769 = vmatprep.subr.bf16.mxu0 0
  %1770 = vmatpush1.bf16.msra.mxu0 0
  %1771 = vmatprep.subr.bf16.mxu0 0
  %1772 = vmatpush1.bf16.msra.mxu0 0
  %1773 = vmatprep.subr.bf16.mxu0 0
  %1774 = vmatpush1.bf16.msra.mxu0 0
  %1775 = vmatprep.subr.bf16.mxu0 0
  %1776 = vmatpush1.bf16.msra.mxu0 0
  %1777 = vmatprep.subr.bf16.mxu0 %v1717
  %1778 = vmatpush1.bf16.msra.mxu0 %v1714
  %1779 = vmatprep.subr.bf16.mxu0 0
  %1780 = vmatpush2.bf16.msra.mxu0 0
  %1781 = vmatprep.subr.bf16.mxu0 0
  %1782 = vmatpush2.bf16.msra.mxu0 0
  %1783 = vmatprep.subr.bf16.mxu0 0
  %1784 = vmatpush2.bf16.msra.mxu0 0
  %1785 = vmatprep.subr.bf16.mxu0 0
  %1786 = vmatpush2.bf16.msra.mxu0 0
  %1787 = vmatprep.subr.bf16.mxu0 0
  %1788 = vmatpush2.bf16.msra.mxu0 0
  %1789 = vmatprep.subr.bf16.mxu0 0
  %1790 = vmatpush2.bf16.msra.mxu0 0
  %1791 = vmatprep.subr.bf16.mxu0 0
  %1792 = vmatpush2.bf16.msra.mxu0 0
  %1793 = vmatprep.subr.bf16.mxu0 0
  %1794 = vmatpush2.bf16.msra.mxu0 0
  %1795 = vmatprep.mubr.bf16.mxu0 0
  %1796 = vmatmul.mubr.bf16.gmra.mxu0 %v1704
  %v1797 = vpop.f32.mrf.mxu0
  %v1798 = vadd.f32 0.0, %v1797
  %v1799 = vpop.f32.mrf.mxu0
  %v1800 = vadd.f32 0.0, %v1799
  %v1801 = vpop.f32.mrf.mxu0
  %v1802 = vpop.f32.mrf.mxu0
  %1803 = vdwg.mxu0
  %1804 = vmatprep.subr.bf16.mxu0 0
  %1805 = vmatpush1.bf16.msra.mxu0 0
  %1806 = vmatprep.subr.bf16.mxu0 0
  %1807 = vmatpush1.bf16.msra.mxu0 0
  %1808 = vmatprep.subr.bf16.mxu0 0
  %1809 = vmatpush1.bf16.msra.mxu0 0
  %1810 = vmatprep.subr.bf16.mxu0 0
  %1811 = vmatpush1.bf16.msra.mxu0 0
  %1812 = vmatprep.subr.bf16.mxu0 0
  %1813 = vmatpush1.bf16.msra.mxu0 0
  %1814 = vmatprep.subr.bf16.mxu0 0
  %1815 = vmatpush1.bf16.msra.mxu0 0
  %1816 = vmatprep.subr.bf16.mxu0 0
  %1817 = vmatpush1.bf16.msra.mxu0 0
  %1818 = vmatprep.subr.bf16.mxu0 0
  %1819 = vmatpush1.bf16.msra.mxu0 %v1720
  %1820 = vmatprep.subr.bf16.mxu0 0
  %1821 = vmatpush2.bf16.msra.mxu0 0
  %1822 = vmatprep.subr.bf16.mxu0 0
  %1823 = vmatpush2.bf16.msra.mxu0 0
  %1824 = vmatprep.subr.bf16.mxu0 0
  %1825 = vmatpush2.bf16.msra.mxu0 0
  %1826 = vmatprep.subr.bf16.mxu0 0
  %1827 = vmatpush2.bf16.msra.mxu0 0
  %1828 = vmatprep.subr.bf16.mxu0 0
  %1829 = vmatpush2.bf16.msra.mxu0 0
  %1830 = vmatprep.subr.bf16.mxu0 0
  %1831 = vmatpush2.bf16.msra.mxu0 0
  %1832 = vmatprep.subr.bf16.mxu0 0
  %1833 = vmatpush2.bf16.msra.mxu0 0
  %1834 = vmatprep.subr.bf16.mxu0 0
  %1835 = vmatpush2.bf16.msra.mxu0 0
  %1836 = vmatprep.mubr.bf16.mxu0 0
  %1837 = vmatmul.mubr.bf16.gmra.mxu0 %v1704
  %v1838 = vpop.f32.mrf.mxu0
  %v1839 = vadd.f32 0.0, %v1838
  %v1840 = vpop.f32.mrf.mxu0
  %v1841 = vpop.f32.mrf.mxu0
  %v1842 = vpop.f32.mrf.mxu0
  %1843 = vdwg.mxu0
  %1844 = vrot.lane.b32.xlu0 %v1679, 19
  %v1845 = vpop.permute.xlu0 %1844
  %1846 = vrot.lane.b32.xlu0 %v1680, 19
  %v1847 = vpop.permute.xlu0 %1846
  %1848 = vrot.lane.b32.xlu0 %v1681, 19
  %v1849 = vpop.permute.xlu0 %1848
  %1850 = vrot.lane.b32.xlu0 %v1682, 19
  %v1851 = vpop.permute.xlu0 %1850
  %1852 = vrot.lane.b32.xlu0 %v1683, 19
  %v1853 = vpop.permute.xlu0 %1852
  %1854 = vrot.lane.b32.xlu0 %v1684, 19
  %v1855 = vpop.permute.xlu0 %1854
  %v1856 = vsel %vm272, %v1845, %v1847
  %v1857 = vsel %vm272, %v1847, %v1849
  %v1858 = vsel %vm272, %v1849, %v1851
  %v1859 = vsel %vm272, %v1851, %v1853
  %v1860 = vsel %vm272, %v1853, %v1855
  %v1862 = vsel %vm1702, %v1664, 0
  %v1865 = vsel %vm1706, %v1856, 0
  %v1868 = vsel %vm1706, %v1857, 0
  %v1871 = vsel %vm1706, %v1858, 0
  %v1874 = vsel %vm1706, %v1859, 0
  %v1877 = vsel %vm1706, %v1860, 0
  %1879 = vmatprep.subr.bf16.mxu0 0
  %1880 = vmatpush1.bf16.msra.mxu0 0
  %1881 = vmatprep.subr.bf16.mxu0 0
  %1882 = vmatpush1.bf16.msra.mxu0 0
  %1883 = vmatprep.subr.bf16.mxu0 0
  %1884 = vmatpush1.bf16.msra.mxu0 0
  %1885 = vmatprep.subr.bf16.mxu0 0
  %1886 = vmatpush1.bf16.msra.mxu0 0
  %1887 = vmatprep.subr.bf16.mxu0 0
  %1888 = vmatpush1.bf16.msra.mxu0 0
  %1889 = vmatprep.subr.bf16.mxu0 0
  %1890 = vmatpush1.bf16.msra.mxu0 0
  %1891 = vmatprep.subr.bf16.mxu0 0
  %1892 = vmatpush1.bf16.msra.mxu0 0
  %1893 = vmatprep.subr.bf16.mxu0 %v1868
  %1894 = vmatpush1.bf16.msra.mxu0 %v1865
  %1895 = vmatprep.subr.bf16.mxu0 0
  %1896 = vmatpush2.bf16.msra.mxu0 0
  %1897 = vmatprep.subr.bf16.mxu0 0
  %1898 = vmatpush2.bf16.msra.mxu0 0
  %1899 = vmatprep.subr.bf16.mxu0 0
  %1900 = vmatpush2.bf16.msra.mxu0 0
  %1901 = vmatprep.subr.bf16.mxu0 0
  %1902 = vmatpush2.bf16.msra.mxu0 0
  %1903 = vmatprep.subr.bf16.mxu0 0
  %1904 = vmatpush2.bf16.msra.mxu0 0
  %1905 = vmatprep.subr.bf16.mxu0 0
  %1906 = vmatpush2.bf16.msra.mxu0 0
  %1907 = vmatprep.subr.bf16.mxu0 0
  %1908 = vmatpush2.bf16.msra.mxu0 0
  %1909 = vmatprep.subr.bf16.mxu0 0
  %1910 = vmatpush2.bf16.msra.mxu0 0
  %1911 = vmatprep.mubr.bf16.mxu0 0
  %1912 = vmatmul.mubr.bf16.gmra.mxu0 %v1862
  %v1913 = vpop.f32.mrf.mxu0
  %v1914 = vadd.f32 %v1757, %v1913
  %v1915 = vpop.f32.mrf.mxu0
  %v1916 = vadd.f32 %v1759, %v1915
  %v1917 = vpop.f32.mrf.mxu0
  %v1918 = vpop.f32.mrf.mxu0
  %1919 = vdwg.mxu0
  %1920 = vmatprep.subr.bf16.mxu0 0
  %1921 = vmatpush1.bf16.msra.mxu0 0
  %1922 = vmatprep.subr.bf16.mxu0 0
  %1923 = vmatpush1.bf16.msra.mxu0 0
  %1924 = vmatprep.subr.bf16.mxu0 0
  %1925 = vmatpush1.bf16.msra.mxu0 0
  %1926 = vmatprep.subr.bf16.mxu0 0
  %1927 = vmatpush1.bf16.msra.mxu0 0
  %1928 = vmatprep.subr.bf16.mxu0 0
  %1929 = vmatpush1.bf16.msra.mxu0 0
  %1930 = vmatprep.subr.bf16.mxu0 0
  %1931 = vmatpush1.bf16.msra.mxu0 0
  %1932 = vmatprep.subr.bf16.mxu0 0
  %1933 = vmatpush1.bf16.msra.mxu0 0
  %1934 = vmatprep.subr.bf16.mxu0 %v1874
  %1935 = vmatpush1.bf16.msra.mxu0 %v1871
  %1936 = vmatprep.subr.bf16.mxu0 0
  %1937 = vmatpush2.bf16.msra.mxu0 0
  %1938 = vmatprep.subr.bf16.mxu0 0
  %1939 = vmatpush2.bf16.msra.mxu0 0
  %1940 = vmatprep.subr.bf16.mxu0 0
  %1941 = vmatpush2.bf16.msra.mxu0 0
  %1942 = vmatprep.subr.bf16.mxu0 0
  %1943 = vmatpush2.bf16.msra.mxu0 0
  %1944 = vmatprep.subr.bf16.mxu0 0
  %1945 = vmatpush2.bf16.msra.mxu0 0
  %1946 = vmatprep.subr.bf16.mxu0 0
  %1947 = vmatpush2.bf16.msra.mxu0 0
  %1948 = vmatprep.subr.bf16.mxu0 0
  %1949 = vmatpush2.bf16.msra.mxu0 0
  %1950 = vmatprep.subr.bf16.mxu0 0
  %1951 = vmatpush2.bf16.msra.mxu0 0
  %1952 = vmatprep.mubr.bf16.mxu0 0
  %1953 = vmatmul.mubr.bf16.gmra.mxu0 %v1862
  %v1954 = vpop.f32.mrf.mxu0
  %v1955 = vadd.f32 %v1798, %v1954
  %v1956 = vpop.f32.mrf.mxu0
  %v1957 = vadd.f32 %v1800, %v1956
  %v1958 = vpop.f32.mrf.mxu0
  %v1959 = vpop.f32.mrf.mxu0
  %1960 = vdwg.mxu0
  %1961 = vmatprep.subr.bf16.mxu0 0
  %1962 = vmatpush1.bf16.msra.mxu0 0
  %1963 = vmatprep.subr.bf16.mxu0 0
  %1964 = vmatpush1.bf16.msra.mxu0 0
  %1965 = vmatprep.subr.bf16.mxu0 0
  %1966 = vmatpush1.bf16.msra.mxu0 0
  %1967 = vmatprep.subr.bf16.mxu0 0
  %1968 = vmatpush1.bf16.msra.mxu0 0
  %1969 = vmatprep.subr.bf16.mxu0 0
  %1970 = vmatpush1.bf16.msra.mxu0 0
  %1971 = vmatprep.subr.bf16.mxu0 0
  %1972 = vmatpush1.bf16.msra.mxu0 0
  %1973 = vmatprep.subr.bf16.mxu0 0
  %1974 = vmatpush1.bf16.msra.mxu0 0
  %1975 = vmatprep.subr.bf16.mxu0 0
  %1976 = vmatpush1.bf16.msra.mxu0 %v1877
  %1977 = vmatprep.subr.bf16.mxu0 0
  %1978 = vmatpush2.bf16.msra.mxu0 0
  %1979 = vmatprep.subr.bf16.mxu0 0
  %1980 = vmatpush2.bf16.msra.mxu0 0
  %1981 = vmatprep.subr.bf16.mxu0 0
  %1982 = vmatpush2.bf16.msra.mxu0 0
  %1983 = vmatprep.subr.bf16.mxu0 0
  %1984 = vmatpush2.bf16.msra.mxu0 0
  %1985 = vmatprep.subr.bf16.mxu0 0
  %1986 = vmatpush2.bf16.msra.mxu0 0
  %1987 = vmatprep.subr.bf16.mxu0 0
  %1988 = vmatpush2.bf16.msra.mxu0 0
  %1989 = vmatprep.subr.bf16.mxu0 0
  %1990 = vmatpush2.bf16.msra.mxu0 0
  %1991 = vmatprep.subr.bf16.mxu0 0
  %1992 = vmatpush2.bf16.msra.mxu0 0
  %1993 = vmatprep.mubr.bf16.mxu0 0
  %1994 = vmatmul.mubr.bf16.gmra.mxu0 %v1862
  %v1995 = vpop.f32.mrf.mxu0
  %v1996 = vadd.f32 %v1839, %v1995
  %v1997 = vpop.f32.mrf.mxu0
  %v1998 = vpop.f32.mrf.mxu0
  %v1999 = vpop.f32.mrf.mxu0
  %2000 = vdwg.mxu0
  %s2001 = scalar_lea.vmem %s2, 22
  %v2002 = vld [vmem:[%s2001] sm:$0x3]
  %2003 = vrot.lane.b32.xlu0 %v1679, 17
  %v2004 = vpop.permute.xlu0 %2003
  %2005 = vrot.lane.b32.xlu0 %v1680, 17
  %v2006 = vpop.permute.xlu0 %2005
  %2007 = vrot.lane.b32.xlu0 %v1681, 17
  %v2008 = vpop.permute.xlu0 %2007
  %2009 = vrot.lane.b32.xlu0 %v1682, 17
  %v2010 = vpop.permute.xlu0 %2009
  %2011 = vrot.lane.b32.xlu0 %v1683, 17
  %v2012 = vpop.permute.xlu0 %2011
  %2013 = vrot.lane.b32.xlu0 %v1684, 17
  %v2014 = vpop.permute.xlu0 %2013
  %v2015 = vsel %vm432, %v2004, %v2006
  %v2016 = vsel %vm432, %v2006, %v2008
  %v2017 = vsel %vm432, %v2008, %v2010
  %v2018 = vsel %vm432, %v2010, %v2012
  %v2019 = vsel %vm432, %v2012, %v2014
  %v2021 = vsel %vm1702, %v2002, 0
  %v2024 = vsel %vm1706, %v2015, 0
  %v2027 = vsel %vm1706, %v2016, 0
  %v2030 = vsel %vm1706, %v2017, 0
  %v2033 = vsel %vm1706, %v2018, 0
  %v2036 = vsel %vm1706, %v2019, 0
  %2038 = vmatprep.subr.bf16.mxu0 0
  %2039 = vmatpush1.bf16.msra.mxu0 0
  %2040 = vmatprep.subr.bf16.mxu0 0
  %2041 = vmatpush1.bf16.msra.mxu0 0
  %2042 = vmatprep.subr.bf16.mxu0 0
  %2043 = vmatpush1.bf16.msra.mxu0 0
  %2044 = vmatprep.subr.bf16.mxu0 0
  %2045 = vmatpush1.bf16.msra.mxu0 0
  %2046 = vmatprep.subr.bf16.mxu0 0
  %2047 = vmatpush1.bf16.msra.mxu0 0
  %2048 = vmatprep.subr.bf16.mxu0 0
  %2049 = vmatpush1.bf16.msra.mxu0 0
  %2050 = vmatprep.subr.bf16.mxu0 0
  %2051 = vmatpush1.bf16.msra.mxu0 0
  %2052 = vmatprep.subr.bf16.mxu0 %v2027
  %2053 = vmatpush1.bf16.msra.mxu0 %v2024
  %2054 = vmatprep.subr.bf16.mxu0 0
  %2055 = vmatpush2.bf16.msra.mxu0 0
  %2056 = vmatprep.subr.bf16.mxu0 0
  %2057 = vmatpush2.bf16.msra.mxu0 0
  %2058 = vmatprep.subr.bf16.mxu0 0
  %2059 = vmatpush2.bf16.msra.mxu0 0
  %2060 = vmatprep.subr.bf16.mxu0 0
  %2061 = vmatpush2.bf16.msra.mxu0 0
  %2062 = vmatprep.subr.bf16.mxu0 0
  %2063 = vmatpush2.bf16.msra.mxu0 0
  %2064 = vmatprep.subr.bf16.mxu0 0
  %2065 = vmatpush2.bf16.msra.mxu0 0
  %2066 = vmatprep.subr.bf16.mxu0 0
  %2067 = vmatpush2.bf16.msra.mxu0 0
  %2068 = vmatprep.subr.bf16.mxu0 0
  %2069 = vmatpush2.bf16.msra.mxu0 0
  %2070 = vmatprep.mubr.bf16.mxu0 0
  %2071 = vmatmul.mubr.bf16.gmra.mxu0 %v2021
  %v2072 = vpop.f32.mrf.mxu0
  %v2073 = vadd.f32 0.0, %v2072
  %v2074 = vpop.f32.mrf.mxu0
  %v2075 = vadd.f32 0.0, %v2074
  %v2076 = vpop.f32.mrf.mxu0
  %v2077 = vpop.f32.mrf.mxu0
  %2078 = vdwg.mxu0
  %2079 = vmatprep.subr.bf16.mxu0 0
  %2080 = vmatpush1.bf16.msra.mxu0 0
  %2081 = vmatprep.subr.bf16.mxu0 0
  %2082 = vmatpush1.bf16.msra.mxu0 0
  %2083 = vmatprep.subr.bf16.mxu0 0
  %2084 = vmatpush1.bf16.msra.mxu0 0
  %2085 = vmatprep.subr.bf16.mxu0 0
  %2086 = vmatpush1.bf16.msra.mxu0 0
  %2087 = vmatprep.subr.bf16.mxu0 0
  %2088 = vmatpush1.bf16.msra.mxu0 0
  %2089 = vmatprep.subr.bf16.mxu0 0
  %2090 = vmatpush1.bf16.msra.mxu0 0
  %2091 = vmatprep.subr.bf16.mxu0 0
  %2092 = vmatpush1.bf16.msra.mxu0 0
  %2093 = vmatprep.subr.bf16.mxu0 %v2033
  %2094 = vmatpush1.bf16.msra.mxu0 %v2030
  %2095 = vmatprep.subr.bf16.mxu0 0
  %2096 = vmatpush2.bf16.msra.mxu0 0
  %2097 = vmatprep.subr.bf16.mxu0 0
  %2098 = vmatpush2.bf16.msra.mxu0 0
  %2099 = vmatprep.subr.bf16.mxu0 0
  %2100 = vmatpush2.bf16.msra.mxu0 0
  %2101 = vmatprep.subr.bf16.mxu0 0
  %2102 = vmatpush2.bf16.msra.mxu0 0
  %2103 = vmatprep.subr.bf16.mxu0 0
  %2104 = vmatpush2.bf16.msra.mxu0 0
  %2105 = vmatprep.subr.bf16.mxu0 0
  %2106 = vmatpush2.bf16.msra.mxu0 0
  %2107 = vmatprep.subr.bf16.mxu0 0
  %2108 = vmatpush2.bf16.msra.mxu0 0
  %2109 = vmatprep.subr.bf16.mxu0 0
  %2110 = vmatpush2.bf16.msra.mxu0 0
  %2111 = vmatprep.mubr.bf16.mxu0 0
  %2112 = vmatmul.mubr.bf16.gmra.mxu0 %v2021
  %v2113 = vpop.f32.mrf.mxu0
  %v2114 = vadd.f32 0.0, %v2113
  %v2115 = vpop.f32.mrf.mxu0
  %v2116 = vadd.f32 0.0, %v2115
  %v2117 = vpop.f32.mrf.mxu0
  %v2118 = vpop.f32.mrf.mxu0
  %2119 = vdwg.mxu0
  %2120 = vmatprep.subr.bf16.mxu0 0
  %2121 = vmatpush1.bf16.msra.mxu0 0
  %2122 = vmatprep.subr.bf16.mxu0 0
  %2123 = vmatpush1.bf16.msra.mxu0 0
  %2124 = vmatprep.subr.bf16.mxu0 0
  %2125 = vmatpush1.bf16.msra.mxu0 0
  %2126 = vmatprep.subr.bf16.mxu0 0
  %2127 = vmatpush1.bf16.msra.mxu0 0
  %2128 = vmatprep.subr.bf16.mxu0 0
  %2129 = vmatpush1.bf16.msra.mxu0 0
  %2130 = vmatprep.subr.bf16.mxu0 0
  %2131 = vmatpush1.bf16.msra.mxu0 0
  %2132 = vmatprep.subr.bf16.mxu0 0
  %2133 = vmatpush1.bf16.msra.mxu0 0
  %2134 = vmatprep.subr.bf16.mxu0 0
  %2135 = vmatpush1.bf16.msra.mxu0 %v2036
  %2136 = vmatprep.subr.bf16.mxu0 0
  %2137 = vmatpush2.bf16.msra.mxu0 0
  %2138 = vmatprep.subr.bf16.mxu0 0
  %2139 = vmatpush2.bf16.msra.mxu0 0
  %2140 = vmatprep.subr.bf16.mxu0 0
  %2141 = vmatpush2.bf16.msra.mxu0 0
  %2142 = vmatprep.subr.bf16.mxu0 0
  %2143 = vmatpush2.bf16.msra.mxu0 0
  %2144 = vmatprep.subr.bf16.mxu0 0
  %2145 = vmatpush2.bf16.msra.mxu0 0
  %2146 = vmatprep.subr.bf16.mxu0 0
  %2147 = vmatpush2.bf16.msra.mxu0 0
  %2148 = vmatprep.subr.bf16.mxu0 0
  %2149 = vmatpush2.bf16.msra.mxu0 0
  %2150 = vmatprep.subr.bf16.mxu0 0
  %2151 = vmatpush2.bf16.msra.mxu0 0
  %2152 = vmatprep.mubr.bf16.mxu0 0
  %2153 = vmatmul.mubr.bf16.gmra.mxu0 %v2021
  %v2154 = vpop.f32.mrf.mxu0
  %v2155 = vadd.f32 0.0, %v2154
  %v2156 = vpop.f32.mrf.mxu0
  %v2157 = vpop.f32.mrf.mxu0
  %v2158 = vpop.f32.mrf.mxu0
  %2159 = vdwg.mxu0
  %v2160 = vadd.f32 %v1914, %v2073
  %v2161 = vadd.f32 %v1916, %v2075
  %v2162 = vadd.f32 %v1955, %v2114
  %v2163 = vadd.f32 %v1957, %v2116
  %v2164 = vadd.f32 %v1996, %v2155
  %s2165 = scalar_lea.vmem %s2, 24
  %v2166 = vld [vmem:[%s2165] sm:$0x3]
  %2167 = vrot.lane.b32.xlu0 %v1679, 1
  %v2168 = vpop.permute.xlu0 %2167
  %2169 = vrot.lane.b32.xlu0 %v1680, 1
  %v2170 = vpop.permute.xlu0 %2169
  %2171 = vrot.lane.b32.xlu0 %v1681, 1
  %v2172 = vpop.permute.xlu0 %2171
  %2173 = vrot.lane.b32.xlu0 %v1682, 1
  %v2174 = vpop.permute.xlu0 %2173
  %2175 = vrot.lane.b32.xlu0 %v1683, 1
  %v2176 = vpop.permute.xlu0 %2175
  %2177 = vrot.lane.b32.xlu0 %v1684, 1
  %v2178 = vpop.permute.xlu0 %2177
  %v2179 = vsel %vm597, %v2168, %v2170
  %v2180 = vsel %vm597, %v2170, %v2172
  %v2181 = vsel %vm597, %v2172, %v2174
  %v2182 = vsel %vm597, %v2174, %v2176
  %v2183 = vsel %vm597, %v2176, %v2178
  %v2185 = vsel %vm1702, %v2166, 0
  %v2188 = vsel %vm1706, %v2179, 0
  %v2191 = vsel %vm1706, %v2180, 0
  %v2194 = vsel %vm1706, %v2181, 0
  %v2197 = vsel %vm1706, %v2182, 0
  %v2200 = vsel %vm1706, %v2183, 0
  %2202 = vmatprep.subr.bf16.mxu0 0
  %2203 = vmatpush1.bf16.msra.mxu0 0
  %2204 = vmatprep.subr.bf16.mxu0 0
  %2205 = vmatpush1.bf16.msra.mxu0 0
  %2206 = vmatprep.subr.bf16.mxu0 0
  %2207 = vmatpush1.bf16.msra.mxu0 0
  %2208 = vmatprep.subr.bf16.mxu0 0
  %2209 = vmatpush1.bf16.msra.mxu0 0
  %2210 = vmatprep.subr.bf16.mxu0 0
  %2211 = vmatpush1.bf16.msra.mxu0 0
  %2212 = vmatprep.subr.bf16.mxu0 0
  %2213 = vmatpush1.bf16.msra.mxu0 0
  %2214 = vmatprep.subr.bf16.mxu0 0
  %2215 = vmatpush1.bf16.msra.mxu0 0
  %2216 = vmatprep.subr.bf16.mxu0 %v2191
  %2217 = vmatpush1.bf16.msra.mxu0 %v2188
  %2218 = vmatprep.subr.bf16.mxu0 0
  %2219 = vmatpush2.bf16.msra.mxu0 0
  %2220 = vmatprep.subr.bf16.mxu0 0
  %2221 = vmatpush2.bf16.msra.mxu0 0
  %2222 = vmatprep.subr.bf16.mxu0 0
  %2223 = vmatpush2.bf16.msra.mxu0 0
  %2224 = vmatprep.subr.bf16.mxu0 0
  %2225 = vmatpush2.bf16.msra.mxu0 0
  %2226 = vmatprep.subr.bf16.mxu0 0
  %2227 = vmatpush2.bf16.msra.mxu0 0
  %2228 = vmatprep.subr.bf16.mxu0 0
  %2229 = vmatpush2.bf16.msra.mxu0 0
  %2230 = vmatprep.subr.bf16.mxu0 0
  %2231 = vmatpush2.bf16.msra.mxu0 0
  %2232 = vmatprep.subr.bf16.mxu0 0
  %2233 = vmatpush2.bf16.msra.mxu0 0
  %2234 = vmatprep.mubr.bf16.mxu0 0
  %2235 = vmatmul.mubr.bf16.gmra.mxu0 %v2185
  %v2236 = vpop.f32.mrf.mxu0
  %v2237 = vadd.f32 0.0, %v2236
  %v2238 = vpop.f32.mrf.mxu0
  %v2239 = vadd.f32 0.0, %v2238
  %v2240 = vpop.f32.mrf.mxu0
  %v2241 = vpop.f32.mrf.mxu0
  %2242 = vdwg.mxu0
  %2243 = vmatprep.subr.bf16.mxu0 0
  %2244 = vmatpush1.bf16.msra.mxu0 0
  %2245 = vmatprep.subr.bf16.mxu0 0
  %2246 = vmatpush1.bf16.msra.mxu0 0
  %2247 = vmatprep.subr.bf16.mxu0 0
  %2248 = vmatpush1.bf16.msra.mxu0 0
  %2249 = vmatprep.subr.bf16.mxu0 0
  %2250 = vmatpush1.bf16.msra.mxu0 0
  %2251 = vmatprep.subr.bf16.mxu0 0
  %2252 = vmatpush1.bf16.msra.mxu0 0
  %2253 = vmatprep.subr.bf16.mxu0 0
  %2254 = vmatpush1.bf16.msra.mxu0 0
  %2255 = vmatprep.subr.bf16.mxu0 0
  %2256 = vmatpush1.bf16.msra.mxu0 0
  %2257 = vmatprep.subr.bf16.mxu0 %v2197
  %2258 = vmatpush1.bf16.msra.mxu0 %v2194
  %2259 = vmatprep.subr.bf16.mxu0 0
  %2260 = vmatpush2.bf16.msra.mxu0 0
  %2261 = vmatprep.subr.bf16.mxu0 0
  %2262 = vmatpush2.bf16.msra.mxu0 0
  %2263 = vmatprep.subr.bf16.mxu0 0
  %2264 = vmatpush2.bf16.msra.mxu0 0
  %2265 = vmatprep.subr.bf16.mxu0 0
  %2266 = vmatpush2.bf16.msra.mxu0 0
  %2267 = vmatprep.subr.bf16.mxu0 0
  %2268 = vmatpush2.bf16.msra.mxu0 0
  %2269 = vmatprep.subr.bf16.mxu0 0
  %2270 = vmatpush2.bf16.msra.mxu0 0
  %2271 = vmatprep.subr.bf16.mxu0 0
  %2272 = vmatpush2.bf16.msra.mxu0 0
  %2273 = vmatprep.subr.bf16.mxu0 0
  %2274 = vmatpush2.bf16.msra.mxu0 0
  %2275 = vmatprep.mubr.bf16.mxu0 0
  %2276 = vmatmul.mubr.bf16.gmra.mxu0 %v2185
  %v2277 = vpop.f32.mrf.mxu0
  %v2278 = vadd.f32 0.0, %v2277
  %v2279 = vpop.f32.mrf.mxu0
  %v2280 = vadd.f32 0.0, %v2279
  %v2281 = vpop.f32.mrf.mxu0
  %v2282 = vpop.f32.mrf.mxu0
  %2283 = vdwg.mxu0
  %2284 = vmatprep.subr.bf16.mxu0 0
  %2285 = vmatpush1.bf16.msra.mxu0 0
  %2286 = vmatprep.subr.bf16.mxu0 0
  %2287 = vmatpush1.bf16.msra.mxu0 0
  %2288 = vmatprep.subr.bf16.mxu0 0
  %2289 = vmatpush1.bf16.msra.mxu0 0
  %2290 = vmatprep.subr.bf16.mxu0 0
  %2291 = vmatpush1.bf16.msra.mxu0 0
  %2292 = vmatprep.subr.bf16.mxu0 0
  %2293 = vmatpush1.bf16.msra.mxu0 0
  %2294 = vmatprep.subr.bf16.mxu0 0
  %2295 = vmatpush1.bf16.msra.mxu0 0
  %2296 = vmatprep.subr.bf16.mxu0 0
  %2297 = vmatpush1.bf16.msra.mxu0 0
  %2298 = vmatprep.subr.bf16.mxu0 0
  %2299 = vmatpush1.bf16.msra.mxu0 %v2200
  %2300 = vmatprep.subr.bf16.mxu0 0
  %2301 = vmatpush2.bf16.msra.mxu0 0
  %2302 = vmatprep.subr.bf16.mxu0 0
  %2303 = vmatpush2.bf16.msra.mxu0 0
  %2304 = vmatprep.subr.bf16.mxu0 0
  %2305 = vmatpush2.bf16.msra.mxu0 0
  %2306 = vmatprep.subr.bf16.mxu0 0
  %2307 = vmatpush2.bf16.msra.mxu0 0
  %2308 = vmatprep.subr.bf16.mxu0 0
  %2309 = vmatpush2.bf16.msra.mxu0 0
  %2310 = vmatprep.subr.bf16.mxu0 0
  %2311 = vmatpush2.bf16.msra.mxu0 0
  %2312 = vmatprep.subr.bf16.mxu0 0
  %2313 = vmatpush2.bf16.msra.mxu0 0
  %2314 = vmatprep.subr.bf16.mxu0 0
  %2315 = vmatpush2.bf16.msra.mxu0 0
  %2316 = vmatprep.mubr.bf16.mxu0 0
  %2317 = vmatmul.mubr.bf16.gmra.mxu0 %v2185
  %v2318 = vpop.f32.mrf.mxu0
  %v2319 = vadd.f32 0.0, %v2318
  %v2320 = vpop.f32.mrf.mxu0
  %v2321 = vpop.f32.mrf.mxu0
  %v2322 = vpop.f32.mrf.mxu0
  %2323 = vdwg.mxu0
  %v2324 = vadd.f32 %v2160, %v2237
  %v2325 = vadd.f32 %v2161, %v2239
  %v2326 = vadd.f32 %v2162, %v2278
  %v2327 = vadd.f32 %v2163, %v2280
  %v2328 = vadd.f32 %v2164, %v2319
  %s2329 = scalar_lea.vmem %s2, 26
  %v2330 = vld [vmem:[%s2329] sm:$0x3]
  %v2331 = vld [vmem:[#allocation2 + $0x4] sm:$0xff]
  %v2332 = vld [vmem:[#allocation2 + $0xc] sm:$0xff]
  %v2333 = vld [vmem:[#allocation2 + $0x14] sm:$0xf]
  %v2337 = vunpack.c.l.b16 %v2331
  %v2338 = vunpack.c.h.b16 %v2331
  %v2339 = vunpack.c.l.b16 %v2332
  %v2340 = vunpack.c.h.b16 %v2332
  %v2341 = vunpack.c.l.b16 %v2333
  %v2342 = vpack.c.b16 %v2337, %v2337
  %v2343 = vpack.c.b16 %v2338, %v2338
  %v2344 = vpack.c.b16 %v2339, %v2339
  %v2345 = vpack.c.b16 %v2340, %v2340
  %v2346 = vpack.c.b16 %v2341, %v2341
  %v2348 = vsel %vm1702, %v2330, 0
  %v2351 = vsel %vm1706, %v2342, 0
  %v2354 = vsel %vm1706, %v2343, 0
  %v2357 = vsel %vm1706, %v2344, 0
  %v2360 = vsel %vm1706, %v2345, 0
  %v2363 = vsel %vm1706, %v2346, 0
  %2365 = vmatprep.subr.bf16.mxu0 0
  %2366 = vmatpush1.bf16.msra.mxu0 0
  %2367 = vmatprep.subr.bf16.mxu0 0
  %2368 = vmatpush1.bf16.msra.mxu0 0
  %2369 = vmatprep.subr.bf16.mxu0 0
  %2370 = vmatpush1.bf16.msra.mxu0 0
  %2371 = vmatprep.subr.bf16.mxu0 0
  %2372 = vmatpush1.bf16.msra.mxu0 0
  %2373 = vmatprep.subr.bf16.mxu0 0
  %2374 = vmatpush1.bf16.msra.mxu0 0
  %2375 = vmatprep.subr.bf16.mxu0 0
  %2376 = vmatpush1.bf16.msra.mxu0 0
  %2377 = vmatprep.subr.bf16.mxu0 0
  %2378 = vmatpush1.bf16.msra.mxu0 0
  %2379 = vmatprep.subr.bf16.mxu0 %v2354
  %2380 = vmatpush1.bf16.msra.mxu0 %v2351
  %2381 = vmatprep.subr.bf16.mxu0 0
  %2382 = vmatpush2.bf16.msra.mxu0 0
  %2383 = vmatprep.subr.bf16.mxu0 0
  %2384 = vmatpush2.bf16.msra.mxu0 0
  %2385 = vmatprep.subr.bf16.mxu0 0
  %2386 = vmatpush2.bf16.msra.mxu0 0
  %2387 = vmatprep.subr.bf16.mxu0 0
  %2388 = vmatpush2.bf16.msra.mxu0 0
  %2389 = vmatprep.subr.bf16.mxu0 0
  %2390 = vmatpush2.bf16.msra.mxu0 0
  %2391 = vmatprep.subr.bf16.mxu0 0
  %2392 = vmatpush2.bf16.msra.mxu0 0
  %2393 = vmatprep.subr.bf16.mxu0 0
  %2394 = vmatpush2.bf16.msra.mxu0 0
  %2395 = vmatprep.subr.bf16.mxu0 0
  %2396 = vmatpush2.bf16.msra.mxu0 0
  %2397 = vmatprep.mubr.bf16.mxu0 0
  %2398 = vmatmul.mubr.bf16.gmra.mxu0 %v2348
  %v2399 = vpop.f32.mrf.mxu0
  %v2400 = vadd.f32 0.0, %v2399
  %v2401 = vpop.f32.mrf.mxu0
  %v2402 = vadd.f32 0.0, %v2401
  %v2403 = vpop.f32.mrf.mxu0
  %v2404 = vpop.f32.mrf.mxu0
  %2405 = vdwg.mxu0
  %2406 = vmatprep.subr.bf16.mxu0 0
  %2407 = vmatpush1.bf16.msra.mxu0 0
  %2408 = vmatprep.subr.bf16.mxu0 0
  %2409 = vmatpush1.bf16.msra.mxu0 0
  %2410 = vmatprep.subr.bf16.mxu0 0
  %2411 = vmatpush1.bf16.msra.mxu0 0
  %2412 = vmatprep.subr.bf16.mxu0 0
  %2413 = vmatpush1.bf16.msra.mxu0 0
  %2414 = vmatprep.subr.bf16.mxu0 0
  %2415 = vmatpush1.bf16.msra.mxu0 0
  %2416 = vmatprep.subr.bf16.mxu0 0
  %2417 = vmatpush1.bf16.msra.mxu0 0
  %2418 = vmatprep.subr.bf16.mxu0 0
  %2419 = vmatpush1.bf16.msra.mxu0 0
  %2420 = vmatprep.subr.bf16.mxu0 %v2360
  %2421 = vmatpush1.bf16.msra.mxu0 %v2357
  %2422 = vmatprep.subr.bf16.mxu0 0
  %2423 = vmatpush2.bf16.msra.mxu0 0
  %2424 = vmatprep.subr.bf16.mxu0 0
  %2425 = vmatpush2.bf16.msra.mxu0 0
  %2426 = vmatprep.subr.bf16.mxu0 0
  %2427 = vmatpush2.bf16.msra.mxu0 0
  %2428 = vmatprep.subr.bf16.mxu0 0
  %2429 = vmatpush2.bf16.msra.mxu0 0
  %2430 = vmatprep.subr.bf16.mxu0 0
  %2431 = vmatpush2.bf16.msra.mxu0 0
  %2432 = vmatprep.subr.bf16.mxu0 0
  %2433 = vmatpush2.bf16.msra.mxu0 0
  %2434 = vmatprep.subr.bf16.mxu0 0
  %2435 = vmatpush2.bf16.msra.mxu0 0
  %2436 = vmatprep.subr.bf16.mxu0 0
  %2437 = vmatpush2.bf16.msra.mxu0 0
  %2438 = vmatprep.mubr.bf16.mxu0 0
  %2439 = vmatmul.mubr.bf16.gmra.mxu0 %v2348
  %v2440 = vpop.f32.mrf.mxu0
  %v2441 = vadd.f32 0.0, %v2440
  %v2442 = vpop.f32.mrf.mxu0
  %v2443 = vadd.f32 0.0, %v2442
  %v2444 = vpop.f32.mrf.mxu0
  %v2445 = vpop.f32.mrf.mxu0
  %2446 = vdwg.mxu0
  %2447 = vmatprep.subr.bf16.mxu0 0
  %2448 = vmatpush1.bf16.msra.mxu0 0
  %2449 = vmatprep.subr.bf16.mxu0 0
  %2450 = vmatpush1.bf16.msra.mxu0 0
  %2451 = vmatprep.subr.bf16.mxu0 0
  %2452 = vmatpush1.bf16.msra.mxu0 0
  %2453 = vmatprep.subr.bf16.mxu0 0
  %2454 = vmatpush1.bf16.msra.mxu0 0
  %2455 = vmatprep.subr.bf16.mxu0 0
  %2456 = vmatpush1.bf16.msra.mxu0 0
  %2457 = vmatprep.subr.bf16.mxu0 0
  %2458 = vmatpush1.bf16.msra.mxu0 0
  %2459 = vmatprep.subr.bf16.mxu0 0
  %2460 = vmatpush1.bf16.msra.mxu0 0
  %2461 = vmatprep.subr.bf16.mxu0 0
  %2462 = vmatpush1.bf16.msra.mxu0 %v2363
  %2463 = vmatprep.subr.bf16.mxu0 0
  %2464 = vmatpush2.bf16.msra.mxu0 0
  %2465 = vmatprep.subr.bf16.mxu0 0
  %2466 = vmatpush2.bf16.msra.mxu0 0
  %2467 = vmatprep.subr.bf16.mxu0 0
  %2468 = vmatpush2.bf16.msra.mxu0 0
  %2469 = vmatprep.subr.bf16.mxu0 0
  %2470 = vmatpush2.bf16.msra.mxu0 0
  %2471 = vmatprep.subr.bf16.mxu0 0
  %2472 = vmatpush2.bf16.msra.mxu0 0
  %2473 = vmatprep.subr.bf16.mxu0 0
  %2474 = vmatpush2.bf16.msra.mxu0 0
  %2475 = vmatprep.subr.bf16.mxu0 0
  %2476 = vmatpush2.bf16.msra.mxu0 0
  %2477 = vmatprep.subr.bf16.mxu0 0
  %2478 = vmatpush2.bf16.msra.mxu0 0
  %2479 = vmatprep.mubr.bf16.mxu0 0
  %2480 = vmatmul.mubr.bf16.gmra.mxu0 %v2348
  %v2481 = vpop.f32.mrf.mxu0
  %v2482 = vadd.f32 0.0, %v2481
  %v2483 = vpop.f32.mrf.mxu0
  %v2484 = vpop.f32.mrf.mxu0
  %v2485 = vpop.f32.mrf.mxu0
  %2486 = vdwg.mxu0
  %v2487 = vadd.f32 %v2324, %v2400
  %v2488 = vadd.f32 %v2325, %v2402
  %v2489 = vadd.f32 %v2326, %v2441
  %v2490 = vadd.f32 %v2327, %v2443
  %v2491 = vadd.f32 %v2328, %v2482
  %s2492 = scalar_lea.vmem %s2, 28
  %v2493 = vld [vmem:[%s2492] sm:$0x3]
  %v2494 = vld [vmem:[#allocation2 + $0x4] sm:$0xff]
  %v2495 = vld [vmem:[#allocation2 + $0xc] sm:$0xff]
  %v2496 = vld [vmem:[#allocation2 + $0x14] sm:$0xff]
  %v2500 = vunpack.c.l.b16 %v2494
  %v2501 = vunpack.c.h.b16 %v2494
  %v2502 = vunpack.c.l.b16 %v2495
  %v2503 = vunpack.c.h.b16 %v2495
  %v2504 = vunpack.c.l.b16 %v2496
  %v2505 = vunpack.c.h.b16 %v2496
  %v2506 = vpack.c.b16 %v2500, %v2500
  %v2507 = vpack.c.b16 %v2501, %v2501
  %v2508 = vpack.c.b16 %v2502, %v2502
  %v2509 = vpack.c.b16 %v2503, %v2503
  %v2510 = vpack.c.b16 %v2504, %v2504
  %v2511 = vpack.c.b16 %v2505, %v2505
  %2512 = vrot.lane.b32.xlu0 %v2506, 127
  %v2513 = vpop.permute.xlu0 %2512
  %2514 = vrot.lane.b32.xlu0 %v2507, 127
  %v2515 = vpop.permute.xlu0 %2514
  %2516 = vrot.lane.b32.xlu0 %v2508, 127
  %v2517 = vpop.permute.xlu0 %2516
  %2518 = vrot.lane.b32.xlu0 %v2509, 127
  %v2519 = vpop.permute.xlu0 %2518
  %2520 = vrot.lane.b32.xlu0 %v2510, 127
  %v2521 = vpop.permute.xlu0 %2520
  %2522 = vrot.lane.b32.xlu0 %v2511, 127
  %v2523 = vpop.permute.xlu0 %2522
  %v2524 = vsel %vm943, %v2513, %v2515
  %v2525 = vsel %vm943, %v2515, %v2517
  %v2526 = vsel %vm943, %v2517, %v2519
  %v2527 = vsel %vm943, %v2519, %v2521
  %v2528 = vsel %vm943, %v2521, %v2523
  %v2530 = vsel %vm1702, %v2493, 0
  %v2533 = vsel %vm1706, %v2524, 0
  %v2536 = vsel %vm1706, %v2525, 0
  %v2539 = vsel %vm1706, %v2526, 0
  %v2542 = vsel %vm1706, %v2527, 0
  %v2545 = vsel %vm1706, %v2528, 0
  %2547 = vmatprep.subr.bf16.mxu0 0
  %2548 = vmatpush1.bf16.msra.mxu0 0
  %2549 = vmatprep.subr.bf16.mxu0 0
  %2550 = vmatpush1.bf16.msra.mxu0 0
  %2551 = vmatprep.subr.bf16.mxu0 0
  %2552 = vmatpush1.bf16.msra.mxu0 0
  %2553 = vmatprep.subr.bf16.mxu0 0
  %2554 = vmatpush1.bf16.msra.mxu0 0
  %2555 = vmatprep.subr.bf16.mxu0 0
  %2556 = vmatpush1.bf16.msra.mxu0 0
  %2557 = vmatprep.subr.bf16.mxu0 0
  %2558 = vmatpush1.bf16.msra.mxu0 0
  %2559 = vmatprep.subr.bf16.mxu0 0
  %2560 = vmatpush1.bf16.msra.mxu0 0
  %2561 = vmatprep.subr.bf16.mxu0 %v2536
  %2562 = vmatpush1.bf16.msra.mxu0 %v2533
  %2563 = vmatprep.subr.bf16.mxu0 0
  %2564 = vmatpush2.bf16.msra.mxu0 0
  %2565 = vmatprep.subr.bf16.mxu0 0
  %2566 = vmatpush2.bf16.msra.mxu0 0
  %2567 = vmatprep.subr.bf16.mxu0 0
  %2568 = vmatpush2.bf16.msra.mxu0 0
  %2569 = vmatprep.subr.bf16.mxu0 0
  %2570 = vmatpush2.bf16.msra.mxu0 0
  %2571 = vmatprep.subr.bf16.mxu0 0
  %2572 = vmatpush2.bf16.msra.mxu0 0
  %2573 = vmatprep.subr.bf16.mxu0 0
  %2574 = vmatpush2.bf16.msra.mxu0 0
  %2575 = vmatprep.subr.bf16.mxu0 0
  %2576 = vmatpush2.bf16.msra.mxu0 0
  %2577 = vmatprep.subr.bf16.mxu0 0
  %2578 = vmatpush2.bf16.msra.mxu0 0
  %2579 = vmatprep.mubr.bf16.mxu0 0
  %2580 = vmatmul.mubr.bf16.gmra.mxu0 %v2530
  %v2581 = vpop.f32.mrf.mxu0
  %v2582 = vadd.f32 0.0, %v2581
  %v2583 = vpop.f32.mrf.mxu0
  %v2584 = vadd.f32 0.0, %v2583
  %v2585 = vpop.f32.mrf.mxu0
  %v2586 = vpop.f32.mrf.mxu0
  %2587 = vdwg.mxu0
  %2588 = vmatprep.subr.bf16.mxu0 0
  %2589 = vmatpush1.bf16.msra.mxu0 0
  %2590 = vmatprep.subr.bf16.mxu0 0
  %2591 = vmatpush1.bf16.msra.mxu0 0
  %2592 = vmatprep.subr.bf16.mxu0 0
  %2593 = vmatpush1.bf16.msra.mxu0 0
  %2594 = vmatprep.subr.bf16.mxu0 0
  %2595 = vmatpush1.bf16.msra.mxu0 0
  %2596 = vmatprep.subr.bf16.mxu0 0
  %2597 = vmatpush1.bf16.msra.mxu0 0
  %2598 = vmatprep.subr.bf16.mxu0 0
  %2599 = vmatpush1.bf16.msra.mxu0 0
  %2600 = vmatprep.subr.bf16.mxu0 0
  %2601 = vmatpush1.bf16.msra.mxu0 0
  %2602 = vmatprep.subr.bf16.mxu0 %v2542
  %2603 = vmatpush1.bf16.msra.mxu0 %v2539
  %2604 = vmatprep.subr.bf16.mxu0 0
  %2605 = vmatpush2.bf16.msra.mxu0 0
  %2606 = vmatprep.subr.bf16.mxu0 0
  %2607 = vmatpush2.bf16.msra.mxu0 0
  %2608 = vmatprep.subr.bf16.mxu0 0
  %2609 = vmatpush2.bf16.msra.mxu0 0
  %2610 = vmatprep.subr.bf16.mxu0 0
  %2611 = vmatpush2.bf16.msra.mxu0 0
  %2612 = vmatprep.subr.bf16.mxu0 0
  %2613 = vmatpush2.bf16.msra.mxu0 0
  %2614 = vmatprep.subr.bf16.mxu0 0
  %2615 = vmatpush2.bf16.msra.mxu0 0
  %2616 = vmatprep.subr.bf16.mxu0 0
  %2617 = vmatpush2.bf16.msra.mxu0 0
  %2618 = vmatprep.subr.bf16.mxu0 0
  %2619 = vmatpush2.bf16.msra.mxu0 0
  %2620 = vmatprep.mubr.bf16.mxu0 0
  %2621 = vmatmul.mubr.bf16.gmra.mxu0 %v2530
  %v2622 = vpop.f32.mrf.mxu0
  %v2623 = vadd.f32 0.0, %v2622
  %v2624 = vpop.f32.mrf.mxu0
  %v2625 = vadd.f32 0.0, %v2624
  %v2626 = vpop.f32.mrf.mxu0
  %v2627 = vpop.f32.mrf.mxu0
  %2628 = vdwg.mxu0
  %2629 = vmatprep.subr.bf16.mxu0 0
  %2630 = vmatpush1.bf16.msra.mxu0 0
  %2631 = vmatprep.subr.bf16.mxu0 0
  %2632 = vmatpush1.bf16.msra.mxu0 0
  %2633 = vmatprep.subr.bf16.mxu0 0
  %2634 = vmatpush1.bf16.msra.mxu0 0
  %2635 = vmatprep.subr.bf16.mxu0 0
  %2636 = vmatpush1.bf16.msra.mxu0 0
  %2637 = vmatprep.subr.bf16.mxu0 0
  %2638 = vmatpush1.bf16.msra.mxu0 0
  %2639 = vmatprep.subr.bf16.mxu0 0
  %2640 = vmatpush1.bf16.msra.mxu0 0
  %2641 = vmatprep.subr.bf16.mxu0 0
  %2642 = vmatpush1.bf16.msra.mxu0 0
  %2643 = vmatprep.subr.bf16.mxu0 0
  %2644 = vmatpush1.bf16.msra.mxu0 %v2545
  %2645 = vmatprep.subr.bf16.mxu0 0
  %2646 = vmatpush2.bf16.msra.mxu0 0
  %2647 = vmatprep.subr.bf16.mxu0 0
  %2648 = vmatpush2.bf16.msra.mxu0 0
  %2649 = vmatprep.subr.bf16.mxu0 0
  %2650 = vmatpush2.bf16.msra.mxu0 0
  %2651 = vmatprep.subr.bf16.mxu0 0
  %2652 = vmatpush2.bf16.msra.mxu0 0
  %2653 = vmatprep.subr.bf16.mxu0 0
  %2654 = vmatpush2.bf16.msra.mxu0 0
  %2655 = vmatprep.subr.bf16.mxu0 0
  %2656 = vmatpush2.bf16.msra.mxu0 0
  %2657 = vmatprep.subr.bf16.mxu0 0
  %2658 = vmatpush2.bf16.msra.mxu0 0
  %2659 = vmatprep.subr.bf16.mxu0 0
  %2660 = vmatpush2.bf16.msra.mxu0 0
  %2661 = vmatprep.mubr.bf16.mxu0 0
  %2662 = vmatmul.mubr.bf16.gmra.mxu0 %v2530
  %v2663 = vpop.f32.mrf.mxu0
  %v2664 = vadd.f32 0.0, %v2663
  %v2665 = vpop.f32.mrf.mxu0
  %v2666 = vpop.f32.mrf.mxu0
  %v2667 = vpop.f32.mrf.mxu0
  %2668 = vdwg.mxu0
  %v2669 = vadd.f32 %v2487, %v2582
  %v2670 = vadd.f32 %v2488, %v2584
  %v2671 = vadd.f32 %v2489, %v2623
  %v2672 = vadd.f32 %v2490, %v2625
  %v2673 = vadd.f32 %v2491, %v2664
  %s2674 = scalar_lea.vmem %s2, 30
  %v2675 = vld [vmem:[%s2674] sm:$0x3]
  %2676 = vrot.lane.b32.xlu0 %v2506, 111
  %v2677 = vpop.permute.xlu0 %2676
  %2678 = vrot.lane.b32.xlu0 %v2507, 111
  %v2679 = vpop.permute.xlu0 %2678
  %2680 = vrot.lane.b32.xlu0 %v2508, 111
  %v2681 = vpop.permute.xlu0 %2680
  %2682 = vrot.lane.b32.xlu0 %v2509, 111
  %v2683 = vpop.permute.xlu0 %2682
  %2684 = vrot.lane.b32.xlu0 %v2510, 111
  %v2685 = vpop.permute.xlu0 %2684
  %2686 = vrot.lane.b32.xlu0 %v2511, 111
  %v2687 = vpop.permute.xlu0 %2686
  %v2688 = vsel %vm1108, %v2677, %v2679
  %v2689 = vsel %vm1108, %v2679, %v2681
  %v2690 = vsel %vm1108, %v2681, %v2683
  %v2691 = vsel %vm1108, %v2683, %v2685
  %v2692 = vsel %vm1108, %v2685, %v2687
  %v2694 = vsel %vm1702, %v2675, 0
  %v2697 = vsel %vm1706, %v2688, 0
  %v2700 = vsel %vm1706, %v2689, 0
  %v2703 = vsel %vm1706, %v2690, 0
  %v2706 = vsel %vm1706, %v2691, 0
  %v2709 = vsel %vm1706, %v2692, 0
  %2711 = vmatprep.subr.bf16.mxu0 0
  %2712 = vmatpush1.bf16.msra.mxu0 0
  %2713 = vmatprep.subr.bf16.mxu0 0
  %2714 = vmatpush1.bf16.msra.mxu0 0
  %2715 = vmatprep.subr.bf16.mxu0 0
  %2716 = vmatpush1.bf16.msra.mxu0 0
  %2717 = vmatprep.subr.bf16.mxu0 0
  %2718 = vmatpush1.bf16.msra.mxu0 0
  %2719 = vmatprep.subr.bf16.mxu0 0
  %2720 = vmatpush1.bf16.msra.mxu0 0
  %2721 = vmatprep.subr.bf16.mxu0 0
  %2722 = vmatpush1.bf16.msra.mxu0 0
  %2723 = vmatprep.subr.bf16.mxu0 0
  %2724 = vmatpush1.bf16.msra.mxu0 0
  %2725 = vmatprep.subr.bf16.mxu0 %v2700
  %2726 = vmatpush1.bf16.msra.mxu0 %v2697
  %2727 = vmatprep.subr.bf16.mxu0 0
  %2728 = vmatpush2.bf16.msra.mxu0 0
  %2729 = vmatprep.subr.bf16.mxu0 0
  %2730 = vmatpush2.bf16.msra.mxu0 0
  %2731 = vmatprep.subr.bf16.mxu0 0
  %2732 = vmatpush2.bf16.msra.mxu0 0
  %2733 = vmatprep.subr.bf16.mxu0 0
  %2734 = vmatpush2.bf16.msra.mxu0 0
  %2735 = vmatprep.subr.bf16.mxu0 0
  %2736 = vmatpush2.bf16.msra.mxu0 0
  %2737 = vmatprep.subr.bf16.mxu0 0
  %2738 = vmatpush2.bf16.msra.mxu0 0
  %2739 = vmatprep.subr.bf16.mxu0 0
  %2740 = vmatpush2.bf16.msra.mxu0 0
  %2741 = vmatprep.subr.bf16.mxu0 0
  %2742 = vmatpush2.bf16.msra.mxu0 0
  %2743 = vmatprep.mubr.bf16.mxu0 0
  %2744 = vmatmul.mubr.bf16.gmra.mxu0 %v2694
  %v2745 = vpop.f32.mrf.mxu0
  %v2746 = vadd.f32 0.0, %v2745
  %v2747 = vpop.f32.mrf.mxu0
  %v2748 = vadd.f32 0.0, %v2747
  %v2749 = vpop.f32.mrf.mxu0
  %v2750 = vpop.f32.mrf.mxu0
  %2751 = vdwg.mxu0
  %2752 = vmatprep.subr.bf16.mxu0 0
  %2753 = vmatpush1.bf16.msra.mxu0 0
  %2754 = vmatprep.subr.bf16.mxu0 0
  %2755 = vmatpush1.bf16.msra.mxu0 0
  %2756 = vmatprep.subr.bf16.mxu0 0
  %2757 = vmatpush1.bf16.msra.mxu0 0
  %2758 = vmatprep.subr.bf16.mxu0 0
  %2759 = vmatpush1.bf16.msra.mxu0 0
  %2760 = vmatprep.subr.bf16.mxu0 0
  %2761 = vmatpush1.bf16.msra.mxu0 0
  %2762 = vmatprep.subr.bf16.mxu0 0
  %2763 = vmatpush1.bf16.msra.mxu0 0
  %2764 = vmatprep.subr.bf16.mxu0 0
  %2765 = vmatpush1.bf16.msra.mxu0 0
  %2766 = vmatprep.subr.bf16.mxu0 %v2706
  %2767 = vmatpush1.bf16.msra.mxu0 %v2703
  %2768 = vmatprep.subr.bf16.mxu0 0
  %2769 = vmatpush2.bf16.msra.mxu0 0
  %2770 = vmatprep.subr.bf16.mxu0 0
  %2771 = vmatpush2.bf16.msra.mxu0 0
  %2772 = vmatprep.subr.bf16.mxu0 0
  %2773 = vmatpush2.bf16.msra.mxu0 0
  %2774 = vmatprep.subr.bf16.mxu0 0
  %2775 = vmatpush2.bf16.msra.mxu0 0
  %2776 = vmatprep.subr.bf16.mxu0 0
  %2777 = vmatpush2.bf16.msra.mxu0 0
  %2778 = vmatprep.subr.bf16.mxu0 0
  %2779 = vmatpush2.bf16.msra.mxu0 0
  %2780 = vmatprep.subr.bf16.mxu0 0
  %2781 = vmatpush2.bf16.msra.mxu0 0
  %2782 = vmatprep.subr.bf16.mxu0 0
  %2783 = vmatpush2.bf16.msra.mxu0 0
  %2784 = vmatprep.mubr.bf16.mxu0 0
  %2785 = vmatmul.mubr.bf16.gmra.mxu0 %v2694
  %v2786 = vpop.f32.mrf.mxu0
  %v2787 = vadd.f32 0.0, %v2786
  %v2788 = vpop.f32.mrf.mxu0
  %v2789 = vadd.f32 0.0, %v2788
  %v2790 = vpop.f32.mrf.mxu0
  %v2791 = vpop.f32.mrf.mxu0
  %2792 = vdwg.mxu0
  %2793 = vmatprep.subr.bf16.mxu0 0
  %2794 = vmatpush1.bf16.msra.mxu0 0
  %2795 = vmatprep.subr.bf16.mxu0 0
  %2796 = vmatpush1.bf16.msra.mxu0 0
  %2797 = vmatprep.subr.bf16.mxu0 0
  %2798 = vmatpush1.bf16.msra.mxu0 0
  %2799 = vmatprep.subr.bf16.mxu0 0
  %2800 = vmatpush1.bf16.msra.mxu0 0
  %2801 = vmatprep.subr.bf16.mxu0 0
  %2802 = vmatpush1.bf16.msra.mxu0 0
  %2803 = vmatprep.subr.bf16.mxu0 0
  %2804 = vmatpush1.bf16.msra.mxu0 0
  %2805 = vmatprep.subr.bf16.mxu0 0
  %2806 = vmatpush1.bf16.msra.mxu0 0
  %2807 = vmatprep.subr.bf16.mxu0 0
  %2808 = vmatpush1.bf16.msra.mxu0 %v2709
  %2809 = vmatprep.subr.bf16.mxu0 0
  %2810 = vmatpush2.bf16.msra.mxu0 0
  %2811 = vmatprep.subr.bf16.mxu0 0
  %2812 = vmatpush2.bf16.msra.mxu0 0
  %2813 = vmatprep.subr.bf16.mxu0 0
  %2814 = vmatpush2.bf16.msra.mxu0 0
  %2815 = vmatprep.subr.bf16.mxu0 0
  %2816 = vmatpush2.bf16.msra.mxu0 0
  %2817 = vmatprep.subr.bf16.mxu0 0
  %2818 = vmatpush2.bf16.msra.mxu0 0
  %2819 = vmatprep.subr.bf16.mxu0 0
  %2820 = vmatpush2.bf16.msra.mxu0 0
  %2821 = vmatprep.subr.bf16.mxu0 0
  %2822 = vmatpush2.bf16.msra.mxu0 0
  %2823 = vmatprep.subr.bf16.mxu0 0
  %2824 = vmatpush2.bf16.msra.mxu0 0
  %2825 = vmatprep.mubr.bf16.mxu0 0
  %2826 = vmatmul.mubr.bf16.gmra.mxu0 %v2694
  %v2827 = vpop.f32.mrf.mxu0
  %v2828 = vadd.f32 0.0, %v2827
  %v2829 = vpop.f32.mrf.mxu0
  %v2830 = vpop.f32.mrf.mxu0
  %v2831 = vpop.f32.mrf.mxu0
  %2832 = vdwg.mxu0
  %v2833 = vadd.f32 %v2669, %v2746
  %v2834 = vadd.f32 %v2670, %v2748
  %v2835 = vadd.f32 %v2671, %v2787
  %v2836 = vadd.f32 %v2672, %v2789
  %v2837 = vadd.f32 %v2673, %v2828
  %s2838 = scalar_lea.vmem %s2, 32
  %v2839 = vld [vmem:[%s2838] sm:$0x3]
  %2840 = vrot.lane.b32.xlu0 %v2506, 110
  %v2841 = vpop.permute.xlu0 %2840
  %2842 = vrot.lane.b32.xlu0 %v2507, 110
  %v2843 = vpop.permute.xlu0 %2842
  %2844 = vrot.lane.b32.xlu0 %v2508, 110
  %v2845 = vpop.permute.xlu0 %2844
  %2846 = vrot.lane.b32.xlu0 %v2509, 110
  %v2847 = vpop.permute.xlu0 %2846
  %2848 = vrot.lane.b32.xlu0 %v2510, 110
  %v2849 = vpop.permute.xlu0 %2848
  %2850 = vrot.lane.b32.xlu0 %v2511, 110
  %v2851 = vpop.permute.xlu0 %2850
  %v2852 = vsel %vm1273, %v2841, %v2843
  %v2853 = vsel %vm1273, %v2843, %v2845
  %v2854 = vsel %vm1273, %v2845, %v2847
  %v2855 = vsel %vm1273, %v2847, %v2849
  %v2856 = vsel %vm1273, %v2849, %v2851
  %v2858 = vsel %vm1702, %v2839, 0
  %v2861 = vsel %vm1706, %v2852, 0
  %v2864 = vsel %vm1706, %v2853, 0
  %v2867 = vsel %vm1706, %v2854, 0
  %v2870 = vsel %vm1706, %v2855, 0
  %v2873 = vsel %vm1706, %v2856, 0
  %2875 = vmatprep.subr.bf16.mxu0 0
  %2876 = vmatpush1.bf16.msra.mxu0 0
  %2877 = vmatprep.subr.bf16.mxu0 0
  %2878 = vmatpush1.bf16.msra.mxu0 0
  %2879 = vmatprep.subr.bf16.mxu0 0
  %2880 = vmatpush1.bf16.msra.mxu0 0
  %2881 = vmatprep.subr.bf16.mxu0 0
  %2882 = vmatpush1.bf16.msra.mxu0 0
  %2883 = vmatprep.subr.bf16.mxu0 0
  %2884 = vmatpush1.bf16.msra.mxu0 0
  %2885 = vmatprep.subr.bf16.mxu0 0
  %2886 = vmatpush1.bf16.msra.mxu0 0
  %2887 = vmatprep.subr.bf16.mxu0 0
  %2888 = vmatpush1.bf16.msra.mxu0 0
  %2889 = vmatprep.subr.bf16.mxu0 %v2864
  %2890 = vmatpush1.bf16.msra.mxu0 %v2861
  %2891 = vmatprep.subr.bf16.mxu0 0
  %2892 = vmatpush2.bf16.msra.mxu0 0
  %2893 = vmatprep.subr.bf16.mxu0 0
  %2894 = vmatpush2.bf16.msra.mxu0 0
  %2895 = vmatprep.subr.bf16.mxu0 0
  %2896 = vmatpush2.bf16.msra.mxu0 0
  %2897 = vmatprep.subr.bf16.mxu0 0
  %2898 = vmatpush2.bf16.msra.mxu0 0
  %2899 = vmatprep.subr.bf16.mxu0 0
  %2900 = vmatpush2.bf16.msra.mxu0 0
  %2901 = vmatprep.subr.bf16.mxu0 0
  %2902 = vmatpush2.bf16.msra.mxu0 0
  %2903 = vmatprep.subr.bf16.mxu0 0
  %2904 = vmatpush2.bf16.msra.mxu0 0
  %2905 = vmatprep.subr.bf16.mxu0 0
  %2906 = vmatpush2.bf16.msra.mxu0 0
  %2907 = vmatprep.mubr.bf16.mxu0 0
  %2908 = vmatmul.mubr.bf16.gmra.mxu0 %v2858
  %v2909 = vpop.f32.mrf.mxu0
  %v2910 = vadd.f32 0.0, %v2909
  %v2911 = vpop.f32.mrf.mxu0
  %v2912 = vadd.f32 0.0, %v2911
  %v2913 = vpop.f32.mrf.mxu0
  %v2914 = vpop.f32.mrf.mxu0
  %2915 = vdwg.mxu0
  %2916 = vmatprep.subr.bf16.mxu0 0
  %2917 = vmatpush1.bf16.msra.mxu0 0
  %2918 = vmatprep.subr.bf16.mxu0 0
  %2919 = vmatpush1.bf16.msra.mxu0 0
  %2920 = vmatprep.subr.bf16.mxu0 0
  %2921 = vmatpush1.bf16.msra.mxu0 0
  %2922 = vmatprep.subr.bf16.mxu0 0
  %2923 = vmatpush1.bf16.msra.mxu0 0
  %2924 = vmatprep.subr.bf16.mxu0 0
  %2925 = vmatpush1.bf16.msra.mxu0 0
  %2926 = vmatprep.subr.bf16.mxu0 0
  %2927 = vmatpush1.bf16.msra.mxu0 0
  %2928 = vmatprep.subr.bf16.mxu0 0
  %2929 = vmatpush1.bf16.msra.mxu0 0
  %2930 = vmatprep.subr.bf16.mxu0 %v2870
  %2931 = vmatpush1.bf16.msra.mxu0 %v2867
  %2932 = vmatprep.subr.bf16.mxu0 0
  %2933 = vmatpush2.bf16.msra.mxu0 0
  %2934 = vmatprep.subr.bf16.mxu0 0
  %2935 = vmatpush2.bf16.msra.mxu0 0
  %2936 = vmatprep.subr.bf16.mxu0 0
  %2937 = vmatpush2.bf16.msra.mxu0 0
  %2938 = vmatprep.subr.bf16.mxu0 0
  %2939 = vmatpush2.bf16.msra.mxu0 0
  %2940 = vmatprep.subr.bf16.mxu0 0
  %2941 = vmatpush2.bf16.msra.mxu0 0
  %2942 = vmatprep.subr.bf16.mxu0 0
  %2943 = vmatpush2.bf16.msra.mxu0 0
  %2944 = vmatprep.subr.bf16.mxu0 0
  %2945 = vmatpush2.bf16.msra.mxu0 0
  %2946 = vmatprep.subr.bf16.mxu0 0
  %2947 = vmatpush2.bf16.msra.mxu0 0
  %2948 = vmatprep.mubr.bf16.mxu0 0
  %2949 = vmatmul.mubr.bf16.gmra.mxu0 %v2858
  %v2950 = vpop.f32.mrf.mxu0
  %v2951 = vadd.f32 0.0, %v2950
  %v2952 = vpop.f32.mrf.mxu0
  %v2953 = vadd.f32 0.0, %v2952
  %v2954 = vpop.f32.mrf.mxu0
  %v2955 = vpop.f32.mrf.mxu0
  %2956 = vdwg.mxu0
  %2957 = vmatprep.subr.bf16.mxu0 0
  %2958 = vmatpush1.bf16.msra.mxu0 0
  %2959 = vmatprep.subr.bf16.mxu0 0
  %2960 = vmatpush1.bf16.msra.mxu0 0
  %2961 = vmatprep.subr.bf16.mxu0 0
  %2962 = vmatpush1.bf16.msra.mxu0 0
  %2963 = vmatprep.subr.bf16.mxu0 0
  %2964 = vmatpush1.bf16.msra.mxu0 0
  %2965 = vmatprep.subr.bf16.mxu0 0
  %2966 = vmatpush1.bf16.msra.mxu0 0
  %2967 = vmatprep.subr.bf16.mxu0 0
  %2968 = vmatpush1.bf16.msra.mxu0 0
  %2969 = vmatprep.subr.bf16.mxu0 0
  %2970 = vmatpush1.bf16.msra.mxu0 0
  %2971 = vmatprep.subr.bf16.mxu0 0
  %2972 = vmatpush1.bf16.msra.mxu0 %v2873
  %2973 = vmatprep.subr.bf16.mxu0 0
  %2974 = vmatpush2.bf16.msra.mxu0 0
  %2975 = vmatprep.subr.bf16.mxu0 0
  %2976 = vmatpush2.bf16.msra.mxu0 0
  %2977 = vmatprep.subr.bf16.mxu0 0
  %2978 = vmatpush2.bf16.msra.mxu0 0
  %2979 = vmatprep.subr.bf16.mxu0 0
  %2980 = vmatpush2.bf16.msra.mxu0 0
  %2981 = vmatprep.subr.bf16.mxu0 0
  %2982 = vmatpush2.bf16.msra.mxu0 0
  %2983 = vmatprep.subr.bf16.mxu0 0
  %2984 = vmatpush2.bf16.msra.mxu0 0
  %2985 = vmatprep.subr.bf16.mxu0 0
  %2986 = vmatpush2.bf16.msra.mxu0 0
  %2987 = vmatprep.subr.bf16.mxu0 0
  %2988 = vmatpush2.bf16.msra.mxu0 0
  %2989 = vmatprep.mubr.bf16.mxu0 0
  %2990 = vmatmul.mubr.bf16.gmra.mxu0 %v2858
  %v2991 = vpop.f32.mrf.mxu0
  %v2992 = vadd.f32 0.0, %v2991
  %v2993 = vpop.f32.mrf.mxu0
  %v2994 = vpop.f32.mrf.mxu0
  %v2995 = vpop.f32.mrf.mxu0
  %2996 = vdwg.mxu0
  %v2997 = vadd.f32 %v2833, %v2910
  %v2998 = vadd.f32 %v2834, %v2912
  %v2999 = vadd.f32 %v2835, %v2951
  %v3000 = vadd.f32 %v2836, %v2953
  %v3001 = vadd.f32 %v2837, %v2992
  %s3002 = scalar_lea.vmem %s2, 34
  %v3003 = vld [vmem:[%s3002] sm:$0x3]
  %3004 = vrot.lane.b32.xlu0 %v2506, 109
  %v3005 = vpop.permute.xlu0 %3004
  %3006 = vrot.lane.b32.xlu0 %v2507, 109
  %v3007 = vpop.permute.xlu0 %3006
  %3008 = vrot.lane.b32.xlu0 %v2508, 109
  %v3009 = vpop.permute.xlu0 %3008
  %3010 = vrot.lane.b32.xlu0 %v2509, 109
  %v3011 = vpop.permute.xlu0 %3010
  %3012 = vrot.lane.b32.xlu0 %v2510, 109
  %v3013 = vpop.permute.xlu0 %3012
  %3014 = vrot.lane.b32.xlu0 %v2511, 109
  %v3015 = vpop.permute.xlu0 %3014
  %v3016 = vsel %vm1438, %v3005, %v3007
  %v3017 = vsel %vm1438, %v3007, %v3009
  %v3018 = vsel %vm1438, %v3009, %v3011
  %v3019 = vsel %vm1438, %v3011, %v3013
  %v3020 = vsel %vm1438, %v3013, %v3015
  %v3022 = vsel %vm1702, %v3003, 0
  %v3025 = vsel %vm1706, %v3016, 0
  %v3028 = vsel %vm1706, %v3017, 0
  %v3031 = vsel %vm1706, %v3018, 0
  %v3034 = vsel %vm1706, %v3019, 0
  %v3037 = vsel %vm1706, %v3020, 0
  %3039 = vmatprep.subr.bf16.mxu0 0
  %3040 = vmatpush1.bf16.msra.mxu0 0
  %3041 = vmatprep.subr.bf16.mxu0 0
  %3042 = vmatpush1.bf16.msra.mxu0 0
  %3043 = vmatprep.subr.bf16.mxu0 0
  %3044 = vmatpush1.bf16.msra.mxu0 0
  %3045 = vmatprep.subr.bf16.mxu0 0
  %3046 = vmatpush1.bf16.msra.mxu0 0
  %3047 = vmatprep.subr.bf16.mxu0 0
  %3048 = vmatpush1.bf16.msra.mxu0 0
  %3049 = vmatprep.subr.bf16.mxu0 0
  %3050 = vmatpush1.bf16.msra.mxu0 0
  %3051 = vmatprep.subr.bf16.mxu0 0
  %3052 = vmatpush1.bf16.msra.mxu0 0
  %3053 = vmatprep.subr.bf16.mxu0 %v3028
  %3054 = vmatpush1.bf16.msra.mxu0 %v3025
  %3055 = vmatprep.subr.bf16.mxu0 0
  %3056 = vmatpush2.bf16.msra.mxu0 0
  %3057 = vmatprep.subr.bf16.mxu0 0
  %3058 = vmatpush2.bf16.msra.mxu0 0
  %3059 = vmatprep.subr.bf16.mxu0 0
  %3060 = vmatpush2.bf16.msra.mxu0 0
  %3061 = vmatprep.subr.bf16.mxu0 0
  %3062 = vmatpush2.bf16.msra.mxu0 0
  %3063 = vmatprep.subr.bf16.mxu0 0
  %3064 = vmatpush2.bf16.msra.mxu0 0
  %3065 = vmatprep.subr.bf16.mxu0 0
  %3066 = vmatpush2.bf16.msra.mxu0 0
  %3067 = vmatprep.subr.bf16.mxu0 0
  %3068 = vmatpush2.bf16.msra.mxu0 0
  %3069 = vmatprep.subr.bf16.mxu0 0
  %3070 = vmatpush2.bf16.msra.mxu0 0
  %3071 = vmatprep.mubr.bf16.mxu0 0
  %3072 = vmatmul.mubr.bf16.gmra.mxu0 %v3022
  %v3073 = vpop.f32.mrf.mxu0
  %v3074 = vadd.f32 0.0, %v3073
  %v3075 = vpop.f32.mrf.mxu0
  %v3076 = vadd.f32 0.0, %v3075
  %v3077 = vpop.f32.mrf.mxu0
  %v3078 = vpop.f32.mrf.mxu0
  %3079 = vdwg.mxu0
  %3080 = vmatprep.subr.bf16.mxu0 0
  %3081 = vmatpush1.bf16.msra.mxu0 0
  %3082 = vmatprep.subr.bf16.mxu0 0
  %3083 = vmatpush1.bf16.msra.mxu0 0
  %3084 = vmatprep.subr.bf16.mxu0 0
  %3085 = vmatpush1.bf16.msra.mxu0 0
  %3086 = vmatprep.subr.bf16.mxu0 0
  %3087 = vmatpush1.bf16.msra.mxu0 0
  %3088 = vmatprep.subr.bf16.mxu0 0
  %3089 = vmatpush1.bf16.msra.mxu0 0
  %3090 = vmatprep.subr.bf16.mxu0 0
  %3091 = vmatpush1.bf16.msra.mxu0 0
  %3092 = vmatprep.subr.bf16.mxu0 0
  %3093 = vmatpush1.bf16.msra.mxu0 0
  %3094 = vmatprep.subr.bf16.mxu0 %v3034
  %3095 = vmatpush1.bf16.msra.mxu0 %v3031
  %3096 = vmatprep.subr.bf16.mxu0 0
  %3097 = vmatpush2.bf16.msra.mxu0 0
  %3098 = vmatprep.subr.bf16.mxu0 0
  %3099 = vmatpush2.bf16.msra.mxu0 0
  %3100 = vmatprep.subr.bf16.mxu0 0
  %3101 = vmatpush2.bf16.msra.mxu0 0
  %3102 = vmatprep.subr.bf16.mxu0 0
  %3103 = vmatpush2.bf16.msra.mxu0 0
  %3104 = vmatprep.subr.bf16.mxu0 0
  %3105 = vmatpush2.bf16.msra.mxu0 0
  %3106 = vmatprep.subr.bf16.mxu0 0
  %3107 = vmatpush2.bf16.msra.mxu0 0
  %3108 = vmatprep.subr.bf16.mxu0 0
  %3109 = vmatpush2.bf16.msra.mxu0 0
  %3110 = vmatprep.subr.bf16.mxu0 0
  %3111 = vmatpush2.bf16.msra.mxu0 0
  %3112 = vmatprep.mubr.bf16.mxu0 0
  %3113 = vmatmul.mubr.bf16.gmra.mxu0 %v3022
  %v3114 = vpop.f32.mrf.mxu0
  %v3115 = vadd.f32 0.0, %v3114
  %v3116 = vpop.f32.mrf.mxu0
  %v3117 = vadd.f32 0.0, %v3116
  %v3118 = vpop.f32.mrf.mxu0
  %v3119 = vpop.f32.mrf.mxu0
  %3120 = vdwg.mxu0
  %3121 = vmatprep.subr.bf16.mxu0 0
  %3122 = vmatpush1.bf16.msra.mxu0 0
  %3123 = vmatprep.subr.bf16.mxu0 0
  %3124 = vmatpush1.bf16.msra.mxu0 0
  %3125 = vmatprep.subr.bf16.mxu0 0
  %3126 = vmatpush1.bf16.msra.mxu0 0
  %3127 = vmatprep.subr.bf16.mxu0 0
  %3128 = vmatpush1.bf16.msra.mxu0 0
  %3129 = vmatprep.subr.bf16.mxu0 0
  %3130 = vmatpush1.bf16.msra.mxu0 0
  %3131 = vmatprep.subr.bf16.mxu0 0
  %3132 = vmatpush1.bf16.msra.mxu0 0
  %3133 = vmatprep.subr.bf16.mxu0 0
  %3134 = vmatpush1.bf16.msra.mxu0 0
  %3135 = vmatprep.subr.bf16.mxu0 0
  %3136 = vmatpush1.bf16.msra.mxu0 %v3037
  %3137 = vmatprep.subr.bf16.mxu0 0
  %3138 = vmatpush2.bf16.msra.mxu0 0
  %3139 = vmatprep.subr.bf16.mxu0 0
  %3140 = vmatpush2.bf16.msra.mxu0 0
  %3141 = vmatprep.subr.bf16.mxu0 0
  %3142 = vmatpush2.bf16.msra.mxu0 0
  %3143 = vmatprep.subr.bf16.mxu0 0
  %3144 = vmatpush2.bf16.msra.mxu0 0
  %3145 = vmatprep.subr.bf16.mxu0 0
  %3146 = vmatpush2.bf16.msra.mxu0 0
  %3147 = vmatprep.subr.bf16.mxu0 0
  %3148 = vmatpush2.bf16.msra.mxu0 0
  %3149 = vmatprep.subr.bf16.mxu0 0
  %3150 = vmatpush2.bf16.msra.mxu0 0
  %3151 = vmatprep.subr.bf16.mxu0 0
  %3152 = vmatpush2.bf16.msra.mxu0 0
  %3153 = vmatprep.mubr.bf16.mxu0 0
  %3154 = vmatmul.mubr.bf16.gmra.mxu0 %v3022
  %v3155 = vpop.f32.mrf.mxu0
  %v3156 = vadd.f32 0.0, %v3155
  %v3157 = vpop.f32.mrf.mxu0
  %v3158 = vpop.f32.mrf.mxu0
  %v3159 = vpop.f32.mrf.mxu0
  %3160 = vdwg.mxu0
  %v3161 = vadd.f32 %v2997, %v3074
  %v3162 = vadd.f32 %v2998, %v3076
  %v3163 = vadd.f32 %v2999, %v3115
  %v3164 = vadd.f32 %v3000, %v3117
  %v3165 = vadd.f32 %v3001, %v3156
  %s3166 = scalar_lea.vmem %s3, 4
  %v3167 = vld [vmem:[%s3166] sm:$0xf]
  %3169 = vset.pattern.permute.xlu0 0
  %3170 = vperm.xlu0 %3169, %v3167
  %v3171 = vpop.permute.xlu0 %3170
  %v3173 = vadd.f32 %v3161, %v3171
  %v3174 = vadd.f32 %v3162, %v3171
  %v3175 = vadd.f32 %v3163, %v3171
  %v3176 = vadd.f32 %v3164, %v3171
  %v3177 = vadd.f32 %v3165, %v3171
  %v3178 = vmax.f32 %v3173, 0.0
  %v3179 = vmax.f32 %v3174, 0.0
  %v3180 = vmax.f32 %v3175, 0.0
  %v3181 = vmax.f32 %v3176, 0.0
  %v3182 = vmax.f32 %v3177, 0.0
  %v3183 = vmul.f32 %v3178, %v1609
  %v3184 = vmul.f32 %v3179, %v1613
  %v3185 = vmul.f32 %v3180, %v1617
  %v3186 = vmul.f32 %v3181, %v1621
  %v3187 = vmul.f32 %v3182, %v1625
  %v3188 = vpack.c.bf16 %v3183, %v3183
  %v3189 = vpack.c.bf16 %v3184, %v3184
  %v3190 = vpack.c.bf16 %v3185, %v3185
  %v3191 = vpack.c.bf16 %v3186, %v3186
  %v3192 = vpack.c.bf16 %v3187, %v3187
  %v3198 = vunpack.c.l.b16 %v3188
  %v3199 = vunpack.c.l.b16 %v3189
  %v3200 = vunpack.c.l.b16 %v3190
  %v3201 = vunpack.c.l.b16 %v3191
  %v3202 = vunpack.c.l.b16 %v3192
  %v3203 = vpack.c.b16 %v3199, %v3198
  %v3204 = vpack.c.b16 %v3201, %v3200
  %v3205 = vpack.c.b16 %v3202, %v3202
  %3209 = vst [vmem:[#allocation2 + $0x20] sm:$0x33] %v3203
  %3210 = vst [vmem:[#allocation2 + $0x28] sm:$0x33] %v3204
  %3211 = vst [vmem:[#allocation2 + $0x30] sm:$0x3] %v3205
  %s3212 = scalar_lea.vmem %s2, 36
  %v3213 = vld [vmem:[%s3212] sm:$0x3]
  %v3214 = vld [vmem:[#allocation2] sm:$0xff]
  %v3215 = vld [vmem:[#allocation2 + $0x8] sm:$0xff]
  %v3216 = vld [vmem:[#allocation2 + $0x10] sm:$0xff]
  %v3217 = vld [vmem:[#allocation2 + $0x1c] sm:$0x33]
  %v3218 = vld [vmem:[#allocation2 + $0x24] sm:$0x33]
  %v3219 = vld [vmem:[#allocation2 + $0x2c] sm:$0x33]
  %s3220 = scalar_lea.vmem %s2, 38
  %v3221 = vld [vmem:[%s3220] sm:$0x3]
  %v3228 = vunpack.c.l.b16 %v3214
  %v3229 = vunpack.c.h.b16 %v3214
  %v3230 = vunpack.c.l.b16 %v3215
  %v3231 = vunpack.c.h.b16 %v3215
  %v3232 = vunpack.c.l.b16 %v3216
  %v3233 = vunpack.c.h.b16 %v3216
  %v3234 = vunpack.c.l.b16 %v3217
  %v3235 = vunpack.c.h.b16 %v3217
  %v3236 = vunpack.c.l.b16 %v3218
  %v3237 = vunpack.c.h.b16 %v3218
  %v3238 = vunpack.c.l.b16 %v3219
  %v3239 = vunpack.c.h.b16 %v3219
  %v3240 = vpack.c.b16 %v3234, %v3228
  %v3241 = vpack.c.b16 %v3235, %v3229
  %v3242 = vpack.c.b16 %v3236, %v3230
  %v3243 = vpack.c.b16 %v3237, %v3231
  %v3244 = vpack.c.b16 %v3238, %v3232
  %v3245 = vpack.c.b16 %v3239, %v3233
  %3246 = vrot.lane.b32.xlu0 %v3240, 18
  %v3247 = vpop.permute.xlu0 %3246
  %3248 = vrot.lane.b32.xlu0 %v3241, 18
  %v3249 = vpop.permute.xlu0 %3248
  %3250 = vrot.lane.b32.xlu0 %v3242, 18
  %v3251 = vpop.permute.xlu0 %3250
  %3252 = vrot.lane.b32.xlu0 %v3243, 18
  %v3253 = vpop.permute.xlu0 %3252
  %3254 = vrot.lane.b32.xlu0 %v3244, 18
  %v3255 = vpop.permute.xlu0 %3254
  %3256 = vrot.lane.b32.xlu0 %v3245, 18
  %v3257 = vpop.permute.xlu0 %3256
  %v3258 = vsel %vm112, %v3247, %v3249
  %v3259 = vsel %vm112, %v3249, %v3251
  %v3260 = vsel %vm112, %v3251, %v3253
  %v3261 = vsel %vm112, %v3253, %v3255
  %v3262 = vsel %vm112, %v3255, %v3257
  %vm3263 = vcmask 97280
  %v3265 = vsel %vm3263, %v3221, 0
  %vm3267 = vcmask 1045504
  %v3269 = vsel %vm3267, %v3258, 0
  %v3272 = vsel %vm3267, %v3259, 0
  %v3275 = vsel %vm3267, %v3260, 0
  %v3278 = vsel %vm3267, %v3261, 0
  %v3281 = vsel %vm3267, %v3262, 0
  %3283 = vmatprep.subr.bf16.mxu0 0
  %3284 = vmatpush1.bf16.msra.mxu0 0
  %3285 = vmatprep.subr.bf16.mxu0 0
  %3286 = vmatpush1.bf16.msra.mxu0 0
  %3287 = vmatprep.subr.bf16.mxu0 0
  %3288 = vmatpush1.bf16.msra.mxu0 0
  %3289 = vmatprep.subr.bf16.mxu0 0
  %3290 = vmatpush1.bf16.msra.mxu0 0
  %3291 = vmatprep.subr.bf16.mxu0 0
  %3292 = vmatpush1.bf16.msra.mxu0 0
  %3293 = vmatprep.subr.bf16.mxu0 0
  %3294 = vmatpush1.bf16.msra.mxu0 0
  %3295 = vmatprep.subr.bf16.mxu0 0
  %3296 = vmatpush1.bf16.msra.mxu0 0
  %3297 = vmatprep.subr.bf16.mxu0 %v3272
  %3298 = vmatpush1.bf16.msra.mxu0 %v3269
  %3299 = vmatprep.subr.bf16.mxu0 0
  %3300 = vmatpush2.bf16.msra.mxu0 0
  %3301 = vmatprep.subr.bf16.mxu0 0
  %3302 = vmatpush2.bf16.msra.mxu0 0
  %3303 = vmatprep.subr.bf16.mxu0 0
  %3304 = vmatpush2.bf16.msra.mxu0 0
  %3305 = vmatprep.subr.bf16.mxu0 0
  %3306 = vmatpush2.bf16.msra.mxu0 0
  %3307 = vmatprep.subr.bf16.mxu0 0
  %3308 = vmatpush2.bf16.msra.mxu0 0
  %3309 = vmatprep.subr.bf16.mxu0 0
  %3310 = vmatpush2.bf16.msra.mxu0 0
  %3311 = vmatprep.subr.bf16.mxu0 0
  %3312 = vmatpush2.bf16.msra.mxu0 0
  %3313 = vmatprep.subr.bf16.mxu0 0
  %3314 = vmatpush2.bf16.msra.mxu0 0
  %3315 = vmatprep.mubr.bf16.mxu0 0
  %3316 = vmatmul.mubr.bf16.gmra.mxu0 %v3265
  %v3317 = vpop.f32.mrf.mxu0
  %v3318 = vadd.f32 0.0, %v3317
  %v3319 = vpop.f32.mrf.mxu0
  %v3320 = vadd.f32 0.0, %v3319
  %v3321 = vpop.f32.mrf.mxu0
  %v3322 = vpop.f32.mrf.mxu0
  %3323 = vdwg.mxu0
  %3324 = vmatprep.subr.bf16.mxu0 0
  %3325 = vmatpush1.bf16.msra.mxu0 0
  %3326 = vmatprep.subr.bf16.mxu0 0
  %3327 = vmatpush1.bf16.msra.mxu0 0
  %3328 = vmatprep.subr.bf16.mxu0 0
  %3329 = vmatpush1.bf16.msra.mxu0 0
  %3330 = vmatprep.subr.bf16.mxu0 0
  %3331 = vmatpush1.bf16.msra.mxu0 0
  %3332 = vmatprep.subr.bf16.mxu0 0
  %3333 = vmatpush1.bf16.msra.mxu0 0
  %3334 = vmatprep.subr.bf16.mxu0 0
  %3335 = vmatpush1.bf16.msra.mxu0 0
  %3336 = vmatprep.subr.bf16.mxu0 0
  %3337 = vmatpush1.bf16.msra.mxu0 0
  %3338 = vmatprep.subr.bf16.mxu0 %v3278
  %3339 = vmatpush1.bf16.msra.mxu0 %v3275
  %3340 = vmatprep.subr.bf16.mxu0 0
  %3341 = vmatpush2.bf16.msra.mxu0 0
  %3342 = vmatprep.subr.bf16.mxu0 0
  %3343 = vmatpush2.bf16.msra.mxu0 0
  %3344 = vmatprep.subr.bf16.mxu0 0
  %3345 = vmatpush2.bf16.msra.mxu0 0
  %3346 = vmatprep.subr.bf16.mxu0 0
  %3347 = vmatpush2.bf16.msra.mxu0 0
  %3348 = vmatprep.subr.bf16.mxu0 0
  %3349 = vmatpush2.bf16.msra.mxu0 0
  %3350 = vmatprep.subr.bf16.mxu0 0
  %3351 = vmatpush2.bf16.msra.mxu0 0
  %3352 = vmatprep.subr.bf16.mxu0 0
  %3353 = vmatpush2.bf16.msra.mxu0 0
  %3354 = vmatprep.subr.bf16.mxu0 0
  %3355 = vmatpush2.bf16.msra.mxu0 0
  %3356 = vmatprep.mubr.bf16.mxu0 0
  %3357 = vmatmul.mubr.bf16.gmra.mxu0 %v3265
  %v3358 = vpop.f32.mrf.mxu0
  %v3359 = vadd.f32 0.0, %v3358
  %v3360 = vpop.f32.mrf.mxu0
  %v3361 = vadd.f32 0.0, %v3360
  %v3362 = vpop.f32.mrf.mxu0
  %v3363 = vpop.f32.mrf.mxu0
  %3364 = vdwg.mxu0
  %3365 = vmatprep.subr.bf16.mxu0 0
  %3366 = vmatpush1.bf16.msra.mxu0 0
  %3367 = vmatprep.subr.bf16.mxu0 0
  %3368 = vmatpush1.bf16.msra.mxu0 0
  %3369 = vmatprep.subr.bf16.mxu0 0
  %3370 = vmatpush1.bf16.msra.mxu0 0
  %3371 = vmatprep.subr.bf16.mxu0 0
  %3372 = vmatpush1.bf16.msra.mxu0 0
  %3373 = vmatprep.subr.bf16.mxu0 0
  %3374 = vmatpush1.bf16.msra.mxu0 0
  %3375 = vmatprep.subr.bf16.mxu0 0
  %3376 = vmatpush1.bf16.msra.mxu0 0
  %3377 = vmatprep.subr.bf16.mxu0 0
  %3378 = vmatpush1.bf16.msra.mxu0 0
  %3379 = vmatprep.subr.bf16.mxu0 0
  %3380 = vmatpush1.bf16.msra.mxu0 %v3281
  %3381 = vmatprep.subr.bf16.mxu0 0
  %3382 = vmatpush2.bf16.msra.mxu0 0
  %3383 = vmatprep.subr.bf16.mxu0 0
  %3384 = vmatpush2.bf16.msra.mxu0 0
  %3385 = vmatprep.subr.bf16.mxu0 0
  %3386 = vmatpush2.bf16.msra.mxu0 0
  %3387 = vmatprep.subr.bf16.mxu0 0
  %3388 = vmatpush2.bf16.msra.mxu0 0
  %3389 = vmatprep.subr.bf16.mxu0 0
  %3390 = vmatpush2.bf16.msra.mxu0 0
  %3391 = vmatprep.subr.bf16.mxu0 0
  %3392 = vmatpush2.bf16.msra.mxu0 0
  %3393 = vmatprep.subr.bf16.mxu0 0
  %3394 = vmatpush2.bf16.msra.mxu0 0
  %3395 = vmatprep.subr.bf16.mxu0 0
  %3396 = vmatpush2.bf16.msra.mxu0 0
  %3397 = vmatprep.mubr.bf16.mxu0 0
  %3398 = vmatmul.mubr.bf16.gmra.mxu0 %v3265
  %v3399 = vpop.f32.mrf.mxu0
  %v3400 = vadd.f32 0.0, %v3399
  %v3401 = vpop.f32.mrf.mxu0
  %v3402 = vpop.f32.mrf.mxu0
  %v3403 = vpop.f32.mrf.mxu0
  %3404 = vdwg.mxu0
  %3405 = vrot.lane.b32.xlu0 %v3240, 19
  %v3406 = vpop.permute.xlu0 %3405
  %3407 = vrot.lane.b32.xlu0 %v3241, 19
  %v3408 = vpop.permute.xlu0 %3407
  %3409 = vrot.lane.b32.xlu0 %v3242, 19
  %v3410 = vpop.permute.xlu0 %3409
  %3411 = vrot.lane.b32.xlu0 %v3243, 19
  %v3412 = vpop.permute.xlu0 %3411
  %3413 = vrot.lane.b32.xlu0 %v3244, 19
  %v3414 = vpop.permute.xlu0 %3413
  %3415 = vrot.lane.b32.xlu0 %v3245, 19
  %v3416 = vpop.permute.xlu0 %3415
  %v3417 = vsel %vm272, %v3406, %v3408
  %v3418 = vsel %vm272, %v3408, %v3410
  %v3419 = vsel %vm272, %v3410, %v3412
  %v3420 = vsel %vm272, %v3412, %v3414
  %v3421 = vsel %vm272, %v3414, %v3416
  %v3423 = vsel %vm3263, %v3213, 0
  %v3426 = vsel %vm3267, %v3417, 0
  %v3429 = vsel %vm3267, %v3418, 0
  %v3432 = vsel %vm3267, %v3419, 0
  %v3435 = vsel %vm3267, %v3420, 0
  %v3438 = vsel %vm3267, %v3421, 0
  %3440 = vmatprep.subr.bf16.mxu0 0
  %3441 = vmatpush1.bf16.msra.mxu0 0
  %3442 = vmatprep.subr.bf16.mxu0 0
  %3443 = vmatpush1.bf16.msra.mxu0 0
  %3444 = vmatprep.subr.bf16.mxu0 0
  %3445 = vmatpush1.bf16.msra.mxu0 0
  %3446 = vmatprep.subr.bf16.mxu0 0
  %3447 = vmatpush1.bf16.msra.mxu0 0
  %3448 = vmatprep.subr.bf16.mxu0 0
  %3449 = vmatpush1.bf16.msra.mxu0 0
  %3450 = vmatprep.subr.bf16.mxu0 0
  %3451 = vmatpush1.bf16.msra.mxu0 0
  %3452 = vmatprep.subr.bf16.mxu0 0
  %3453 = vmatpush1.bf16.msra.mxu0 0
  %3454 = vmatprep.subr.bf16.mxu0 %v3429
  %3455 = vmatpush1.bf16.msra.mxu0 %v3426
  %3456 = vmatprep.subr.bf16.mxu0 0
  %3457 = vmatpush2.bf16.msra.mxu0 0
  %3458 = vmatprep.subr.bf16.mxu0 0
  %3459 = vmatpush2.bf16.msra.mxu0 0
  %3460 = vmatprep.subr.bf16.mxu0 0
  %3461 = vmatpush2.bf16.msra.mxu0 0
  %3462 = vmatprep.subr.bf16.mxu0 0
  %3463 = vmatpush2.bf16.msra.mxu0 0
  %3464 = vmatprep.subr.bf16.mxu0 0
  %3465 = vmatpush2.bf16.msra.mxu0 0
  %3466 = vmatprep.subr.bf16.mxu0 0
  %3467 = vmatpush2.bf16.msra.mxu0 0
  %3468 = vmatprep.subr.bf16.mxu0 0
  %3469 = vmatpush2.bf16.msra.mxu0 0
  %3470 = vmatprep.subr.bf16.mxu0 0
  %3471 = vmatpush2.bf16.msra.mxu0 0
  %3472 = vmatprep.mubr.bf16.mxu0 0
  %3473 = vmatmul.mubr.bf16.gmra.mxu0 %v3423
  %v3474 = vpop.f32.mrf.mxu0
  %v3475 = vadd.f32 %v3318, %v3474
  %v3476 = vpop.f32.mrf.mxu0
  %v3477 = vadd.f32 %v3320, %v3476
  %v3478 = vpop.f32.mrf.mxu0
  %v3479 = vpop.f32.mrf.mxu0
  %3480 = vdwg.mxu0
  %3481 = vmatprep.subr.bf16.mxu0 0
  %3482 = vmatpush1.bf16.msra.mxu0 0
  %3483 = vmatprep.subr.bf16.mxu0 0
  %3484 = vmatpush1.bf16.msra.mxu0 0
  %3485 = vmatprep.subr.bf16.mxu0 0
  %3486 = vmatpush1.bf16.msra.mxu0 0
  %3487 = vmatprep.subr.bf16.mxu0 0
  %3488 = vmatpush1.bf16.msra.mxu0 0
  %3489 = vmatprep.subr.bf16.mxu0 0
  %3490 = vmatpush1.bf16.msra.mxu0 0
  %3491 = vmatprep.subr.bf16.mxu0 0
  %3492 = vmatpush1.bf16.msra.mxu0 0
  %3493 = vmatprep.subr.bf16.mxu0 0
  %3494 = vmatpush1.bf16.msra.mxu0 0
  %3495 = vmatprep.subr.bf16.mxu0 %v3435
  %3496 = vmatpush1.bf16.msra.mxu0 %v3432
  %3497 = vmatprep.subr.bf16.mxu0 0
  %3498 = vmatpush2.bf16.msra.mxu0 0
  %3499 = vmatprep.subr.bf16.mxu0 0
  %3500 = vmatpush2.bf16.msra.mxu0 0
  %3501 = vmatprep.subr.bf16.mxu0 0
  %3502 = vmatpush2.bf16.msra.mxu0 0
  %3503 = vmatprep.subr.bf16.mxu0 0
  %3504 = vmatpush2.bf16.msra.mxu0 0
  %3505 = vmatprep.subr.bf16.mxu0 0
  %3506 = vmatpush2.bf16.msra.mxu0 0
  %3507 = vmatprep.subr.bf16.mxu0 0
  %3508 = vmatpush2.bf16.msra.mxu0 0
  %3509 = vmatprep.subr.bf16.mxu0 0
  %3510 = vmatpush2.bf16.msra.mxu0 0
  %3511 = vmatprep.subr.bf16.mxu0 0
  %3512 = vmatpush2.bf16.msra.mxu0 0
  %3513 = vmatprep.mubr.bf16.mxu0 0
  %3514 = vmatmul.mubr.bf16.gmra.mxu0 %v3423
  %v3515 = vpop.f32.mrf.mxu0
  %v3516 = vadd.f32 %v3359, %v3515
  %v3517 = vpop.f32.mrf.mxu0
  %v3518 = vadd.f32 %v3361, %v3517
  %v3519 = vpop.f32.mrf.mxu0
  %v3520 = vpop.f32.mrf.mxu0
  %3521 = vdwg.mxu0
  %3522 = vmatprep.subr.bf16.mxu0 0
  %3523 = vmatpush1.bf16.msra.mxu0 0
  %3524 = vmatprep.subr.bf16.mxu0 0
  %3525 = vmatpush1.bf16.msra.mxu0 0
  %3526 = vmatprep.subr.bf16.mxu0 0
  %3527 = vmatpush1.bf16.msra.mxu0 0
  %3528 = vmatprep.subr.bf16.mxu0 0
  %3529 = vmatpush1.bf16.msra.mxu0 0
  %3530 = vmatprep.subr.bf16.mxu0 0
  %3531 = vmatpush1.bf16.msra.mxu0 0
  %3532 = vmatprep.subr.bf16.mxu0 0
  %3533 = vmatpush1.bf16.msra.mxu0 0
  %3534 = vmatprep.subr.bf16.mxu0 0
  %3535 = vmatpush1.bf16.msra.mxu0 0
  %3536 = vmatprep.subr.bf16.mxu0 0
  %3537 = vmatpush1.bf16.msra.mxu0 %v3438
  %3538 = vmatprep.subr.bf16.mxu0 0
  %3539 = vmatpush2.bf16.msra.mxu0 0
  %3540 = vmatprep.subr.bf16.mxu0 0
  %3541 = vmatpush2.bf16.msra.mxu0 0
  %3542 = vmatprep.subr.bf16.mxu0 0
  %3543 = vmatpush2.bf16.msra.mxu0 0
  %3544 = vmatprep.subr.bf16.mxu0 0
  %3545 = vmatpush2.bf16.msra.mxu0 0
  %3546 = vmatprep.subr.bf16.mxu0 0
  %3547 = vmatpush2.bf16.msra.mxu0 0
  %3548 = vmatprep.subr.bf16.mxu0 0
  %3549 = vmatpush2.bf16.msra.mxu0 0
  %3550 = vmatprep.subr.bf16.mxu0 0
  %3551 = vmatpush2.bf16.msra.mxu0 0
  %3552 = vmatprep.subr.bf16.mxu0 0
  %3553 = vmatpush2.bf16.msra.mxu0 0
  %3554 = vmatprep.mubr.bf16.mxu0 0
  %3555 = vmatmul.mubr.bf16.gmra.mxu0 %v3423
  %v3556 = vpop.f32.mrf.mxu0
  %v3557 = vadd.f32 %v3400, %v3556
  %v3558 = vpop.f32.mrf.mxu0
  %v3559 = vpop.f32.mrf.mxu0
  %v3560 = vpop.f32.mrf.mxu0
  %3561 = vdwg.mxu0
  %s3562 = scalar_lea.vmem %s2, 40
  %v3563 = vld [vmem:[%s3562] sm:$0x3]
  %3564 = vrot.lane.b32.xlu0 %v3240, 17
  %v3565 = vpop.permute.xlu0 %3564
  %3566 = vrot.lane.b32.xlu0 %v3241, 17
  %v3567 = vpop.permute.xlu0 %3566
  %3568 = vrot.lane.b32.xlu0 %v3242, 17
  %v3569 = vpop.permute.xlu0 %3568
  %3570 = vrot.lane.b32.xlu0 %v3243, 17
  %v3571 = vpop.permute.xlu0 %3570
  %3572 = vrot.lane.b32.xlu0 %v3244, 17
  %v3573 = vpop.permute.xlu0 %3572
  %3574 = vrot.lane.b32.xlu0 %v3245, 17
  %v3575 = vpop.permute.xlu0 %3574
  %v3576 = vsel %vm432, %v3565, %v3567
  %v3577 = vsel %vm432, %v3567, %v3569
  %v3578 = vsel %vm432, %v3569, %v3571
  %v3579 = vsel %vm432, %v3571, %v3573
  %v3580 = vsel %vm432, %v3573, %v3575
  %v3582 = vsel %vm3263, %v3563, 0
  %v3585 = vsel %vm3267, %v3576, 0
  %v3588 = vsel %vm3267, %v3577, 0
  %v3591 = vsel %vm3267, %v3578, 0
  %v3594 = vsel %vm3267, %v3579, 0
  %v3597 = vsel %vm3267, %v3580, 0
  %3599 = vmatprep.subr.bf16.mxu0 0
  %3600 = vmatpush1.bf16.msra.mxu0 0
  %3601 = vmatprep.subr.bf16.mxu0 0
  %3602 = vmatpush1.bf16.msra.mxu0 0
  %3603 = vmatprep.subr.bf16.mxu0 0
  %3604 = vmatpush1.bf16.msra.mxu0 0
  %3605 = vmatprep.subr.bf16.mxu0 0
  %3606 = vmatpush1.bf16.msra.mxu0 0
  %3607 = vmatprep.subr.bf16.mxu0 0
  %3608 = vmatpush1.bf16.msra.mxu0 0
  %3609 = vmatprep.subr.bf16.mxu0 0
  %3610 = vmatpush1.bf16.msra.mxu0 0
  %3611 = vmatprep.subr.bf16.mxu0 0
  %3612 = vmatpush1.bf16.msra.mxu0 0
  %3613 = vmatprep.subr.bf16.mxu0 %v3588
  %3614 = vmatpush1.bf16.msra.mxu0 %v3585
  %3615 = vmatprep.subr.bf16.mxu0 0
  %3616 = vmatpush2.bf16.msra.mxu0 0
  %3617 = vmatprep.subr.bf16.mxu0 0
  %3618 = vmatpush2.bf16.msra.mxu0 0
  %3619 = vmatprep.subr.bf16.mxu0 0
  %3620 = vmatpush2.bf16.msra.mxu0 0
  %3621 = vmatprep.subr.bf16.mxu0 0
  %3622 = vmatpush2.bf16.msra.mxu0 0
  %3623 = vmatprep.subr.bf16.mxu0 0
  %3624 = vmatpush2.bf16.msra.mxu0 0
  %3625 = vmatprep.subr.bf16.mxu0 0
  %3626 = vmatpush2.bf16.msra.mxu0 0
  %3627 = vmatprep.subr.bf16.mxu0 0
  %3628 = vmatpush2.bf16.msra.mxu0 0
  %3629 = vmatprep.subr.bf16.mxu0 0
  %3630 = vmatpush2.bf16.msra.mxu0 0
  %3631 = vmatprep.mubr.bf16.mxu0 0
  %3632 = vmatmul.mubr.bf16.gmra.mxu0 %v3582
  %v3633 = vpop.f32.mrf.mxu0
  %v3634 = vadd.f32 0.0, %v3633
  %v3635 = vpop.f32.mrf.mxu0
  %v3636 = vadd.f32 0.0, %v3635
  %v3637 = vpop.f32.mrf.mxu0
  %v3638 = vpop.f32.mrf.mxu0
  %3639 = vdwg.mxu0
  %3640 = vmatprep.subr.bf16.mxu0 0
  %3641 = vmatpush1.bf16.msra.mxu0 0
  %3642 = vmatprep.subr.bf16.mxu0 0
  %3643 = vmatpush1.bf16.msra.mxu0 0
  %3644 = vmatprep.subr.bf16.mxu0 0
  %3645 = vmatpush1.bf16.msra.mxu0 0
  %3646 = vmatprep.subr.bf16.mxu0 0
  %3647 = vmatpush1.bf16.msra.mxu0 0
  %3648 = vmatprep.subr.bf16.mxu0 0
  %3649 = vmatpush1.bf16.msra.mxu0 0
  %3650 = vmatprep.subr.bf16.mxu0 0
  %3651 = vmatpush1.bf16.msra.mxu0 0
  %3652 = vmatprep.subr.bf16.mxu0 0
  %3653 = vmatpush1.bf16.msra.mxu0 0
  %3654 = vmatprep.subr.bf16.mxu0 %v3594
  %3655 = vmatpush1.bf16.msra.mxu0 %v3591
  %3656 = vmatprep.subr.bf16.mxu0 0
  %3657 = vmatpush2.bf16.msra.mxu0 0
  %3658 = vmatprep.subr.bf16.mxu0 0
  %3659 = vmatpush2.bf16.msra.mxu0 0
  %3660 = vmatprep.subr.bf16.mxu0 0
  %3661 = vmatpush2.bf16.msra.mxu0 0
  %3662 = vmatprep.subr.bf16.mxu0 0
  %3663 = vmatpush2.bf16.msra.mxu0 0
  %3664 = vmatprep.subr.bf16.mxu0 0
  %3665 = vmatpush2.bf16.msra.mxu0 0
  %3666 = vmatprep.subr.bf16.mxu0 0
  %3667 = vmatpush2.bf16.msra.mxu0 0
  %3668 = vmatprep.subr.bf16.mxu0 0
  %3669 = vmatpush2.bf16.msra.mxu0 0
  %3670 = vmatprep.subr.bf16.mxu0 0
  %3671 = vmatpush2.bf16.msra.mxu0 0
  %3672 = vmatprep.mubr.bf16.mxu0 0
  %3673 = vmatmul.mubr.bf16.gmra.mxu0 %v3582
  %v3674 = vpop.f32.mrf.mxu0
  %v3675 = vadd.f32 0.0, %v3674
  %v3676 = vpop.f32.mrf.mxu0
  %v3677 = vadd.f32 0.0, %v3676
  %v3678 = vpop.f32.mrf.mxu0
  %v3679 = vpop.f32.mrf.mxu0
  %3680 = vdwg.mxu0
  %3681 = vmatprep.subr.bf16.mxu0 0
  %3682 = vmatpush1.bf16.msra.mxu0 0
  %3683 = vmatprep.subr.bf16.mxu0 0
  %3684 = vmatpush1.bf16.msra.mxu0 0
  %3685 = vmatprep.subr.bf16.mxu0 0
  %3686 = vmatpush1.bf16.msra.mxu0 0
  %3687 = vmatprep.subr.bf16.mxu0 0
  %3688 = vmatpush1.bf16.msra.mxu0 0
  %3689 = vmatprep.subr.bf16.mxu0 0
  %3690 = vmatpush1.bf16.msra.mxu0 0
  %3691 = vmatprep.subr.bf16.mxu0 0
  %3692 = vmatpush1.bf16.msra.mxu0 0
  %3693 = vmatprep.subr.bf16.mxu0 0
  %3694 = vmatpush1.bf16.msra.mxu0 0
  %3695 = vmatprep.subr.bf16.mxu0 0
  %3696 = vmatpush1.bf16.msra.mxu0 %v3597
  %3697 = vmatprep.subr.bf16.mxu0 0
  %3698 = vmatpush2.bf16.msra.mxu0 0
  %3699 = vmatprep.subr.bf16.mxu0 0
  %3700 = vmatpush2.bf16.msra.mxu0 0
  %3701 = vmatprep.subr.bf16.mxu0 0
  %3702 = vmatpush2.bf16.msra.mxu0 0
  %3703 = vmatprep.subr.bf16.mxu0 0
  %3704 = vmatpush2.bf16.msra.mxu0 0
  %3705 = vmatprep.subr.bf16.mxu0 0
  %3706 = vmatpush2.bf16.msra.mxu0 0
  %3707 = vmatprep.subr.bf16.mxu0 0
  %3708 = vmatpush2.bf16.msra.mxu0 0
  %3709 = vmatprep.subr.bf16.mxu0 0
  %3710 = vmatpush2.bf16.msra.mxu0 0
  %3711 = vmatprep.subr.bf16.mxu0 0
  %3712 = vmatpush2.bf16.msra.mxu0 0
  %3713 = vmatprep.mubr.bf16.mxu0 0
  %3714 = vmatmul.mubr.bf16.gmra.mxu0 %v3582
  %v3715 = vpop.f32.mrf.mxu0
  %v3716 = vadd.f32 0.0, %v3715
  %v3717 = vpop.f32.mrf.mxu0
  %v3718 = vpop.f32.mrf.mxu0
  %v3719 = vpop.f32.mrf.mxu0
  %3720 = vdwg.mxu0
  %v3721 = vadd.f32 %v3475, %v3634
  %v3722 = vadd.f32 %v3477, %v3636
  %v3723 = vadd.f32 %v3516, %v3675
  %v3724 = vadd.f32 %v3518, %v3677
  %v3725 = vadd.f32 %v3557, %v3716
  %s3726 = scalar_lea.vmem %s2, 42
  %v3727 = vld [vmem:[%s3726] sm:$0x3]
  %3728 = vrot.lane.b32.xlu0 %v3240, 1
  %v3729 = vpop.permute.xlu0 %3728
  %3730 = vrot.lane.b32.xlu0 %v3241, 1
  %v3731 = vpop.permute.xlu0 %3730
  %3732 = vrot.lane.b32.xlu0 %v3242, 1
  %v3733 = vpop.permute.xlu0 %3732
  %3734 = vrot.lane.b32.xlu0 %v3243, 1
  %v3735 = vpop.permute.xlu0 %3734
  %3736 = vrot.lane.b32.xlu0 %v3244, 1
  %v3737 = vpop.permute.xlu0 %3736
  %3738 = vrot.lane.b32.xlu0 %v3245, 1
  %v3739 = vpop.permute.xlu0 %3738
  %v3740 = vsel %vm597, %v3729, %v3731
  %v3741 = vsel %vm597, %v3731, %v3733
  %v3742 = vsel %vm597, %v3733, %v3735
  %v3743 = vsel %vm597, %v3735, %v3737
  %v3744 = vsel %vm597, %v3737, %v3739
  %v3746 = vsel %vm3263, %v3727, 0
  %v3749 = vsel %vm3267, %v3740, 0
  %v3752 = vsel %vm3267, %v3741, 0
  %v3755 = vsel %vm3267, %v3742, 0
  %v3758 = vsel %vm3267, %v3743, 0
  %v3761 = vsel %vm3267, %v3744, 0
  %3763 = vmatprep.subr.bf16.mxu0 0
  %3764 = vmatpush1.bf16.msra.mxu0 0
  %3765 = vmatprep.subr.bf16.mxu0 0
  %3766 = vmatpush1.bf16.msra.mxu0 0
  %3767 = vmatprep.subr.bf16.mxu0 0
  %3768 = vmatpush1.bf16.msra.mxu0 0
  %3769 = vmatprep.subr.bf16.mxu0 0
  %3770 = vmatpush1.bf16.msra.mxu0 0
  %3771 = vmatprep.subr.bf16.mxu0 0
  %3772 = vmatpush1.bf16.msra.mxu0 0
  %3773 = vmatprep.subr.bf16.mxu0 0
  %3774 = vmatpush1.bf16.msra.mxu0 0
  %3775 = vmatprep.subr.bf16.mxu0 0
  %3776 = vmatpush1.bf16.msra.mxu0 0
  %3777 = vmatprep.subr.bf16.mxu0 %v3752
  %3778 = vmatpush1.bf16.msra.mxu0 %v3749
  %3779 = vmatprep.subr.bf16.mxu0 0
  %3780 = vmatpush2.bf16.msra.mxu0 0
  %3781 = vmatprep.subr.bf16.mxu0 0
  %3782 = vmatpush2.bf16.msra.mxu0 0
  %3783 = vmatprep.subr.bf16.mxu0 0
  %3784 = vmatpush2.bf16.msra.mxu0 0
  %3785 = vmatprep.subr.bf16.mxu0 0
  %3786 = vmatpush2.bf16.msra.mxu0 0
  %3787 = vmatprep.subr.bf16.mxu0 0
  %3788 = vmatpush2.bf16.msra.mxu0 0
  %3789 = vmatprep.subr.bf16.mxu0 0
  %3790 = vmatpush2.bf16.msra.mxu0 0
  %3791 = vmatprep.subr.bf16.mxu0 0
  %3792 = vmatpush2.bf16.msra.mxu0 0
  %3793 = vmatprep.subr.bf16.mxu0 0
  %3794 = vmatpush2.bf16.msra.mxu0 0
  %3795 = vmatprep.mubr.bf16.mxu0 0
  %3796 = vmatmul.mubr.bf16.gmra.mxu0 %v3746
  %v3797 = vpop.f32.mrf.mxu0
  %v3798 = vadd.f32 0.0, %v3797
  %v3799 = vpop.f32.mrf.mxu0
  %v3800 = vadd.f32 0.0, %v3799
  %v3801 = vpop.f32.mrf.mxu0
  %v3802 = vpop.f32.mrf.mxu0
  %3803 = vdwg.mxu0
  %3804 = vmatprep.subr.bf16.mxu0 0
  %3805 = vmatpush1.bf16.msra.mxu0 0
  %3806 = vmatprep.subr.bf16.mxu0 0
  %3807 = vmatpush1.bf16.msra.mxu0 0
  %3808 = vmatprep.subr.bf16.mxu0 0
  %3809 = vmatpush1.bf16.msra.mxu0 0
  %3810 = vmatprep.subr.bf16.mxu0 0
  %3811 = vmatpush1.bf16.msra.mxu0 0
  %3812 = vmatprep.subr.bf16.mxu0 0
  %3813 = vmatpush1.bf16.msra.mxu0 0
  %3814 = vmatprep.subr.bf16.mxu0 0
  %3815 = vmatpush1.bf16.msra.mxu0 0
  %3816 = vmatprep.subr.bf16.mxu0 0
  %3817 = vmatpush1.bf16.msra.mxu0 0
  %3818 = vmatprep.subr.bf16.mxu0 %v3758
  %3819 = vmatpush1.bf16.msra.mxu0 %v3755
  %3820 = vmatprep.subr.bf16.mxu0 0
  %3821 = vmatpush2.bf16.msra.mxu0 0
  %3822 = vmatprep.subr.bf16.mxu0 0
  %3823 = vmatpush2.bf16.msra.mxu0 0
  %3824 = vmatprep.subr.bf16.mxu0 0
  %3825 = vmatpush2.bf16.msra.mxu0 0
  %3826 = vmatprep.subr.bf16.mxu0 0
  %3827 = vmatpush2.bf16.msra.mxu0 0
  %3828 = vmatprep.subr.bf16.mxu0 0
  %3829 = vmatpush2.bf16.msra.mxu0 0
  %3830 = vmatprep.subr.bf16.mxu0 0
  %3831 = vmatpush2.bf16.msra.mxu0 0
  %3832 = vmatprep.subr.bf16.mxu0 0
  %3833 = vmatpush2.bf16.msra.mxu0 0
  %3834 = vmatprep.subr.bf16.mxu0 0
  %3835 = vmatpush2.bf16.msra.mxu0 0
  %3836 = vmatprep.mubr.bf16.mxu0 0
  %3837 = vmatmul.mubr.bf16.gmra.mxu0 %v3746
  %v3838 = vpop.f32.mrf.mxu0
  %v3839 = vadd.f32 0.0, %v3838
  %v3840 = vpop.f32.mrf.mxu0
  %v3841 = vadd.f32 0.0, %v3840
  %v3842 = vpop.f32.mrf.mxu0
  %v3843 = vpop.f32.mrf.mxu0
  %3844 = vdwg.mxu0
  %3845 = vmatprep.subr.bf16.mxu0 0
  %3846 = vmatpush1.bf16.msra.mxu0 0
  %3847 = vmatprep.subr.bf16.mxu0 0
  %3848 = vmatpush1.bf16.msra.mxu0 0
  %3849 = vmatprep.subr.bf16.mxu0 0
  %3850 = vmatpush1.bf16.msra.mxu0 0
  %3851 = vmatprep.subr.bf16.mxu0 0
  %3852 = vmatpush1.bf16.msra.mxu0 0
  %3853 = vmatprep.subr.bf16.mxu0 0
  %3854 = vmatpush1.bf16.msra.mxu0 0
  %3855 = vmatprep.subr.bf16.mxu0 0
  %3856 = vmatpush1.bf16.msra.mxu0 0
  %3857 = vmatprep.subr.bf16.mxu0 0
  %3858 = vmatpush1.bf16.msra.mxu0 0
  %3859 = vmatprep.subr.bf16.mxu0 0
  %3860 = vmatpush1.bf16.msra.mxu0 %v3761
  %3861 = vmatprep.subr.bf16.mxu0 0
  %3862 = vmatpush2.bf16.msra.mxu0 0
  %3863 = vmatprep.subr.bf16.mxu0 0
  %3864 = vmatpush2.bf16.msra.mxu0 0
  %3865 = vmatprep.subr.bf16.mxu0 0
  %3866 = vmatpush2.bf16.msra.mxu0 0
  %3867 = vmatprep.subr.bf16.mxu0 0
  %3868 = vmatpush2.bf16.msra.mxu0 0
  %3869 = vmatprep.subr.bf16.mxu0 0
  %3870 = vmatpush2.bf16.msra.mxu0 0
  %3871 = vmatprep.subr.bf16.mxu0 0
  %3872 = vmatpush2.bf16.msra.mxu0 0
  %3873 = vmatprep.subr.bf16.mxu0 0
  %3874 = vmatpush2.bf16.msra.mxu0 0
  %3875 = vmatprep.subr.bf16.mxu0 0
  %3876 = vmatpush2.bf16.msra.mxu0 0
  %3877 = vmatprep.mubr.bf16.mxu0 0
  %3878 = vmatmul.mubr.bf16.gmra.mxu0 %v3746
  %v3879 = vpop.f32.mrf.mxu0
  %v3880 = vadd.f32 0.0, %v3879
  %v3881 = vpop.f32.mrf.mxu0
  %v3882 = vpop.f32.mrf.mxu0
  %v3883 = vpop.f32.mrf.mxu0
  %3884 = vdwg.mxu0
  %v3885 = vadd.f32 %v3721, %v3798
  %v3886 = vadd.f32 %v3722, %v3800
  %v3887 = vadd.f32 %v3723, %v3839
  %v3888 = vadd.f32 %v3724, %v3841
  %v3889 = vadd.f32 %v3725, %v3880
  %s3890 = scalar_lea.vmem %s2, 44
  %v3891 = vld [vmem:[%s3890] sm:$0x3]
  %v3892 = vld [vmem:[#allocation2 + $0x4] sm:$0xff]
  %v3893 = vld [vmem:[#allocation2 + $0xc] sm:$0xff]
  %v3894 = vld [vmem:[#allocation2 + $0x14] sm:$0xf]
  %v3895 = vld [vmem:[#allocation2 + $0x20] sm:$0x33]
  %v3896 = vld [vmem:[#allocation2 + $0x28] sm:$0x33]
  %v3897 = vld [vmem:[#allocation2 + $0x30] sm:$0x3]
  %v3904 = vunpack.c.l.b16 %v3892
  %v3905 = vunpack.c.h.b16 %v3892
  %v3906 = vunpack.c.l.b16 %v3893
  %v3907 = vunpack.c.h.b16 %v3893
  %v3908 = vunpack.c.l.b16 %v3894
  %v3909 = vunpack.c.l.b16 %v3895
  %v3910 = vunpack.c.h.b16 %v3895
  %v3911 = vunpack.c.l.b16 %v3896
  %v3912 = vunpack.c.h.b16 %v3896
  %v3913 = vunpack.c.l.b16 %v3897
  %v3914 = vpack.c.b16 %v3909, %v3904
  %v3915 = vpack.c.b16 %v3910, %v3905
  %v3916 = vpack.c.b16 %v3911, %v3906
  %v3917 = vpack.c.b16 %v3912, %v3907
  %v3918 = vpack.c.b16 %v3913, %v3908
  %v3920 = vsel %vm3263, %v3891, 0
  %v3923 = vsel %vm3267, %v3914, 0
  %v3926 = vsel %vm3267, %v3915, 0
  %v3929 = vsel %vm3267, %v3916, 0
  %v3932 = vsel %vm3267, %v3917, 0
  %v3935 = vsel %vm3267, %v3918, 0
  %3937 = vmatprep.subr.bf16.mxu0 0
  %3938 = vmatpush1.bf16.msra.mxu0 0
  %3939 = vmatprep.subr.bf16.mxu0 0
  %3940 = vmatpush1.bf16.msra.mxu0 0
  %3941 = vmatprep.subr.bf16.mxu0 0
  %3942 = vmatpush1.bf16.msra.mxu0 0
  %3943 = vmatprep.subr.bf16.mxu0 0
  %3944 = vmatpush1.bf16.msra.mxu0 0
  %3945 = vmatprep.subr.bf16.mxu0 0
  %3946 = vmatpush1.bf16.msra.mxu0 0
  %3947 = vmatprep.subr.bf16.mxu0 0
  %3948 = vmatpush1.bf16.msra.mxu0 0
  %3949 = vmatprep.subr.bf16.mxu0 0
  %3950 = vmatpush1.bf16.msra.mxu0 0
  %3951 = vmatprep.subr.bf16.mxu0 %v3926
  %3952 = vmatpush1.bf16.msra.mxu0 %v3923
  %3953 = vmatprep.subr.bf16.mxu0 0
  %3954 = vmatpush2.bf16.msra.mxu0 0
  %3955 = vmatprep.subr.bf16.mxu0 0
  %3956 = vmatpush2.bf16.msra.mxu0 0
  %3957 = vmatprep.subr.bf16.mxu0 0
  %3958 = vmatpush2.bf16.msra.mxu0 0
  %3959 = vmatprep.subr.bf16.mxu0 0
  %3960 = vmatpush2.bf16.msra.mxu0 0
  %3961 = vmatprep.subr.bf16.mxu0 0
  %3962 = vmatpush2.bf16.msra.mxu0 0
  %3963 = vmatprep.subr.bf16.mxu0 0
  %3964 = vmatpush2.bf16.msra.mxu0 0
  %3965 = vmatprep.subr.bf16.mxu0 0
  %3966 = vmatpush2.bf16.msra.mxu0 0
  %3967 = vmatprep.subr.bf16.mxu0 0
  %3968 = vmatpush2.bf16.msra.mxu0 0
  %3969 = vmatprep.mubr.bf16.mxu0 0
  %3970 = vmatmul.mubr.bf16.gmra.mxu0 %v3920
  %v3971 = vpop.f32.mrf.mxu0
  %v3972 = vadd.f32 0.0, %v3971
  %v3973 = vpop.f32.mrf.mxu0
  %v3974 = vadd.f32 0.0, %v3973
  %v3975 = vpop.f32.mrf.mxu0
  %v3976 = vpop.f32.mrf.mxu0
  %3977 = vdwg.mxu0
  %3978 = vmatprep.subr.bf16.mxu0 0
  %3979 = vmatpush1.bf16.msra.mxu0 0
  %3980 = vmatprep.subr.bf16.mxu0 0
  %3981 = vmatpush1.bf16.msra.mxu0 0
  %3982 = vmatprep.subr.bf16.mxu0 0
  %3983 = vmatpush1.bf16.msra.mxu0 0
  %3984 = vmatprep.subr.bf16.mxu0 0
  %3985 = vmatpush1.bf16.msra.mxu0 0
  %3986 = vmatprep.subr.bf16.mxu0 0
  %3987 = vmatpush1.bf16.msra.mxu0 0
  %3988 = vmatprep.subr.bf16.mxu0 0
  %3989 = vmatpush1.bf16.msra.mxu0 0
  %3990 = vmatprep.subr.bf16.mxu0 0
  %3991 = vmatpush1.bf16.msra.mxu0 0
  %3992 = vmatprep.subr.bf16.mxu0 %v3932
  %3993 = vmatpush1.bf16.msra.mxu0 %v3929
  %3994 = vmatprep.subr.bf16.mxu0 0
  %3995 = vmatpush2.bf16.msra.mxu0 0
  %3996 = vmatprep.subr.bf16.mxu0 0
  %3997 = vmatpush2.bf16.msra.mxu0 0
  %3998 = vmatprep.subr.bf16.mxu0 0
  %3999 = vmatpush2.bf16.msra.mxu0 0
  %4000 = vmatprep.subr.bf16.mxu0 0
  %4001 = vmatpush2.bf16.msra.mxu0 0
  %4002 = vmatprep.subr.bf16.mxu0 0
  %4003 = vmatpush2.bf16.msra.mxu0 0
  %4004 = vmatprep.subr.bf16.mxu0 0
  %4005 = vmatpush2.bf16.msra.mxu0 0
  %4006 = vmatprep.subr.bf16.mxu0 0
  %4007 = vmatpush2.bf16.msra.mxu0 0
  %4008 = vmatprep.subr.bf16.mxu0 0
  %4009 = vmatpush2.bf16.msra.mxu0 0
  %4010 = vmatprep.mubr.bf16.mxu0 0
  %4011 = vmatmul.mubr.bf16.gmra.mxu0 %v3920
  %v4012 = vpop.f32.mrf.mxu0
  %v4013 = vadd.f32 0.0, %v4012
  %v4014 = vpop.f32.mrf.mxu0
  %v4015 = vadd.f32 0.0, %v4014
  %v4016 = vpop.f32.mrf.mxu0
  %v4017 = vpop.f32.mrf.mxu0
  %4018 = vdwg.mxu0
  %4019 = vmatprep.subr.bf16.mxu0 0
  %4020 = vmatpush1.bf16.msra.mxu0 0
  %4021 = vmatprep.subr.bf16.mxu0 0
  %4022 = vmatpush1.bf16.msra.mxu0 0
  %4023 = vmatprep.subr.bf16.mxu0 0
  %4024 = vmatpush1.bf16.msra.mxu0 0
  %4025 = vmatprep.subr.bf16.mxu0 0
  %4026 = vmatpush1.bf16.msra.mxu0 0
  %4027 = vmatprep.subr.bf16.mxu0 0
  %4028 = vmatpush1.bf16.msra.mxu0 0
  %4029 = vmatprep.subr.bf16.mxu0 0
  %4030 = vmatpush1.bf16.msra.mxu0 0
  %4031 = vmatprep.subr.bf16.mxu0 0
  %4032 = vmatpush1.bf16.msra.mxu0 0
  %4033 = vmatprep.subr.bf16.mxu0 0
  %4034 = vmatpush1.bf16.msra.mxu0 %v3935
  %4035 = vmatprep.subr.bf16.mxu0 0
  %4036 = vmatpush2.bf16.msra.mxu0 0
  %4037 = vmatprep.subr.bf16.mxu0 0
  %4038 = vmatpush2.bf16.msra.mxu0 0
  %4039 = vmatprep.subr.bf16.mxu0 0
  %4040 = vmatpush2.bf16.msra.mxu0 0
  %4041 = vmatprep.subr.bf16.mxu0 0
  %4042 = vmatpush2.bf16.msra.mxu0 0
  %4043 = vmatprep.subr.bf16.mxu0 0
  %4044 = vmatpush2.bf16.msra.mxu0 0
  %4045 = vmatprep.subr.bf16.mxu0 0
  %4046 = vmatpush2.bf16.msra.mxu0 0
  %4047 = vmatprep.subr.bf16.mxu0 0
  %4048 = vmatpush2.bf16.msra.mxu0 0
  %4049 = vmatprep.subr.bf16.mxu0 0
  %4050 = vmatpush2.bf16.msra.mxu0 0
  %4051 = vmatprep.mubr.bf16.mxu0 0
  %4052 = vmatmul.mubr.bf16.gmra.mxu0 %v3920
  %v4053 = vpop.f32.mrf.mxu0
  %v4054 = vadd.f32 0.0, %v4053
  %v4055 = vpop.f32.mrf.mxu0
  %v4056 = vpop.f32.mrf.mxu0
  %v4057 = vpop.f32.mrf.mxu0
  %4058 = vdwg.mxu0
  %v4059 = vadd.f32 %v3885, %v3972
  %v4060 = vadd.f32 %v3886, %v3974
  %v4061 = vadd.f32 %v3887, %v4013
  %v4062 = vadd.f32 %v3888, %v4015
  %v4063 = vadd.f32 %v3889, %v4054
  %s4064 = scalar_lea.vmem %s2, 46
  %v4065 = vld [vmem:[%s4064] sm:$0x3]
  %v4066 = vld [vmem:[#allocation2 + $0x4] sm:$0xff]
  %v4067 = vld [vmem:[#allocation2 + $0xc] sm:$0xff]
  %v4068 = vld [vmem:[#allocation2 + $0x14] sm:$0xff]
  %v4069 = vld [vmem:[#allocation2 + $0x20] sm:$0x33]
  %v4070 = vld [vmem:[#allocation2 + $0x28] sm:$0x33]
  %v4071 = vld [vmem:[#allocation2 + $0x30] sm:$0x33]
  %v4078 = vunpack.c.l.b16 %v4066
  %v4079 = vunpack.c.h.b16 %v4066
  %v4080 = vunpack.c.l.b16 %v4067
  %v4081 = vunpack.c.h.b16 %v4067
  %v4082 = vunpack.c.l.b16 %v4068
  %v4083 = vunpack.c.h.b16 %v4068
  %v4084 = vunpack.c.l.b16 %v4069
  %v4085 = vunpack.c.h.b16 %v4069
  %v4086 = vunpack.c.l.b16 %v4070
  %v4087 = vunpack.c.h.b16 %v4070
  %v4088 = vunpack.c.l.b16 %v4071
  %v4089 = vunpack.c.h.b16 %v4071
  %v4090 = vpack.c.b16 %v4084, %v4078
  %v4091 = vpack.c.b16 %v4085, %v4079
  %v4092 = vpack.c.b16 %v4086, %v4080
  %v4093 = vpack.c.b16 %v4087, %v4081
  %v4094 = vpack.c.b16 %v4088, %v4082
  %v4095 = vpack.c.b16 %v4089, %v4083
  %4096 = vrot.lane.b32.xlu0 %v4090, 127
  %v4097 = vpop.permute.xlu0 %4096
  %4098 = vrot.lane.b32.xlu0 %v4091, 127
  %v4099 = vpop.permute.xlu0 %4098
  %4100 = vrot.lane.b32.xlu0 %v4092, 127
  %v4101 = vpop.permute.xlu0 %4100
  %4102 = vrot.lane.b32.xlu0 %v4093, 127
  %v4103 = vpop.permute.xlu0 %4102
  %4104 = vrot.lane.b32.xlu0 %v4094, 127
  %v4105 = vpop.permute.xlu0 %4104
  %4106 = vrot.lane.b32.xlu0 %v4095, 127
  %v4107 = vpop.permute.xlu0 %4106
  %v4108 = vsel %vm943, %v4097, %v4099
  %v4109 = vsel %vm943, %v4099, %v4101
  %v4110 = vsel %vm943, %v4101, %v4103
  %v4111 = vsel %vm943, %v4103, %v4105
  %v4112 = vsel %vm943, %v4105, %v4107
  %v4114 = vsel %vm3263, %v4065, 0
  %v4117 = vsel %vm3267, %v4108, 0
  %v4120 = vsel %vm3267, %v4109, 0
  %v4123 = vsel %vm3267, %v4110, 0
  %v4126 = vsel %vm3267, %v4111, 0
  %v4129 = vsel %vm3267, %v4112, 0
  %4131 = vmatprep.subr.bf16.mxu0 0
  %4132 = vmatpush1.bf16.msra.mxu0 0
  %4133 = vmatprep.subr.bf16.mxu0 0
  %4134 = vmatpush1.bf16.msra.mxu0 0
  %4135 = vmatprep.subr.bf16.mxu0 0
  %4136 = vmatpush1.bf16.msra.mxu0 0
  %4137 = vmatprep.subr.bf16.mxu0 0
  %4138 = vmatpush1.bf16.msra.mxu0 0
  %4139 = vmatprep.subr.bf16.mxu0 0
  %4140 = vmatpush1.bf16.msra.mxu0 0
  %4141 = vmatprep.subr.bf16.mxu0 0
  %4142 = vmatpush1.bf16.msra.mxu0 0
  %4143 = vmatprep.subr.bf16.mxu0 0
  %4144 = vmatpush1.bf16.msra.mxu0 0
  %4145 = vmatprep.subr.bf16.mxu0 %v4120
  %4146 = vmatpush1.bf16.msra.mxu0 %v4117
  %4147 = vmatprep.subr.bf16.mxu0 0
  %4148 = vmatpush2.bf16.msra.mxu0 0
  %4149 = vmatprep.subr.bf16.mxu0 0
  %4150 = vmatpush2.bf16.msra.mxu0 0
  %4151 = vmatprep.subr.bf16.mxu0 0
  %4152 = vmatpush2.bf16.msra.mxu0 0
  %4153 = vmatprep.subr.bf16.mxu0 0
  %4154 = vmatpush2.bf16.msra.mxu0 0
  %4155 = vmatprep.subr.bf16.mxu0 0
  %4156 = vmatpush2.bf16.msra.mxu0 0
  %4157 = vmatprep.subr.bf16.mxu0 0
  %4158 = vmatpush2.bf16.msra.mxu0 0
  %4159 = vmatprep.subr.bf16.mxu0 0
  %4160 = vmatpush2.bf16.msra.mxu0 0
  %4161 = vmatprep.subr.bf16.mxu0 0
  %4162 = vmatpush2.bf16.msra.mxu0 0
  %4163 = vmatprep.mubr.bf16.mxu0 0
  %4164 = vmatmul.mubr.bf16.gmra.mxu0 %v4114
  %v4165 = vpop.f32.mrf.mxu0
  %v4166 = vadd.f32 0.0, %v4165
  %v4167 = vpop.f32.mrf.mxu0
  %v4168 = vadd.f32 0.0, %v4167
  %v4169 = vpop.f32.mrf.mxu0
  %v4170 = vpop.f32.mrf.mxu0
  %4171 = vdwg.mxu0
  %4172 = vmatprep.subr.bf16.mxu0 0
  %4173 = vmatpush1.bf16.msra.mxu0 0
  %4174 = vmatprep.subr.bf16.mxu0 0
  %4175 = vmatpush1.bf16.msra.mxu0 0
  %4176 = vmatprep.subr.bf16.mxu0 0
  %4177 = vmatpush1.bf16.msra.mxu0 0
  %4178 = vmatprep.subr.bf16.mxu0 0
  %4179 = vmatpush1.bf16.msra.mxu0 0
  %4180 = vmatprep.subr.bf16.mxu0 0
  %4181 = vmatpush1.bf16.msra.mxu0 0
  %4182 = vmatprep.subr.bf16.mxu0 0
  %4183 = vmatpush1.bf16.msra.mxu0 0
  %4184 = vmatprep.subr.bf16.mxu0 0
  %4185 = vmatpush1.bf16.msra.mxu0 0
  %4186 = vmatprep.subr.bf16.mxu0 %v4126
  %4187 = vmatpush1.bf16.msra.mxu0 %v4123
  %4188 = vmatprep.subr.bf16.mxu0 0
  %4189 = vmatpush2.bf16.msra.mxu0 0
  %4190 = vmatprep.subr.bf16.mxu0 0
  %4191 = vmatpush2.bf16.msra.mxu0 0
  %4192 = vmatprep.subr.bf16.mxu0 0
  %4193 = vmatpush2.bf16.msra.mxu0 0
  %4194 = vmatprep.subr.bf16.mxu0 0
  %4195 = vmatpush2.bf16.msra.mxu0 0
  %4196 = vmatprep.subr.bf16.mxu0 0
  %4197 = vmatpush2.bf16.msra.mxu0 0
  %4198 = vmatprep.subr.bf16.mxu0 0
  %4199 = vmatpush2.bf16.msra.mxu0 0
  %4200 = vmatprep.subr.bf16.mxu0 0
  %4201 = vmatpush2.bf16.msra.mxu0 0
  %4202 = vmatprep.subr.bf16.mxu0 0
  %4203 = vmatpush2.bf16.msra.mxu0 0
  %4204 = vmatprep.mubr.bf16.mxu0 0
  %4205 = vmatmul.mubr.bf16.gmra.mxu0 %v4114
  %v4206 = vpop.f32.mrf.mxu0
  %v4207 = vadd.f32 0.0, %v4206
  %v4208 = vpop.f32.mrf.mxu0
  %v4209 = vadd.f32 0.0, %v4208
  %v4210 = vpop.f32.mrf.mxu0
  %v4211 = vpop.f32.mrf.mxu0
  %4212 = vdwg.mxu0
  %4213 = vmatprep.subr.bf16.mxu0 0
  %4214 = vmatpush1.bf16.msra.mxu0 0
  %4215 = vmatprep.subr.bf16.mxu0 0
  %4216 = vmatpush1.bf16.msra.mxu0 0
  %4217 = vmatprep.subr.bf16.mxu0 0
  %4218 = vmatpush1.bf16.msra.mxu0 0
  %4219 = vmatprep.subr.bf16.mxu0 0
  %4220 = vmatpush1.bf16.msra.mxu0 0
  %4221 = vmatprep.subr.bf16.mxu0 0
  %4222 = vmatpush1.bf16.msra.mxu0 0
  %4223 = vmatprep.subr.bf16.mxu0 0
  %4224 = vmatpush1.bf16.msra.mxu0 0
  %4225 = vmatprep.subr.bf16.mxu0 0
  %4226 = vmatpush1.bf16.msra.mxu0 0
  %4227 = vmatprep.subr.bf16.mxu0 0
  %4228 = vmatpush1.bf16.msra.mxu0 %v4129
  %4229 = vmatprep.subr.bf16.mxu0 0
  %4230 = vmatpush2.bf16.msra.mxu0 0
  %4231 = vmatprep.subr.bf16.mxu0 0
  %4232 = vmatpush2.bf16.msra.mxu0 0
  %4233 = vmatprep.subr.bf16.mxu0 0
  %4234 = vmatpush2.bf16.msra.mxu0 0
  %4235 = vmatprep.subr.bf16.mxu0 0
  %4236 = vmatpush2.bf16.msra.mxu0 0
  %4237 = vmatprep.subr.bf16.mxu0 0
  %4238 = vmatpush2.bf16.msra.mxu0 0
  %4239 = vmatprep.subr.bf16.mxu0 0
  %4240 = vmatpush2.bf16.msra.mxu0 0
  %4241 = vmatprep.subr.bf16.mxu0 0
  %4242 = vmatpush2.bf16.msra.mxu0 0
  %4243 = vmatprep.subr.bf16.mxu0 0
  %4244 = vmatpush2.bf16.msra.mxu0 0
  %4245 = vmatprep.mubr.bf16.mxu0 0
  %4246 = vmatmul.mubr.bf16.gmra.mxu0 %v4114
  %v4247 = vpop.f32.mrf.mxu0
  %v4248 = vadd.f32 0.0, %v4247
  %v4249 = vpop.f32.mrf.mxu0
  %v4250 = vpop.f32.mrf.mxu0
  %v4251 = vpop.f32.mrf.mxu0
  %4252 = vdwg.mxu0
  %v4253 = vadd.f32 %v4059, %v4166
  %v4254 = vadd.f32 %v4060, %v4168
  %v4255 = vadd.f32 %v4061, %v4207
  %v4256 = vadd.f32 %v4062, %v4209
  %v4257 = vadd.f32 %v4063, %v4248
  %s4258 = scalar_lea.vmem %s2, 48
  %v4259 = vld [vmem:[%s4258] sm:$0x3]
  %4260 = vrot.lane.b32.xlu0 %v4090, 111
  %v4261 = vpop.permute.xlu0 %4260
  %4262 = vrot.lane.b32.xlu0 %v4091, 111
  %v4263 = vpop.permute.xlu0 %4262
  %4264 = vrot.lane.b32.xlu0 %v4092, 111
  %v4265 = vpop.permute.xlu0 %4264
  %4266 = vrot.lane.b32.xlu0 %v4093, 111
  %v4267 = vpop.permute.xlu0 %4266
  %4268 = vrot.lane.b32.xlu0 %v4094, 111
  %v4269 = vpop.permute.xlu0 %4268
  %4270 = vrot.lane.b32.xlu0 %v4095, 111
  %v4271 = vpop.permute.xlu0 %4270
  %v4272 = vsel %vm1108, %v4261, %v4263
  %v4273 = vsel %vm1108, %v4263, %v4265
  %v4274 = vsel %vm1108, %v4265, %v4267
  %v4275 = vsel %vm1108, %v4267, %v4269
  %v4276 = vsel %vm1108, %v4269, %v4271
  %v4278 = vsel %vm3263, %v4259, 0
  %v4281 = vsel %vm3267, %v4272, 0
  %v4284 = vsel %vm3267, %v4273, 0
  %v4287 = vsel %vm3267, %v4274, 0
  %v4290 = vsel %vm3267, %v4275, 0
  %v4293 = vsel %vm3267, %v4276, 0
  %4295 = vmatprep.subr.bf16.mxu0 0
  %4296 = vmatpush1.bf16.msra.mxu0 0
  %4297 = vmatprep.subr.bf16.mxu0 0
  %4298 = vmatpush1.bf16.msra.mxu0 0
  %4299 = vmatprep.subr.bf16.mxu0 0
  %4300 = vmatpush1.bf16.msra.mxu0 0
  %4301 = vmatprep.subr.bf16.mxu0 0
  %4302 = vmatpush1.bf16.msra.mxu0 0
  %4303 = vmatprep.subr.bf16.mxu0 0
  %4304 = vmatpush1.bf16.msra.mxu0 0
  %4305 = vmatprep.subr.bf16.mxu0 0
  %4306 = vmatpush1.bf16.msra.mxu0 0
  %4307 = vmatprep.subr.bf16.mxu0 0
  %4308 = vmatpush1.bf16.msra.mxu0 0
  %4309 = vmatprep.subr.bf16.mxu0 %v4284
  %4310 = vmatpush1.bf16.msra.mxu0 %v4281
  %4311 = vmatprep.subr.bf16.mxu0 0
  %4312 = vmatpush2.bf16.msra.mxu0 0
  %4313 = vmatprep.subr.bf16.mxu0 0
  %4314 = vmatpush2.bf16.msra.mxu0 0
  %4315 = vmatprep.subr.bf16.mxu0 0
  %4316 = vmatpush2.bf16.msra.mxu0 0
  %4317 = vmatprep.subr.bf16.mxu0 0
  %4318 = vmatpush2.bf16.msra.mxu0 0
  %4319 = vmatprep.subr.bf16.mxu0 0
  %4320 = vmatpush2.bf16.msra.mxu0 0
  %4321 = vmatprep.subr.bf16.mxu0 0
  %4322 = vmatpush2.bf16.msra.mxu0 0
  %4323 = vmatprep.subr.bf16.mxu0 0
  %4324 = vmatpush2.bf16.msra.mxu0 0
  %4325 = vmatprep.subr.bf16.mxu0 0
  %4326 = vmatpush2.bf16.msra.mxu0 0
  %4327 = vmatprep.mubr.bf16.mxu0 0
  %4328 = vmatmul.mubr.bf16.gmra.mxu0 %v4278
  %v4329 = vpop.f32.mrf.mxu0
  %v4330 = vadd.f32 0.0, %v4329
  %v4331 = vpop.f32.mrf.mxu0
  %v4332 = vadd.f32 0.0, %v4331
  %v4333 = vpop.f32.mrf.mxu0
  %v4334 = vpop.f32.mrf.mxu0
  %4335 = vdwg.mxu0
  %4336 = vmatprep.subr.bf16.mxu0 0
  %4337 = vmatpush1.bf16.msra.mxu0 0
  %4338 = vmatprep.subr.bf16.mxu0 0
  %4339 = vmatpush1.bf16.msra.mxu0 0
  %4340 = vmatprep.subr.bf16.mxu0 0
  %4341 = vmatpush1.bf16.msra.mxu0 0
  %4342 = vmatprep.subr.bf16.mxu0 0
  %4343 = vmatpush1.bf16.msra.mxu0 0
  %4344 = vmatprep.subr.bf16.mxu0 0
  %4345 = vmatpush1.bf16.msra.mxu0 0
  %4346 = vmatprep.subr.bf16.mxu0 0
  %4347 = vmatpush1.bf16.msra.mxu0 0
  %4348 = vmatprep.subr.bf16.mxu0 0
  %4349 = vmatpush1.bf16.msra.mxu0 0
  %4350 = vmatprep.subr.bf16.mxu0 %v4290
  %4351 = vmatpush1.bf16.msra.mxu0 %v4287
  %4352 = vmatprep.subr.bf16.mxu0 0
  %4353 = vmatpush2.bf16.msra.mxu0 0
  %4354 = vmatprep.subr.bf16.mxu0 0
  %4355 = vmatpush2.bf16.msra.mxu0 0
  %4356 = vmatprep.subr.bf16.mxu0 0
  %4357 = vmatpush2.bf16.msra.mxu0 0
  %4358 = vmatprep.subr.bf16.mxu0 0
  %4359 = vmatpush2.bf16.msra.mxu0 0
  %4360 = vmatprep.subr.bf16.mxu0 0
  %4361 = vmatpush2.bf16.msra.mxu0 0
  %4362 = vmatprep.subr.bf16.mxu0 0
  %4363 = vmatpush2.bf16.msra.mxu0 0
  %4364 = vmatprep.subr.bf16.mxu0 0
  %4365 = vmatpush2.bf16.msra.mxu0 0
  %4366 = vmatprep.subr.bf16.mxu0 0
  %4367 = vmatpush2.bf16.msra.mxu0 0
  %4368 = vmatprep.mubr.bf16.mxu0 0
  %4369 = vmatmul.mubr.bf16.gmra.mxu0 %v4278
  %v4370 = vpop.f32.mrf.mxu0
  %v4371 = vadd.f32 0.0, %v4370
  %v4372 = vpop.f32.mrf.mxu0
  %v4373 = vadd.f32 0.0, %v4372
  %v4374 = vpop.f32.mrf.mxu0
  %v4375 = vpop.f32.mrf.mxu0
  %4376 = vdwg.mxu0
  %4377 = vmatprep.subr.bf16.mxu0 0
  %4378 = vmatpush1.bf16.msra.mxu0 0
  %4379 = vmatprep.subr.bf16.mxu0 0
  %4380 = vmatpush1.bf16.msra.mxu0 0
  %4381 = vmatprep.subr.bf16.mxu0 0
  %4382 = vmatpush1.bf16.msra.mxu0 0
  %4383 = vmatprep.subr.bf16.mxu0 0
  %4384 = vmatpush1.bf16.msra.mxu0 0
  %4385 = vmatprep.subr.bf16.mxu0 0
  %4386 = vmatpush1.bf16.msra.mxu0 0
  %4387 = vmatprep.subr.bf16.mxu0 0
  %4388 = vmatpush1.bf16.msra.mxu0 0
  %4389 = vmatprep.subr.bf16.mxu0 0
  %4390 = vmatpush1.bf16.msra.mxu0 0
  %4391 = vmatprep.subr.bf16.mxu0 0
  %4392 = vmatpush1.bf16.msra.mxu0 %v4293
  %4393 = vmatprep.subr.bf16.mxu0 0
  %4394 = vmatpush2.bf16.msra.mxu0 0
  %4395 = vmatprep.subr.bf16.mxu0 0
  %4396 = vmatpush2.bf16.msra.mxu0 0
  %4397 = vmatprep.subr.bf16.mxu0 0
  %4398 = vmatpush2.bf16.msra.mxu0 0
  %4399 = vmatprep.subr.bf16.mxu0 0
  %4400 = vmatpush2.bf16.msra.mxu0 0
  %4401 = vmatprep.subr.bf16.mxu0 0
  %4402 = vmatpush2.bf16.msra.mxu0 0
  %4403 = vmatprep.subr.bf16.mxu0 0
  %4404 = vmatpush2.bf16.msra.mxu0 0
  %4405 = vmatprep.subr.bf16.mxu0 0
  %4406 = vmatpush2.bf16.msra.mxu0 0
  %4407 = vmatprep.subr.bf16.mxu0 0
  %4408 = vmatpush2.bf16.msra.mxu0 0
  %4409 = vmatprep.mubr.bf16.mxu0 0
  %4410 = vmatmul.mubr.bf16.gmra.mxu0 %v4278
  %v4411 = vpop.f32.mrf.mxu0
  %v4412 = vadd.f32 0.0, %v4411
  %v4413 = vpop.f32.mrf.mxu0
  %v4414 = vpop.f32.mrf.mxu0
  %v4415 = vpop.f32.mrf.mxu0
  %4416 = vdwg.mxu0
  %v4417 = vadd.f32 %v4253, %v4330
  %v4418 = vadd.f32 %v4254, %v4332
  %v4419 = vadd.f32 %v4255, %v4371
  %v4420 = vadd.f32 %v4256, %v4373
  %v4421 = vadd.f32 %v4257, %v4412
  %s4422 = scalar_lea.vmem %s2, 50
  %v4423 = vld [vmem:[%s4422] sm:$0x3]
  %4424 = vrot.lane.b32.xlu0 %v4090, 110
  %v4425 = vpop.permute.xlu0 %4424
  %4426 = vrot.lane.b32.xlu0 %v4091, 110
  %v4427 = vpop.permute.xlu0 %4426
  %4428 = vrot.lane.b32.xlu0 %v4092, 110
  %v4429 = vpop.permute.xlu0 %4428
  %4430 = vrot.lane.b32.xlu0 %v4093, 110
  %v4431 = vpop.permute.xlu0 %4430
  %4432 = vrot.lane.b32.xlu0 %v4094, 110
  %v4433 = vpop.permute.xlu0 %4432
  %4434 = vrot.lane.b32.xlu0 %v4095, 110
  %v4435 = vpop.permute.xlu0 %4434
  %v4436 = vsel %vm1273, %v4425, %v4427
  %v4437 = vsel %vm1273, %v4427, %v4429
  %v4438 = vsel %vm1273, %v4429, %v4431
  %v4439 = vsel %vm1273, %v4431, %v4433
  %v4440 = vsel %vm1273, %v4433, %v4435
  %v4442 = vsel %vm3263, %v4423, 0
  %v4445 = vsel %vm3267, %v4436, 0
  %v4448 = vsel %vm3267, %v4437, 0
  %v4451 = vsel %vm3267, %v4438, 0
  %v4454 = vsel %vm3267, %v4439, 0
  %v4457 = vsel %vm3267, %v4440, 0
  %4459 = vmatprep.subr.bf16.mxu0 0
  %4460 = vmatpush1.bf16.msra.mxu0 0
  %4461 = vmatprep.subr.bf16.mxu0 0
  %4462 = vmatpush1.bf16.msra.mxu0 0
  %4463 = vmatprep.subr.bf16.mxu0 0
  %4464 = vmatpush1.bf16.msra.mxu0 0
  %4465 = vmatprep.subr.bf16.mxu0 0
  %4466 = vmatpush1.bf16.msra.mxu0 0
  %4467 = vmatprep.subr.bf16.mxu0 0
  %4468 = vmatpush1.bf16.msra.mxu0 0
  %4469 = vmatprep.subr.bf16.mxu0 0
  %4470 = vmatpush1.bf16.msra.mxu0 0
  %4471 = vmatprep.subr.bf16.mxu0 0
  %4472 = vmatpush1.bf16.msra.mxu0 0
  %4473 = vmatprep.subr.bf16.mxu0 %v4448
  %4474 = vmatpush1.bf16.msra.mxu0 %v4445
  %4475 = vmatprep.subr.bf16.mxu0 0
  %4476 = vmatpush2.bf16.msra.mxu0 0
  %4477 = vmatprep.subr.bf16.mxu0 0
  %4478 = vmatpush2.bf16.msra.mxu0 0
  %4479 = vmatprep.subr.bf16.mxu0 0
  %4480 = vmatpush2.bf16.msra.mxu0 0
  %4481 = vmatprep.subr.bf16.mxu0 0
  %4482 = vmatpush2.bf16.msra.mxu0 0
  %4483 = vmatprep.subr.bf16.mxu0 0
  %4484 = vmatpush2.bf16.msra.mxu0 0
  %4485 = vmatprep.subr.bf16.mxu0 0
  %4486 = vmatpush2.bf16.msra.mxu0 0
  %4487 = vmatprep.subr.bf16.mxu0 0
  %4488 = vmatpush2.bf16.msra.mxu0 0
  %4489 = vmatprep.subr.bf16.mxu0 0
  %4490 = vmatpush2.bf16.msra.mxu0 0
  %4491 = vmatprep.mubr.bf16.mxu0 0
  %4492 = vmatmul.mubr.bf16.gmra.mxu0 %v4442
  %v4493 = vpop.f32.mrf.mxu0
  %v4494 = vadd.f32 0.0, %v4493
  %v4495 = vpop.f32.mrf.mxu0
  %v4496 = vadd.f32 0.0, %v4495
  %v4497 = vpop.f32.mrf.mxu0
  %v4498 = vpop.f32.mrf.mxu0
  %4499 = vdwg.mxu0
  %4500 = vmatprep.subr.bf16.mxu0 0
  %4501 = vmatpush1.bf16.msra.mxu0 0
  %4502 = vmatprep.subr.bf16.mxu0 0
  %4503 = vmatpush1.bf16.msra.mxu0 0
  %4504 = vmatprep.subr.bf16.mxu0 0
  %4505 = vmatpush1.bf16.msra.mxu0 0
  %4506 = vmatprep.subr.bf16.mxu0 0
  %4507 = vmatpush1.bf16.msra.mxu0 0
  %4508 = vmatprep.subr.bf16.mxu0 0
  %4509 = vmatpush1.bf16.msra.mxu0 0
  %4510 = vmatprep.subr.bf16.mxu0 0
  %4511 = vmatpush1.bf16.msra.mxu0 0
  %4512 = vmatprep.subr.bf16.mxu0 0
  %4513 = vmatpush1.bf16.msra.mxu0 0
  %4514 = vmatprep.subr.bf16.mxu0 %v4454
  %4515 = vmatpush1.bf16.msra.mxu0 %v4451
  %4516 = vmatprep.subr.bf16.mxu0 0
  %4517 = vmatpush2.bf16.msra.mxu0 0
  %4518 = vmatprep.subr.bf16.mxu0 0
  %4519 = vmatpush2.bf16.msra.mxu0 0
  %4520 = vmatprep.subr.bf16.mxu0 0
  %4521 = vmatpush2.bf16.msra.mxu0 0
  %4522 = vmatprep.subr.bf16.mxu0 0
  %4523 = vmatpush2.bf16.msra.mxu0 0
  %4524 = vmatprep.subr.bf16.mxu0 0
  %4525 = vmatpush2.bf16.msra.mxu0 0
  %4526 = vmatprep.subr.bf16.mxu0 0
  %4527 = vmatpush2.bf16.msra.mxu0 0
  %4528 = vmatprep.subr.bf16.mxu0 0
  %4529 = vmatpush2.bf16.msra.mxu0 0
  %4530 = vmatprep.subr.bf16.mxu0 0
  %4531 = vmatpush2.bf16.msra.mxu0 0
  %4532 = vmatprep.mubr.bf16.mxu0 0
  %4533 = vmatmul.mubr.bf16.gmra.mxu0 %v4442
  %v4534 = vpop.f32.mrf.mxu0
  %v4535 = vadd.f32 0.0, %v4534
  %v4536 = vpop.f32.mrf.mxu0
  %v4537 = vadd.f32 0.0, %v4536
  %v4538 = vpop.f32.mrf.mxu0
  %v4539 = vpop.f32.mrf.mxu0
  %4540 = vdwg.mxu0
  %4541 = vmatprep.subr.bf16.mxu0 0
  %4542 = vmatpush1.bf16.msra.mxu0 0
  %4543 = vmatprep.subr.bf16.mxu0 0
  %4544 = vmatpush1.bf16.msra.mxu0 0
  %4545 = vmatprep.subr.bf16.mxu0 0
  %4546 = vmatpush1.bf16.msra.mxu0 0
  %4547 = vmatprep.subr.bf16.mxu0 0
  %4548 = vmatpush1.bf16.msra.mxu0 0
  %4549 = vmatprep.subr.bf16.mxu0 0
  %4550 = vmatpush1.bf16.msra.mxu0 0
  %4551 = vmatprep.subr.bf16.mxu0 0
  %4552 = vmatpush1.bf16.msra.mxu0 0
  %4553 = vmatprep.subr.bf16.mxu0 0
  %4554 = vmatpush1.bf16.msra.mxu0 0
  %4555 = vmatprep.subr.bf16.mxu0 0
  %4556 = vmatpush1.bf16.msra.mxu0 %v4457
  %4557 = vmatprep.subr.bf16.mxu0 0
  %4558 = vmatpush2.bf16.msra.mxu0 0
  %4559 = vmatprep.subr.bf16.mxu0 0
  %4560 = vmatpush2.bf16.msra.mxu0 0
  %4561 = vmatprep.subr.bf16.mxu0 0
  %4562 = vmatpush2.bf16.msra.mxu0 0
  %4563 = vmatprep.subr.bf16.mxu0 0
  %4564 = vmatpush2.bf16.msra.mxu0 0
  %4565 = vmatprep.subr.bf16.mxu0 0
  %4566 = vmatpush2.bf16.msra.mxu0 0
  %4567 = vmatprep.subr.bf16.mxu0 0
  %4568 = vmatpush2.bf16.msra.mxu0 0
  %4569 = vmatprep.subr.bf16.mxu0 0
  %4570 = vmatpush2.bf16.msra.mxu0 0
  %4571 = vmatprep.subr.bf16.mxu0 0
  %4572 = vmatpush2.bf16.msra.mxu0 0
  %4573 = vmatprep.mubr.bf16.mxu0 0
  %4574 = vmatmul.mubr.bf16.gmra.mxu0 %v4442
  %v4575 = vpop.f32.mrf.mxu0
  %v4576 = vadd.f32 0.0, %v4575
  %v4577 = vpop.f32.mrf.mxu0
  %v4578 = vpop.f32.mrf.mxu0
  %v4579 = vpop.f32.mrf.mxu0
  %4580 = vdwg.mxu0
  %v4581 = vadd.f32 %v4417, %v4494
  %v4582 = vadd.f32 %v4418, %v4496
  %v4583 = vadd.f32 %v4419, %v4535
  %v4584 = vadd.f32 %v4420, %v4537
  %v4585 = vadd.f32 %v4421, %v4576
  %s4586 = scalar_lea.vmem %s2, 52
  %v4587 = vld [vmem:[%s4586] sm:$0x3]
  %4588 = vrot.lane.b32.xlu0 %v4090, 109
  %v4589 = vpop.permute.xlu0 %4588
  %4590 = vrot.lane.b32.xlu0 %v4091, 109
  %v4591 = vpop.permute.xlu0 %4590
  %4592 = vrot.lane.b32.xlu0 %v4092, 109
  %v4593 = vpop.permute.xlu0 %4592
  %4594 = vrot.lane.b32.xlu0 %v4093, 109
  %v4595 = vpop.permute.xlu0 %4594
  %4596 = vrot.lane.b32.xlu0 %v4094, 109
  %v4597 = vpop.permute.xlu0 %4596
  %4598 = vrot.lane.b32.xlu0 %v4095, 109
  %v4599 = vpop.permute.xlu0 %4598
  %v4600 = vsel %vm1438, %v4589, %v4591
  %v4601 = vsel %vm1438, %v4591, %v4593
  %v4602 = vsel %vm1438, %v4593, %v4595
  %v4603 = vsel %vm1438, %v4595, %v4597
  %v4604 = vsel %vm1438, %v4597, %v4599
  %v4606 = vsel %vm3263, %v4587, 0
  %v4609 = vsel %vm3267, %v4600, 0
  %v4612 = vsel %vm3267, %v4601, 0
  %v4615 = vsel %vm3267, %v4602, 0
  %v4618 = vsel %vm3267, %v4603, 0
  %v4621 = vsel %vm3267, %v4604, 0
  %4623 = vmatprep.subr.bf16.mxu0 0
  %4624 = vmatpush1.bf16.msra.mxu0 0
  %4625 = vmatprep.subr.bf16.mxu0 0
  %4626 = vmatpush1.bf16.msra.mxu0 0
  %4627 = vmatprep.subr.bf16.mxu0 0
  %4628 = vmatpush1.bf16.msra.mxu0 0
  %4629 = vmatprep.subr.bf16.mxu0 0
  %4630 = vmatpush1.bf16.msra.mxu0 0
  %4631 = vmatprep.subr.bf16.mxu0 0
  %4632 = vmatpush1.bf16.msra.mxu0 0
  %4633 = vmatprep.subr.bf16.mxu0 0
  %4634 = vmatpush1.bf16.msra.mxu0 0
  %4635 = vmatprep.subr.bf16.mxu0 0
  %4636 = vmatpush1.bf16.msra.mxu0 0
  %4637 = vmatprep.subr.bf16.mxu0 %v4612
  %4638 = vmatpush1.bf16.msra.mxu0 %v4609
  %4639 = vmatprep.subr.bf16.mxu0 0
  %4640 = vmatpush2.bf16.msra.mxu0 0
  %4641 = vmatprep.subr.bf16.mxu0 0
  %4642 = vmatpush2.bf16.msra.mxu0 0
  %4643 = vmatprep.subr.bf16.mxu0 0
  %4644 = vmatpush2.bf16.msra.mxu0 0
  %4645 = vmatprep.subr.bf16.mxu0 0
  %4646 = vmatpush2.bf16.msra.mxu0 0
  %4647 = vmatprep.subr.bf16.mxu0 0
  %4648 = vmatpush2.bf16.msra.mxu0 0
  %4649 = vmatprep.subr.bf16.mxu0 0
  %4650 = vmatpush2.bf16.msra.mxu0 0
  %4651 = vmatprep.subr.bf16.mxu0 0
  %4652 = vmatpush2.bf16.msra.mxu0 0
  %4653 = vmatprep.subr.bf16.mxu0 0
  %4654 = vmatpush2.bf16.msra.mxu0 0
  %4655 = vmatprep.mubr.bf16.mxu0 0
  %4656 = vmatmul.mubr.bf16.gmra.mxu0 %v4606
  %v4657 = vpop.f32.mrf.mxu0
  %v4658 = vadd.f32 0.0, %v4657
  %v4659 = vpop.f32.mrf.mxu0
  %v4660 = vadd.f32 0.0, %v4659
  %v4661 = vpop.f32.mrf.mxu0
  %v4662 = vpop.f32.mrf.mxu0
  %4663 = vdwg.mxu0
  %4664 = vmatprep.subr.bf16.mxu0 0
  %4665 = vmatpush1.bf16.msra.mxu0 0
  %4666 = vmatprep.subr.bf16.mxu0 0
  %4667 = vmatpush1.bf16.msra.mxu0 0
  %4668 = vmatprep.subr.bf16.mxu0 0
  %4669 = vmatpush1.bf16.msra.mxu0 0
  %4670 = vmatprep.subr.bf16.mxu0 0
  %4671 = vmatpush1.bf16.msra.mxu0 0
  %4672 = vmatprep.subr.bf16.mxu0 0
  %4673 = vmatpush1.bf16.msra.mxu0 0
  %4674 = vmatprep.subr.bf16.mxu0 0
  %4675 = vmatpush1.bf16.msra.mxu0 0
  %4676 = vmatprep.subr.bf16.mxu0 0
  %4677 = vmatpush1.bf16.msra.mxu0 0
  %4678 = vmatprep.subr.bf16.mxu0 %v4618
  %4679 = vmatpush1.bf16.msra.mxu0 %v4615
  %4680 = vmatprep.subr.bf16.mxu0 0
  %4681 = vmatpush2.bf16.msra.mxu0 0
  %4682 = vmatprep.subr.bf16.mxu0 0
  %4683 = vmatpush2.bf16.msra.mxu0 0
  %4684 = vmatprep.subr.bf16.mxu0 0
  %4685 = vmatpush2.bf16.msra.mxu0 0
  %4686 = vmatprep.subr.bf16.mxu0 0
  %4687 = vmatpush2.bf16.msra.mxu0 0
  %4688 = vmatprep.subr.bf16.mxu0 0
  %4689 = vmatpush2.bf16.msra.mxu0 0
  %4690 = vmatprep.subr.bf16.mxu0 0
  %4691 = vmatpush2.bf16.msra.mxu0 0
  %4692 = vmatprep.subr.bf16.mxu0 0
  %4693 = vmatpush2.bf16.msra.mxu0 0
  %4694 = vmatprep.subr.bf16.mxu0 0
  %4695 = vmatpush2.bf16.msra.mxu0 0
  %4696 = vmatprep.mubr.bf16.mxu0 0
  %4697 = vmatmul.mubr.bf16.gmra.mxu0 %v4606
  %v4698 = vpop.f32.mrf.mxu0
  %v4699 = vadd.f32 0.0, %v4698
  %v4700 = vpop.f32.mrf.mxu0
  %v4701 = vadd.f32 0.0, %v4700
  %v4702 = vpop.f32.mrf.mxu0
  %v4703 = vpop.f32.mrf.mxu0
  %4704 = vdwg.mxu0
  %4705 = vmatprep.subr.bf16.mxu0 0
  %4706 = vmatpush1.bf16.msra.mxu0 0
  %4707 = vmatprep.subr.bf16.mxu0 0
  %4708 = vmatpush1.bf16.msra.mxu0 0
  %4709 = vmatprep.subr.bf16.mxu0 0
  %4710 = vmatpush1.bf16.msra.mxu0 0
  %4711 = vmatprep.subr.bf16.mxu0 0
  %4712 = vmatpush1.bf16.msra.mxu0 0
  %4713 = vmatprep.subr.bf16.mxu0 0
  %4714 = vmatpush1.bf16.msra.mxu0 0
  %4715 = vmatprep.subr.bf16.mxu0 0
  %4716 = vmatpush1.bf16.msra.mxu0 0
  %4717 = vmatprep.subr.bf16.mxu0 0
  %4718 = vmatpush1.bf16.msra.mxu0 0
  %4719 = vmatprep.subr.bf16.mxu0 0
  %4720 = vmatpush1.bf16.msra.mxu0 %v4621
  %4721 = vmatprep.subr.bf16.mxu0 0
  %4722 = vmatpush2.bf16.msra.mxu0 0
  %4723 = vmatprep.subr.bf16.mxu0 0
  %4724 = vmatpush2.bf16.msra.mxu0 0
  %4725 = vmatprep.subr.bf16.mxu0 0
  %4726 = vmatpush2.bf16.msra.mxu0 0
  %4727 = vmatprep.subr.bf16.mxu0 0
  %4728 = vmatpush2.bf16.msra.mxu0 0
  %4729 = vmatprep.subr.bf16.mxu0 0
  %4730 = vmatpush2.bf16.msra.mxu0 0
  %4731 = vmatprep.subr.bf16.mxu0 0
  %4732 = vmatpush2.bf16.msra.mxu0 0
  %4733 = vmatprep.subr.bf16.mxu0 0
  %4734 = vmatpush2.bf16.msra.mxu0 0
  %4735 = vmatprep.subr.bf16.mxu0 0
  %4736 = vmatpush2.bf16.msra.mxu0 0
  %4737 = vmatprep.mubr.bf16.mxu0 0
  %4738 = vmatmul.mubr.bf16.gmra.mxu0 %v4606
  %v4739 = vpop.f32.mrf.mxu0
  %v4740 = vadd.f32 0.0, %v4739
  %v4741 = vpop.f32.mrf.mxu0
  %v4742 = vpop.f32.mrf.mxu0
  %v4743 = vpop.f32.mrf.mxu0
  %4744 = vdwg.mxu0
  %v4745 = vadd.f32 %v4581, %v4658
  %v4746 = vadd.f32 %v4582, %v4660
  %v4747 = vadd.f32 %v4583, %v4699
  %v4748 = vadd.f32 %v4584, %v4701
  %v4749 = vadd.f32 %v4585, %v4740
  %s4750 = scalar_lea.vmem %s3, 8
  %v4751 = vld [vmem:[%s4750] sm:$0xf]
  %4753 = vset.pattern.permute.xlu0 0
  %4754 = vperm.xlu0 %4753, %v4751
  %v4755 = vpop.permute.xlu0 %4754
  %v4757 = vadd.f32 %v4745, %v4755
  %v4758 = vadd.f32 %v4746, %v4755
  %v4759 = vadd.f32 %v4747, %v4755
  %v4760 = vadd.f32 %v4748, %v4755
  %v4761 = vadd.f32 %v4749, %v4755
  %v4762 = vmax.f32 %v4757, 0.0
  %v4763 = vmax.f32 %v4758, 0.0
  %v4764 = vmax.f32 %v4759, 0.0
  %v4765 = vmax.f32 %v4760, 0.0
  %v4766 = vmax.f32 %v4761, 0.0
  %v4767 = vmul.f32 %v4762, %v1609
  %v4768 = vmul.f32 %v4763, %v1613
  %v4769 = vmul.f32 %v4764, %v1617
  %v4770 = vmul.f32 %v4765, %v1621
  %v4771 = vmul.f32 %v4766, %v1625
  %v4772 = vpack.c.bf16 %v4767, %v4767
  %v4773 = vpack.c.bf16 %v4768, %v4768
  %v4774 = vpack.c.bf16 %v4769, %v4769
  %v4775 = vpack.c.bf16 %v4770, %v4770
  %v4776 = vpack.c.bf16 %v4771, %v4771
  %v4782 = vunpack.c.l.b16 %v4772
  %v4783 = vunpack.c.l.b16 %v4773
  %v4784 = vunpack.c.l.b16 %v4774
  %v4785 = vunpack.c.l.b16 %v4775
  %v4786 = vunpack.c.l.b16 %v4776
  %v4787 = vpack.c.b16 %v4783, %v4782
  %v4788 = vpack.c.b16 %v4785, %v4784
  %v4789 = vpack.c.b16 %v4786, %v4786
  %v4790 = vrot.slane %v4787, 6
  %v4791 = vrot.slane %v4788, 6
  %v4792 = vrot.slane %v4789, 6
  %4796 = vst [vmem:[#allocation2 + $0x20] sm:$0xcc] %v4790
  %4797 = vst [vmem:[#allocation2 + $0x28] sm:$0xcc] %v4791
  %4798 = vst [vmem:[#allocation2 + $0x30] sm:$0xc] %v4792
  %v4799 = vld [vmem:[#allocation2 + $0x4] sm:$0xff]
  %v4800 = vld [vmem:[#allocation2 + $0xc] sm:$0xff]
  %v4801 = vld [vmem:[#allocation2 + $0x14] sm:$0xf]
  %v4802 = vld [vmem:[#allocation2 + $0x20] sm:$0xff]
  %v4803 = vld [vmem:[#allocation2 + $0x28] sm:$0xff]
  %v4804 = vld [vmem:[#allocation2 + $0x30] sm:$0xf]
  %v4805 = vld [vmem:[%s4] sm:$0x3]
  %v4806 = vld [vmem:[%s5] sm:$0xf]
  %4808 = vset.pattern.permute.xlu0 0
  %4809 = vperm.xlu0 %4808, %v4806
  %v4810 = vpop.permute.xlu0 %4809
  %v4818 = vunpack.c.l.b16 %v4799
  %v4819 = vunpack.c.h.b16 %v4799
  %v4820 = vunpack.c.l.b16 %v4800
  %v4821 = vunpack.c.h.b16 %v4800
  %v4822 = vunpack.c.l.b16 %v4801
  %v4823 = vunpack.c.l.b16 %v4802
  %v4824 = vunpack.c.h.b16 %v4802
  %v4825 = vunpack.c.l.b16 %v4803
  %v4826 = vunpack.c.h.b16 %v4803
  %v4827 = vunpack.c.l.b16 %v4804
  %v4828 = vpack.c.b16 %v4823, %v4818
  %v4829 = vpack.c.b16 %v4824, %v4819
  %v4830 = vpack.c.b16 %v4825, %v4820
  %v4831 = vpack.c.b16 %v4826, %v4821
  %v4832 = vpack.c.b16 %v4827, %v4822
  %vm4838 = vcmask 130048
  %v4840 = vsel %vm4838, %v4805, 0
  %4842 = vmatprep.subr.bf16.mxu0 0
  %4843 = vmatpush1.bf16.msra.mxu0 0
  %4844 = vmatprep.subr.bf16.mxu0 0
  %4845 = vmatpush1.bf16.msra.mxu0 0
  %4846 = vmatprep.subr.bf16.mxu0 0
  %4847 = vmatpush1.bf16.msra.mxu0 0
  %4848 = vmatprep.subr.bf16.mxu0 0
  %4849 = vmatpush1.bf16.msra.mxu0 0
  %4850 = vmatprep.subr.bf16.mxu0 0
  %4851 = vmatpush1.bf16.msra.mxu0 0
  %4852 = vmatprep.subr.bf16.mxu0 0
  %4853 = vmatpush1.bf16.msra.mxu0 0
  %4854 = vmatprep.subr.bf16.mxu0 0
  %4855 = vmatpush1.bf16.msra.mxu0 0
  %4856 = vmatprep.subr.bf16.mxu0 %v4829
  %4857 = vmatpush1.bf16.msra.mxu0 %v4828
  %4858 = vmatprep.subr.bf16.mxu0 0
  %4859 = vmatpush2.bf16.msra.mxu0 0
  %4860 = vmatprep.subr.bf16.mxu0 0
  %4861 = vmatpush2.bf16.msra.mxu0 0
  %4862 = vmatprep.subr.bf16.mxu0 0
  %4863 = vmatpush2.bf16.msra.mxu0 0
  %4864 = vmatprep.subr.bf16.mxu0 0
  %4865 = vmatpush2.bf16.msra.mxu0 0
  %4866 = vmatprep.subr.bf16.mxu0 0
  %4867 = vmatpush2.bf16.msra.mxu0 0
  %4868 = vmatprep.subr.bf16.mxu0 0
  %4869 = vmatpush2.bf16.msra.mxu0 0
  %4870 = vmatprep.subr.bf16.mxu0 0
  %4871 = vmatpush2.bf16.msra.mxu0 0
  %4872 = vmatprep.subr.bf16.mxu0 0
  %4873 = vmatpush2.bf16.msra.mxu0 0
  %4874 = vmatprep.mubr.bf16.mxu0 0
  %4875 = vmatmul.mubr.bf16.gmra.mxu0 %v4840
  %v4876 = vpop.f32.mrf.mxu0
  %v4877 = vadd.f32 %v4810, %v4876
  %v4878 = vpop.f32.mrf.mxu0
  %v4879 = vadd.f32 %v4810, %v4878
  %v4880 = vpop.f32.mrf.mxu0
  %v4881 = vpop.f32.mrf.mxu0
  %4882 = vdwg.mxu0
  %4883 = vmatprep.subr.bf16.mxu0 0
  %4884 = vmatpush1.bf16.msra.mxu0 0
  %4885 = vmatprep.subr.bf16.mxu0 0
  %4886 = vmatpush1.bf16.msra.mxu0 0
  %4887 = vmatprep.subr.bf16.mxu0 0
  %4888 = vmatpush1.bf16.msra.mxu0 0
  %4889 = vmatprep.subr.bf16.mxu0 0
  %4890 = vmatpush1.bf16.msra.mxu0 0
  %4891 = vmatprep.subr.bf16.mxu0 0
  %4892 = vmatpush1.bf16.msra.mxu0 0
  %4893 = vmatprep.subr.bf16.mxu0 0
  %4894 = vmatpush1.bf16.msra.mxu0 0
  %4895 = vmatprep.subr.bf16.mxu0 0
  %4896 = vmatpush1.bf16.msra.mxu0 0
  %4897 = vmatprep.subr.bf16.mxu0 %v4831
  %4898 = vmatpush1.bf16.msra.mxu0 %v4830
  %4899 = vmatprep.subr.bf16.mxu0 0
  %4900 = vmatpush2.bf16.msra.mxu0 0
  %4901 = vmatprep.subr.bf16.mxu0 0
  %4902 = vmatpush2.bf16.msra.mxu0 0
  %4903 = vmatprep.subr.bf16.mxu0 0
  %4904 = vmatpush2.bf16.msra.mxu0 0
  %4905 = vmatprep.subr.bf16.mxu0 0
  %4906 = vmatpush2.bf16.msra.mxu0 0
  %4907 = vmatprep.subr.bf16.mxu0 0
  %4908 = vmatpush2.bf16.msra.mxu0 0
  %4909 = vmatprep.subr.bf16.mxu0 0
  %4910 = vmatpush2.bf16.msra.mxu0 0
  %4911 = vmatprep.subr.bf16.mxu0 0
  %4912 = vmatpush2.bf16.msra.mxu0 0
  %4913 = vmatprep.subr.bf16.mxu0 0
  %4914 = vmatpush2.bf16.msra.mxu0 0
  %4915 = vmatprep.mubr.bf16.mxu0 0
  %4916 = vmatmul.mubr.bf16.gmra.mxu0 %v4840
  %v4917 = vpop.f32.mrf.mxu0
  %v4918 = vadd.f32 %v4810, %v4917
  %v4919 = vpop.f32.mrf.mxu0
  %v4920 = vadd.f32 %v4810, %v4919
  %v4921 = vpop.f32.mrf.mxu0
  %v4922 = vpop.f32.mrf.mxu0
  %4923 = vdwg.mxu0
  %4924 = vmatprep.subr.bf16.mxu0 0
  %4925 = vmatpush1.bf16.msra.mxu0 0
  %4926 = vmatprep.subr.bf16.mxu0 0
  %4927 = vmatpush1.bf16.msra.mxu0 0
  %4928 = vmatprep.subr.bf16.mxu0 0
  %4929 = vmatpush1.bf16.msra.mxu0 0
  %4930 = vmatprep.subr.bf16.mxu0 0
  %4931 = vmatpush1.bf16.msra.mxu0 0
  %4932 = vmatprep.subr.bf16.mxu0 0
  %4933 = vmatpush1.bf16.msra.mxu0 0
  %4934 = vmatprep.subr.bf16.mxu0 0
  %4935 = vmatpush1.bf16.msra.mxu0 0
  %4936 = vmatprep.subr.bf16.mxu0 0
  %4937 = vmatpush1.bf16.msra.mxu0 0
  %4938 = vmatprep.subr.bf16.mxu0 0
  %4939 = vmatpush1.bf16.msra.mxu0 %v4832
  %4940 = vmatprep.subr.bf16.mxu0 0
  %4941 = vmatpush2.bf16.msra.mxu0 0
  %4942 = vmatprep.subr.bf16.mxu0 0
  %4943 = vmatpush2.bf16.msra.mxu0 0
  %4944 = vmatprep.subr.bf16.mxu0 0
  %4945 = vmatpush2.bf16.msra.mxu0 0
  %4946 = vmatprep.subr.bf16.mxu0 0
  %4947 = vmatpush2.bf16.msra.mxu0 0
  %4948 = vmatprep.subr.bf16.mxu0 0
  %4949 = vmatpush2.bf16.msra.mxu0 0
  %4950 = vmatprep.subr.bf16.mxu0 0
  %4951 = vmatpush2.bf16.msra.mxu0 0
  %4952 = vmatprep.subr.bf16.mxu0 0
  %4953 = vmatpush2.bf16.msra.mxu0 0
  %4954 = vmatprep.subr.bf16.mxu0 0
  %4955 = vmatpush2.bf16.msra.mxu0 0
  %4956 = vmatprep.mubr.bf16.mxu0 0
  %4957 = vmatmul.mubr.bf16.gmra.mxu0 %v4840
  %v4958 = vpop.f32.mrf.mxu0
  %v4959 = vadd.f32 %v4810, %v4958
  %v4960 = vpop.f32.mrf.mxu0
  %v4961 = vpop.f32.mrf.mxu0
  %v4962 = vpop.f32.mrf.mxu0
  %4963 = vdwg.mxu0
  %v4964 = vld [vmem:[%s0 + $0x4] sm:$0xff]
  %v4965 = vld [vmem:[%s0 + $0xc] sm:$0xff]
  %v4966 = vld [vmem:[%s0 + $0x14] sm:$0xf]
  %v4969 = vcombine.high %v4964, %v4964
  %v4970 = vcombine.high %v4965, %v4965
  %v4973 = vadd.f32 %v4877, %v4964
  %v4974 = vadd.f32 %v4879, %v4969
  %v4975 = vadd.f32 %v4918, %v4965
  %v4976 = vadd.f32 %v4920, %v4970
  %v4977 = vadd.f32 %v4959, %v4966
  %v4982 = vcombine.low %v4973, %v4974
  %v4983 = vcombine.low %v4975, %v4976
  %4986 = vst [vmem:[%s6] sm:$0xff] %v4982
  %4987 = vst [vmem:[%s6 + $0x8] sm:$0xff] %v4983
  %4988 = vst [vmem:[%s6 + $0x10] sm:$0xf] %v4977
  // Predicated region
  $region26: #{rdb_forward.1} parent=0 // pred_check
    _
  $region27: #{rdb_forward.1} parent=0 // pred_check_branch
    %4990 = sbr.rel (0) target = $region29
  $region28: #{rdb_forward.1} parent=0 // pred_region
    _
  $region29: #{rdb_forward.1} parent=0 // pred_fallthru
    _
  // Predicated region
  $region30: #{rdb_forward.1} parent=0 // pred_check
    _
  $region31: #{rdb_forward.1} parent=0 // pred_check_branch
    %4992 = sbr.rel (0) target = $region33
  $region32: #{rdb_forward.1} parent=0 // pred_region
    _
  $region33: #{rdb_forward.1} parent=0 // pred_fallthru
    _

</llo_original>
